<compile_context>
chip_gen: v5e
topology: v5e:2x2
jax: 0.10.0
libtpu: 0.0.40
codegen_flags: <defaults>
</compile_context>

<pallas_src>
import functools

import jax
import jax.numpy as jnp
from jax.experimental import pallas as pl
from jax.experimental.pallas import tpu as pltpu


def _round_up(x, m):
    return (x + m - 1) // m * m


# ---------------------------------------------------------------------------
# Fused kernel. Refs (in order):
#   mask (9, N), x (fpad, N), body_w_0..n-1, gate_w, out (n_feats, N),
#   feat scratch (c_total_pad, N), stack scratch (c_total_pad*9, N)
# ---------------------------------------------------------------------------
def _dense_block_kernel(mask_ref, x_ref, *refs, n_units, fpad, gpad, W, N):
    body_refs = refs[:n_units]          # (gpad, (fpad + i*gpad)*9)
    gate_ref = refs[n_units]            # (n_feats, c_total_pad)
    o_ref = refs[n_units + 1]           # (n_feats, N)
    feat = refs[n_units + 2]            # plain channels (gate input)
    stack = refs[n_units + 3]           # pre-shifted + pre-masked tap rows

    def append_group(vals, row0):
        """Append one channel group: plain rows into `feat`, and its 9
        shifted+masked tap copies (tap-major, channel-minor) into `stack`.
        row0 and vals.shape[0] are multiples of 8 -> aligned full stores."""
        vals = vals.astype(feat.dtype)
        rows = vals.shape[0]
        feat[row0:row0 + rows, :] = vals
        base = row0 * 9
        for t in range(9):
            off = (t // 3 - 1) * W + (t % 3 - 1)
            if off == 0:
                sh = vals
            else:
                m = mask_ref[pl.ds(t, 1), :]
                sh = (pltpu.roll(vals, (-off) % N, axis=1) * m).astype(stack.dtype)
            stack[base + t * rows: base + (t + 1) * rows, :] = sh

    # Seed with the (channel-padded) block input.
    append_group(x_ref[...], 0)

    # Body: one lane-dense MXU matmul per layer (9 taps folded into K),
    # ReLU, then "concat" == append the new channel group in place.
    for i in range(n_units):
        k_rows = (fpad + i * gpad) * 9
        y = jnp.dot(body_refs[i][...], stack[0:k_rows, :],
                    preferred_element_type=jnp.float32)
        append_group(jnp.maximum(y, 0.0), fpad + i * gpad)

    # Gate: 1x1 conv == single matmul over all (padded) channels.
    o_ref[...] = jnp.dot(gate_ref[...], feat[...],
                         preferred_element_type=jnp.float32).astype(o_ref.dtype)


# ---------------------------------------------------------------------------
# Wrapper: PyTorch OIHW weights -> tap-folded, sublane-padded kernel layouts.
# Input/output stay NCHW f32.
# ---------------------------------------------------------------------------
def dense_block_forward(x_nchw, body_weights_oihw, gate_weight_oihw,
                        mxu_dtype=jnp.float32):
    B, n_feats, H, W = x_nchw.shape
    n_units = len(body_weights_oihw)
    grow_rate = body_weights_oihw[0].shape[0]
    HW = H * W

    fpad = _round_up(n_feats, 8)
    gpad = _round_up(grow_rate, 8)
    c_total_pad = fpad + n_units * gpad
    itemsize = jnp.dtype(mxu_dtype).itemsize

    w_bytes = n_feats * c_total_pad
    for i in range(n_units):
        w_bytes += gpad * (fpad + i * gpad) * 9
    w_bytes *= itemsize

    # --- batch tile: fold batch into lanes, keep per-step VMEM under budget.
    budget = 12 * 1024 * 1024
    b_tile = 1
    for bt in range(B, 0, -1):
        if B % bt:
            continue
        if bt != B and (bt * HW) % 128:
            continue
        n_lanes = bt * HW
        per_step = (c_total_pad * 10 * n_lanes * itemsize     # stack + feat
                    + (fpad + n_feats) * n_lanes * 4 * 2      # x/out (dbuf)
                    + 16 * n_lanes * 4 * 2)                   # masks (dbuf)
        if per_step + 2 * w_bytes <= budget:
            b_tile = bt
            break
    N = b_tile * HW
    num_tiles = B // b_tile

    # --- input: pad channels to fpad, fold batch into lanes: (fpad, B*HW).
    x_p = jnp.pad(x_nchw, ((0, 0), (0, fpad - n_feats), (0, 0), (0, 0)))
    x_k = jnp.transpose(x_p, (1, 0, 2, 3)).reshape(fpad, B * HW).astype(mxu_dtype)

    # --- body weights: (grow_rate, cin, 3, 3) -> (gpad, (fpad + i*gpad)*9),
    # per-group column order (tap, channel) matching the stack layout.
    def pack_body(w, i):
        cols = []
        w_in = jnp.transpose(w[:, :n_feats], (0, 2, 3, 1))            # (gr,3,3,nf)
        w_in = jnp.pad(w_in, ((0, 0), (0, 0), (0, 0), (0, fpad - n_feats)))
        cols.append(w_in.reshape(grow_rate, 9 * fpad))
        for j in range(i):
            wj = w[:, n_feats + j * grow_rate: n_feats + (j + 1) * grow_rate]
            wj = jnp.transpose(wj, (0, 2, 3, 1))                      # (gr,3,3,gr)
            wj = jnp.pad(wj, ((0, 0), (0, 0), (0, 0), (0, gpad - grow_rate)))
            cols.append(wj.reshape(grow_rate, 9 * gpad))
        packed = jnp.concatenate(cols, axis=1)
        packed = jnp.pad(packed, ((0, gpad - grow_rate), (0, 0)))
        return packed.astype(mxu_dtype)

    body_k = [pack_body(w, i) for i, w in enumerate(body_weights_oihw)]

    # --- gate weight: (n_feats, c_total, 1, 1) -> (n_feats, c_total_pad),
    # zero columns for the padding rows of `feat`.
    g = gate_weight_oihw.reshape(n_feats, n_feats + n_units * grow_rate)
    gcols = [jnp.pad(g[:, :n_feats], ((0, 0), (0, fpad - n_feats)))]
    for j in range(n_units):
        gj = g[:, n_feats + j * grow_rate: n_feats + (j + 1) * grow_rate]
        gcols.append(jnp.pad(gj, ((0, 0), (0, gpad - grow_rate))))
    gate_k = jnp.concatenate(gcols, axis=1).astype(mxu_dtype)

    # --- boundary masks for the 9 taps (hoisted out of the kernel), tiled
    # per image across the folded batch lanes.
    col = jnp.arange(HW, dtype=jnp.int32)
    hh, ww = col // W, col % W
    rows = []
    for t in range(9):
        dh, dw = t // 3 - 1, t % 3 - 1
        rows.append((hh + dh >= 0) & (hh + dh < H) & (ww + dw >= 0) & (ww + dw < W))
    mask = jnp.tile(jnp.stack(rows).astype(jnp.float32), (1, b_tile))   # (9, N)

    kernel = functools.partial(
        _dense_block_kernel, n_units=n_units, fpad=fpad, gpad=gpad, W=W, N=N)

    in_specs = [pl.BlockSpec((9, N), lambda b: (0, 0)),        # masks (constant)
                pl.BlockSpec((fpad, N), lambda b: (0, b))]     # input channels
    for w in body_k:
        in_specs.append(pl.BlockSpec(w.shape, lambda b: (0, 0)))
    in_specs.append(pl.BlockSpec(gate_k.shape, lambda b: (0, 0)))

    vmem_est = (c_total_pad * 10 * N * itemsize
                + (fpad + n_feats) * N * 4 * 2
                + 16 * N * 4 * 2 + 2 * w_bytes)
    cp_kwargs = dict(dimension_semantics=("parallel",))
    if vmem_est > 16 * 1024 * 1024:
        cp_kwargs["vmem_limit_bytes"] = int(min(vmem_est * 2, 100 * 1024 * 1024))

    out = pl.pallas_call(
        kernel,
        out_shape=jax.ShapeDtypeStruct((n_feats, B * HW), jnp.float32),
        grid=(num_tiles,),
        in_specs=in_specs,
        out_specs=pl.BlockSpec((n_feats, N), lambda b: (0, b)),
        scratch_shapes=[pltpu.VMEM((c_total_pad, N), mxu_dtype),
                        pltpu.VMEM((c_total_pad * 9, N), mxu_dtype)],
        compiler_params=pltpu.CompilerParams(**cp_kwargs),
    )(mask, x_k, *body_k, gate_k)

    return jnp.transpose(out.reshape(n_feats, B, H, W), (1, 0, 2, 3))


# ---------------------------------------------------------------------------
# Deterministic parameter construction (kaiming-uniform-like, PyTorch layout).
# ---------------------------------------------------------------------------
def make_params(key, n_feats, grow_rate, n_units):
    n_units = min(max(n_units, 4), 16)
    body_weights = []
    for i in range(n_units):
        cin = n_feats + i * grow_rate
        key, sub = jax.random.split(key)
        bound = 1.0 / (cin * 3 * 3) ** 0.5
        w = jax.random.uniform(
            sub, (grow_rate, cin, 3, 3), jnp.float32, -bound, bound)
        body_weights.append(w)
    cin_gate = n_feats + n_units * grow_rate
    key, sub = jax.random.split(key)
    bound = 1.0 / (cin_gate * 1 * 1) ** 0.5
    gate_weight = jax.random.uniform(
        sub, (n_feats, cin_gate, 1, 1), jnp.float32, -bound, bound)
    return body_weights, gate_weight


# ---------------------------------------------------------------------------
# Pure-JAX reference (XLA conv) to validate the fused Pallas kernel.
# ---------------------------------------------------------------------------
def _ref_conv(x_nchw, w_oihw, padding):
    return jax.lax.conv_general_dilated(
        x_nchw, w_oihw, window_strides=(1, 1),
        padding=[(padding, padding), (padding, padding)],
        dimension_numbers=("NCHW", "OIHW", "NCHW"))


def dense_block_reference(x_nchw, body_weights, gate_weight):
    x = x_nchw
    for w in body_weights:
        y = jnp.maximum(_ref_conv(x, w, 1), 0.0)
        x = jnp.concatenate([x, y], axis=1)
    return _ref_conv(x, gate_weight, 0)


if __name__ == "__main__":
    # Small shapes: batch=2, n_feats=8, grow_rate=4, n_units=4, spatial 16x16.
    B, n_feats, grow_rate, n_units, H, W = 2, 8, 4, 4, 16, 16

    key = jax.random.PRNGKey(0)
    key, xkey = jax.random.split(key)
    x = jax.random.normal(xkey, (B, n_feats, H, W), dtype=jnp.float32)

    body_weights, gate_weight = make_params(key, n_feats, grow_rate, n_units)

    fwd = jax.jit(dense_block_forward)
    out = jax.block_until_ready(fwd(x, body_weights, gate_weight))

    assert out.shape == (B, n_feats, H, W), out.shape

    ref = jax.block_until_ready(
        dense_block_reference(x, body_weights, gate_weight))
    if not jnp.allclose(out, ref, rtol=1e-3, atol=1e-3):
        raise AssertionError("Pallas dense_block does not match reference")

    print("KERNEL_OK")
</pallas_src>

<mosaic_0001>
module attributes {stable_mosaic.version = 11 : i64} {
  func.func @_dense_block_kernel(%arg0: i32, %arg1: memref<9x512xf32, #tpu.memory_space<vmem>>, %arg2: memref<8x512xf32, #tpu.memory_space<vmem>>, %arg3: memref<8x72xf32, #tpu.memory_space<vmem>>, %arg4: memref<8x144xf32, #tpu.memory_space<vmem>>, %arg5: memref<8x216xf32, #tpu.memory_space<vmem>>, %arg6: memref<8x288xf32, #tpu.memory_space<vmem>>, %arg7: memref<8x40xf32, #tpu.memory_space<vmem>>, %arg8: memref<8x512xf32, #tpu.memory_space<vmem>>, %arg9: memref<40x512xf32, #tpu.memory_space<vmem>>, %arg10: memref<360x512xf32, #tpu.memory_space<vmem>>) attributes {dimension_semantics = [#tpu.dimension_semantics<parallel>], iteration_bounds = array<i64: 1>, scalar_prefetch = 0 : i64, scratch_operands = 2 : i64, tpu.core_type = #tpu.core_type<tc>, window_params = [{pipeline_mode = #tpu.pipeline_mode<synchronous>, transform_indices = @transform_0, window_bounds = array<i64: 9, 512>}, {transform_indices = @transform_1, window_bounds = array<i64: 8, 512>}, {pipeline_mode = #tpu.pipeline_mode<synchronous>, transform_indices = @transform_2, window_bounds = array<i64: 8, 72>}, {pipeline_mode = #tpu.pipeline_mode<synchronous>, transform_indices = @transform_3, window_bounds = array<i64: 8, 144>}, {pipeline_mode = #tpu.pipeline_mode<synchronous>, transform_indices = @transform_4, window_bounds = array<i64: 8, 216>}, {pipeline_mode = #tpu.pipeline_mode<synchronous>, transform_indices = @transform_5, window_bounds = array<i64: 8, 288>}, {pipeline_mode = #tpu.pipeline_mode<synchronous>, transform_indices = @transform_6, window_bounds = array<i64: 8, 40>}, {transform_indices = @transform_7, window_bounds = array<i64: 8, 512>}]} {
    %c0 = arith.constant 0 : index
    %c0_0 = arith.constant 0 : index
    %0 = vector.load %arg2[%c0, %c0_0] : memref<8x512xf32, #tpu.memory_space<vmem>>, vector<8x512xf32>
    %c0_1 = arith.constant 0 : index
    %c0_2 = arith.constant 0 : index
    %1 = vector.load %arg9[%c0_1, %c0_2] : memref<40x512xf32, #tpu.memory_space<vmem>>, vector<8x512xf32>
    tpu.vector_store %arg9[%c0_1, %c0_2], %0 {strides = array<i32>} : memref<40x512xf32, #tpu.memory_space<vmem>>, vector<8x512xf32>,
    %c0_3 = arith.constant 0 : index
    %c0_4 = arith.constant 0 : index
    %2 = vector.load %arg1[%c0_3, %c0_4] : memref<9x512xf32, #tpu.memory_space<vmem>>, vector<1x512xf32>
    %c17_i32 = arith.constant 17 : i32
    %3 = tpu.dynamic_rotate %0 by %c17_i32 dim 1 : vector<8x512xf32>, i32 -> vector<8x512xf32>
    %4 = vector.broadcast %2 : vector<1x512xf32> to vector<8x512xf32>
    %5 = arith.mulf %3, %4 : vector<8x512xf32>
    %c0_5 = arith.constant 0 : index
    %c0_6 = arith.constant 0 : index
    %6 = vector.load %arg10[%c0_5, %c0_6] : memref<360x512xf32, #tpu.memory_space<vmem>>, vector<8x512xf32>
    tpu.vector_store %arg10[%c0_5, %c0_6], %5 {strides = array<i32>} : memref<360x512xf32, #tpu.memory_space<vmem>>, vector<8x512xf32>,
    %c1 = arith.constant 1 : index
    %c0_7 = arith.constant 0 : index
    %7 = vector.load %arg1[%c1, %c0_7] : memref<9x512xf32, #tpu.memory_space<vmem>>, vector<1x512xf32>
    %c16_i32 = arith.constant 16 : i32
    %8 = tpu.dynamic_rotate %0 by %c16_i32 dim 1 : vector<8x512xf32>, i32 -> vector<8x512xf32>
    %9 = vector.broadcast %7 : vector<1x512xf32> to vector<8x512xf32>
    %10 = arith.mulf %8, %9 : vector<8x512xf32>
    %c8 = arith.constant 8 : index
    %c0_8 = arith.constant 0 : index
    %11 = vector.load %arg10[%c8, %c0_8] : memref<360x512xf32, #tpu.memory_space<vmem>>, vector<8x512xf32>
    tpu.vector_store %arg10[%c8, %c0_8], %10 {strides = array<i32>} : memref<360x512xf32, #tpu.memory_space<vmem>>, vector<8x512xf32>,
    %c2 = arith.constant 2 : index
    %c0_9 = arith.constant 0 : index
    %12 = vector.load %arg1[%c2, %c0_9] : memref<9x512xf32, #tpu.memory_space<vmem>>, vector<1x512xf32>
    %c15_i32 = arith.constant 15 : i32
    %13 = tpu.dynamic_rotate %0 by %c15_i32 dim 1 : vector<8x512xf32>, i32 -> vector<8x512xf32>
    %14 = vector.broadcast %12 : vector<1x512xf32> to vector<8x512xf32>
    %15 = arith.mulf %13, %14 : vector<8x512xf32>
    %c16 = arith.constant 16 : index
    %c0_10 = arith.constant 0 : index
    %16 = vector.load %arg10[%c16, %c0_10] : memref<360x512xf32, #tpu.memory_space<vmem>>, vector<8x512xf32>
    tpu.vector_store %arg10[%c16, %c0_10], %15 {strides = array<i32>} : memref<360x512xf32, #tpu.memory_space<vmem>>, vector<8x512xf32>,
    %c3 = arith.constant 3 : index
    %c0_11 = arith.constant 0 : index
    %17 = vector.load %arg1[%c3, %c0_11] : memref<9x512xf32, #tpu.memory_space<vmem>>, vector<1x512xf32>
    %c1_i32 = arith.constant 1 : i32
    %18 = tpu.dynamic_rotate %0 by %c1_i32 dim 1 : vector<8x512xf32>, i32 -> vector<8x512xf32>
    %19 = vector.broadcast %17 : vector<1x512xf32> to vector<8x512xf32>
    %20 = arith.mulf %18, %19 : vector<8x512xf32>
    %c24 = arith.constant 24 : index
    %c0_12 = arith.constant 0 : index
    %21 = vector.load %arg10[%c24, %c0_12] : memref<360x512xf32, #tpu.memory_space<vmem>>, vector<8x512xf32>
    tpu.vector_store %arg10[%c24, %c0_12], %20 {strides = array<i32>} : memref<360x512xf32, #tpu.memory_space<vmem>>, vector<8x512xf32>,
    %c32 = arith.constant 32 : index
    %c0_13 = arith.constant 0 : index
    %22 = vector.load %arg10[%c32, %c0_13] : memref<360x512xf32, #tpu.memory_space<vmem>>, vector<8x512xf32>
    tpu.vector_store %arg10[%c32, %c0_13], %0 {strides = array<i32>} : memref<360x512xf32, #tpu.memory_space<vmem>>, vector<8x512xf32>,
    %c5 = arith.constant 5 : index
    %c0_14 = arith.constant 0 : index
    %23 = vector.load %arg1[%c5, %c0_14] : memref<9x512xf32, #tpu.memory_space<vmem>>, vector<1x512xf32>
    %c511_i32 = arith.constant 511 : i32
    %24 = tpu.dynamic_rotate %0 by %c511_i32 dim 1 : vector<8x512xf32>, i32 -> vector<8x512xf32>
    %25 = vector.broadcast %23 : vector<1x512xf32> to vector<8x512xf32>
    %26 = arith.mulf %24, %25 : vector<8x512xf32>
    %c40 = arith.constant 40 : index
    %c0_15 = arith.constant 0 : index
    %27 = vector.load %arg10[%c40, %c0_15] : memref<360x512xf32, #tpu.memory_space<vmem>>, vector<8x512xf32>
    tpu.vector_store %arg10[%c40, %c0_15], %26 {strides = array<i32>} : memref<360x512xf32, #tpu.memory_space<vmem>>, vector<8x512xf32>,
    %c6 = arith.constant 6 : index
    %c0_16 = arith.constant 0 : index
    %28 = vector.load %arg1[%c6, %c0_16] : memref<9x512xf32, #tpu.memory_space<vmem>>, vector<1x512xf32>
    %c497_i32 = arith.constant 497 : i32
    %29 = tpu.dynamic_rotate %0 by %c497_i32 dim 1 : vector<8x512xf32>, i32 -> vector<8x512xf32>
    %30 = vector.broadcast %28 : vector<1x512xf32> to vector<8x512xf32>
    %31 = arith.mulf %29, %30 : vector<8x512xf32>
    %c48 = arith.constant 48 : index
    %c0_17 = arith.constant 0 : index
    %32 = vector.load %arg10[%c48, %c0_17] : memref<360x512xf32, #tpu.memory_space<vmem>>, vector<8x512xf32>
    tpu.vector_store %arg10[%c48, %c0_17], %31 {strides = array<i32>} : memref<360x512xf32, #tpu.memory_space<vmem>>, vector<8x512xf32>,
    %c7 = arith.constant 7 : index
    %c0_18 = arith.constant 0 : index
    %33 = vector.load %arg1[%c7, %c0_18] : memref<9x512xf32, #tpu.memory_space<vmem>>, vector<1x512xf32>
    %c496_i32 = arith.constant 496 : i32
    %34 = tpu.dynamic_rotate %0 by %c496_i32 dim 1 : vector<8x512xf32>, i32 -> vector<8x512xf32>
    %35 = vector.broadcast %33 : vector<1x512xf32> to vector<8x512xf32>
    %36 = arith.mulf %34, %35 : vector<8x512xf32>
    %c56 = arith.constant 56 : index
    %c0_19 = arith.constant 0 : index
    %37 = vector.load %arg10[%c56, %c0_19] : memref<360x512xf32, #tpu.memory_space<vmem>>, vector<8x512xf32>
    tpu.vector_store %arg10[%c56, %c0_19], %36 {strides = array<i32>} : memref<360x512xf32, #tpu.memory_space<vmem>>, vector<8x512xf32>,
    %c8_20 = arith.constant 8 : index
    %c0_21 = arith.constant 0 : index
    %38 = vector.load %arg1[%c8_20, %c0_21] : memref<9x512xf32, #tpu.memory_space<vmem>>, vector<1x512xf32>
    %c495_i32 = arith.constant 495 : i32
    %39 = tpu.dynamic_rotate %0 by %c495_i32 dim 1 : vector<8x512xf32>, i32 -> vector<8x512xf32>
    %40 = vector.broadcast %38 : vector<1x512xf32> to vector<8x512xf32>
    %41 = arith.mulf %39, %40 : vector<8x512xf32>
    %c64 = arith.constant 64 : index
    %c0_22 = arith.constant 0 : index
    %42 = vector.load %arg10[%c64, %c0_22] : memref<360x512xf32, #tpu.memory_space<vmem>>, vector<8x512xf32>
    tpu.vector_store %arg10[%c64, %c0_22], %41 {strides = array<i32>} : memref<360x512xf32, #tpu.memory_space<vmem>>, vector<8x512xf32>,
    %c0_23 = arith.constant 0 : index
    %c0_24 = arith.constant 0 : index
    %43 = vector.load %arg3[%c0_23, %c0_24] : memref<8x72xf32, #tpu.memory_space<vmem>>, vector<8x72xf32>
    %c0_25 = arith.constant 0 : index
    %c0_26 = arith.constant 0 : index
    %44 = vector.load %arg10[%c0_25, %c0_26] : memref<360x512xf32, #tpu.memory_space<vmem>>, vector<72x512xf32>
    %cst = arith.constant dense<0.000000e+00> : vector<8x512xf32>
    %45 = tpu.matmul %43, %44, %cst {dimension_numbers = #tpu.dot_dimension_numbers<[1], [0], [0], [1], [0, 0, 1, 1], [], []>} : vector<8x72xf32>, vector<72x512xf32>, vector<8x512xf32> -> vector<8x512xf32>
    %cst_27 = arith.constant 0.000000e+00 : f32
    %46 = vector.broadcast %cst_27 : f32 to vector<8x512xf32>
    %47 = arith.maximumf %45, %46 : vector<8x512xf32>
    %c8_28 = arith.constant 8 : index
    %c0_29 = arith.constant 0 : index
    %48 = vector.load %arg9[%c8_28, %c0_29] : memref<40x512xf32, #tpu.memory_space<vmem>>, vector<8x512xf32>
    tpu.vector_store %arg9[%c8_28, %c0_29], %47 {strides = array<i32>} : memref<40x512xf32, #tpu.memory_space<vmem>>, vector<8x512xf32>,
    %c0_30 = arith.constant 0 : index
    %c0_31 = arith.constant 0 : index
    %49 = vector.load %arg1[%c0_30, %c0_31] : memref<9x512xf32, #tpu.memory_space<vmem>>, vector<1x512xf32>
    %c17_i32_32 = arith.constant 17 : i32
    %50 = tpu.dynamic_rotate %47 by %c17_i32_32 dim 1 : vector<8x512xf32>, i32 -> vector<8x512xf32>
    %51 = vector.broadcast %49 : vector<1x512xf32> to vector<8x512xf32>
    %52 = arith.mulf %50, %51 : vector<8x512xf32>
    %c72 = arith.constant 72 : index
    %c0_33 = arith.constant 0 : index
    %53 = vector.load %arg10[%c72, %c0_33] : memref<360x512xf32, #tpu.memory_space<vmem>>, vector<8x512xf32>
    tpu.vector_store %arg10[%c72, %c0_33], %52 {strides = array<i32>} : memref<360x512xf32, #tpu.memory_space<vmem>>, vector<8x512xf32>,
    %c1_34 = arith.constant 1 : index
    %c0_35 = arith.constant 0 : index
    %54 = vector.load %arg1[%c1_34, %c0_35] : memref<9x512xf32, #tpu.memory_space<vmem>>, vector<1x512xf32>
    %c16_i32_36 = arith.constant 16 : i32
    %55 = tpu.dynamic_rotate %47 by %c16_i32_36 dim 1 : vector<8x512xf32>, i32 -> vector<8x512xf32>
    %56 = vector.broadcast %54 : vector<1x512xf32> to vector<8x512xf32>
    %57 = arith.mulf %55, %56 : vector<8x512xf32>
    %c80 = arith.constant 80 : index
    %c0_37 = arith.constant 0 : index
    %58 = vector.load %arg10[%c80, %c0_37] : memref<360x512xf32, #tpu.memory_space<vmem>>, vector<8x512xf32>
    tpu.vector_store %arg10[%c80, %c0_37], %57 {strides = array<i32>} : memref<360x512xf32, #tpu.memory_space<vmem>>, vector<8x512xf32>,
    %c2_38 = arith.constant 2 : index
    %c0_39 = arith.constant 0 : index
    %59 = vector.load %arg1[%c2_38, %c0_39] : memref<9x512xf32, #tpu.memory_space<vmem>>, vector<1x512xf32>
    %c15_i32_40 = arith.constant 15 : i32
    %60 = tpu.dynamic_rotate %47 by %c15_i32_40 dim 1 : vector<8x512xf32>, i32 -> vector<8x512xf32>
    %61 = vector.broadcast %59 : vector<1x512xf32> to vector<8x512xf32>
    %62 = arith.mulf %60, %61 : vector<8x512xf32>
    %c88 = arith.constant 88 : index
    %c0_41 = arith.constant 0 : index
    %63 = vector.load %arg10[%c88, %c0_41] : memref<360x512xf32, #tpu.memory_space<vmem>>, vector<8x512xf32>
    tpu.vector_store %arg10[%c88, %c0_41], %62 {strides = array<i32>} : memref<360x512xf32, #tpu.memory_space<vmem>>, vector<8x512xf32>,
    %c3_42 = arith.constant 3 : index
    %c0_43 = arith.constant 0 : index
    %64 = vector.load %arg1[%c3_42, %c0_43] : memref<9x512xf32, #tpu.memory_space<vmem>>, vector<1x512xf32>
    %c1_i32_44 = arith.constant 1 : i32
    %65 = tpu.dynamic_rotate %47 by %c1_i32_44 dim 1 : vector<8x512xf32>, i32 -> vector<8x512xf32>
    %66 = vector.broadcast %64 : vector<1x512xf32> to vector<8x512xf32>
    %67 = arith.mulf %65, %66 : vector<8x512xf32>
    %c96 = arith.constant 96 : index
    %c0_45 = arith.constant 0 : index
    %68 = vector.load %arg10[%c96, %c0_45] : memref<360x512xf32, #tpu.memory_space<vmem>>, vector<8x512xf32>
    tpu.vector_store %arg10[%c96, %c0_45], %67 {strides = array<i32>} : memref<360x512xf32, #tpu.memory_space<vmem>>, vector<8x512xf32>,
    %c104 = arith.constant 104 : index
    %c0_46 = arith.constant 0 : index
    %69 = vector.load %arg10[%c104, %c0_46] : memref<360x512xf32, #tpu.memory_space<vmem>>, vector<8x512xf32>
    tpu.vector_store %arg10[%c104, %c0_46], %47 {strides = array<i32>} : memref<360x512xf32, #tpu.memory_space<vmem>>, vector<8x512xf32>,
    %c5_47 = arith.constant 5 : index
    %c0_48 = arith.constant 0 : index
    %70 = vector.load %arg1[%c5_47, %c0_48] : memref<9x512xf32, #tpu.memory_space<vmem>>, vector<1x512xf32>
    %c511_i32_49 = arith.constant 511 : i32
    %71 = tpu.dynamic_rotate %47 by %c511_i32_49 dim 1 : vector<8x512xf32>, i32 -> vector<8x512xf32>
    %72 = vector.broadcast %70 : vector<1x512xf32> to vector<8x512xf32>
    %73 = arith.mulf %71, %72 : vector<8x512xf32>
    %c112 = arith.constant 112 : index
    %c0_50 = arith.constant 0 : index
    %74 = vector.load %arg10[%c112, %c0_50] : memref<360x512xf32, #tpu.memory_space<vmem>>, vector<8x512xf32>
    tpu.vector_store %arg10[%c112, %c0_50], %73 {strides = array<i32>} : memref<360x512xf32, #tpu.memory_space<vmem>>, vector<8x512xf32>,
    %c6_51 = arith.constant 6 : index
    %c0_52 = arith.constant 0 : index
    %75 = vector.load %arg1[%c6_51, %c0_52] : memref<9x512xf32, #tpu.memory_space<vmem>>, vector<1x512xf32>
    %c497_i32_53 = arith.constant 497 : i32
    %76 = tpu.dynamic_rotate %47 by %c497_i32_53 dim 1 : vector<8x512xf32>, i32 -> vector<8x512xf32>
    %77 = vector.broadcast %75 : vector<1x512xf32> to vector<8x512xf32>
    %78 = arith.mulf %76, %77 : vector<8x512xf32>
    %c120 = arith.constant 120 : index
    %c0_54 = arith.constant 0 : index
    %79 = vector.load %arg10[%c120, %c0_54] : memref<360x512xf32, #tpu.memory_space<vmem>>, vector<8x512xf32>
    tpu.vector_store %arg10[%c120, %c0_54], %78 {strides = array<i32>} : memref<360x512xf32, #tpu.memory_space<vmem>>, vector<8x512xf32>,
    %c7_55 = arith.constant 7 : index
    %c0_56 = arith.constant 0 : index
    %80 = vector.load %arg1[%c7_55, %c0_56] : memref<9x512xf32, #tpu.memory_space<vmem>>, vector<1x512xf32>
    %c496_i32_57 = arith.constant 496 : i32
    %81 = tpu.dynamic_rotate %47 by %c496_i32_57 dim 1 : vector<8x512xf32>, i32 -> vector<8x512xf32>
    %82 = vector.broadcast %80 : vector<1x512xf32> to vector<8x512xf32>
    %83 = arith.mulf %81, %82 : vector<8x512xf32>
    %c128 = arith.constant 128 : index
    %c0_58 = arith.constant 0 : index
    %84 = vector.load %arg10[%c128, %c0_58] : memref<360x512xf32, #tpu.memory_space<vmem>>, vector<8x512xf32>
    tpu.vector_store %arg10[%c128, %c0_58], %83 {strides = array<i32>} : memref<360x512xf32, #tpu.memory_space<vmem>>, vector<8x512xf32>,
    %c8_59 = arith.constant 8 : index
    %c0_60 = arith.constant 0 : index
    %85 = vector.load %arg1[%c8_59, %c0_60] : memref<9x512xf32, #tpu.memory_space<vmem>>, vector<1x512xf32>
    %c495_i32_61 = arith.constant 495 : i32
    %86 = tpu.dynamic_rotate %47 by %c495_i32_61 dim 1 : vector<8x512xf32>, i32 -> vector<8x512xf32>
    %87 = vector.broadcast %85 : vector<1x512xf32> to vector<8x512xf32>
    %88 = arith.mulf %86, %87 : vector<8x512xf32>
    %c136 = arith.constant 136 : index
    %c0_62 = arith.constant 0 : index
    %89 = vector.load %arg10[%c136, %c0_62] : memref<360x512xf32, #tpu.memory_space<vmem>>, vector<8x512xf32>
    tpu.vector_store %arg10[%c136, %c0_62], %88 {strides = array<i32>} : memref<360x512xf32, #tpu.memory_space<vmem>>, vector<8x512xf32>,
    %c0_63 = arith.constant 0 : index
    %c0_64 = arith.constant 0 : index
    %90 = vector.load %arg4[%c0_63, %c0_64] : memref<8x144xf32, #tpu.memory_space<vmem>>, vector<8x144xf32>
    %c0_65 = arith.constant 0 : index
    %c0_66 = arith.constant 0 : index
    %91 = vector.load %arg10[%c0_65, %c0_66] : memref<360x512xf32, #tpu.memory_space<vmem>>, vector<144x512xf32>
    %cst_67 = arith.constant dense<0.000000e+00> : vector<8x512xf32>
    %92 = tpu.matmul %90, %91, %cst_67 {dimension_numbers = #tpu.dot_dimension_numbers<[1], [0], [0], [1], [0, 0, 1, 1], [], []>} : vector<8x144xf32>, vector<144x512xf32>, vector<8x512xf32> -> vector<8x512xf32>
    %cst_68 = arith.constant 0.000000e+00 : f32
    %93 = vector.broadcast %cst_68 : f32 to vector<8x512xf32>
    %94 = arith.maximumf %92, %93 : vector<8x512xf32>
    %c16_69 = arith.constant 16 : index
    %c0_70 = arith.constant 0 : index
    %95 = vector.load %arg9[%c16_69, %c0_70] : memref<40x512xf32, #tpu.memory_space<vmem>>, vector<8x512xf32>
    tpu.vector_store %arg9[%c16_69, %c0_70], %94 {strides = array<i32>} : memref<40x512xf32, #tpu.memory_space<vmem>>, vector<8x512xf32>,
    %c0_71 = arith.constant 0 : index
    %c0_72 = arith.constant 0 : index
    %96 = vector.load %arg1[%c0_71, %c0_72] : memref<9x512xf32, #tpu.memory_space<vmem>>, vector<1x512xf32>
    %c17_i32_73 = arith.constant 17 : i32
    %97 = tpu.dynamic_rotate %94 by %c17_i32_73 dim 1 : vector<8x512xf32>, i32 -> vector<8x512xf32>
    %98 = vector.broadcast %96 : vector<1x512xf32> to vector<8x512xf32>
    %99 = arith.mulf %97, %98 : vector<8x512xf32>
    %c144 = arith.constant 144 : index
    %c0_74 = arith.constant 0 : index
    %100 = vector.load %arg10[%c144, %c0_74] : memref<360x512xf32, #tpu.memory_space<vmem>>, vector<8x512xf32>
    tpu.vector_store %arg10[%c144, %c0_74], %99 {strides = array<i32>} : memref<360x512xf32, #tpu.memory_space<vmem>>, vector<8x512xf32>,
    %c1_75 = arith.constant 1 : index
    %c0_76 = arith.constant 0 : index
    %101 = vector.load %arg1[%c1_75, %c0_76] : memref<9x512xf32, #tpu.memory_space<vmem>>, vector<1x512xf32>
    %c16_i32_77 = arith.constant 16 : i32
    %102 = tpu.dynamic_rotate %94 by %c16_i32_77 dim 1 : vector<8x512xf32>, i32 -> vector<8x512xf32>
    %103 = vector.broadcast %101 : vector<1x512xf32> to vector<8x512xf32>
    %104 = arith.mulf %102, %103 : vector<8x512xf32>
    %c152 = arith.constant 152 : index
    %c0_78 = arith.constant 0 : index
    %105 = vector.load %arg10[%c152, %c0_78] : memref<360x512xf32, #tpu.memory_space<vmem>>, vector<8x512xf32>
    tpu.vector_store %arg10[%c152, %c0_78], %104 {strides = array<i32>} : memref<360x512xf32, #tpu.memory_space<vmem>>, vector<8x512xf32>,
    %c2_79 = arith.constant 2 : index
    %c0_80 = arith.constant 0 : index
    %106 = vector.load %arg1[%c2_79, %c0_80] : memref<9x512xf32, #tpu.memory_space<vmem>>, vector<1x512xf32>
    %c15_i32_81 = arith.constant 15 : i32
    %107 = tpu.dynamic_rotate %94 by %c15_i32_81 dim 1 : vector<8x512xf32>, i32 -> vector<8x512xf32>
    %108 = vector.broadcast %106 : vector<1x512xf32> to vector<8x512xf32>
    %109 = arith.mulf %107, %108 : vector<8x512xf32>
    %c160 = arith.constant 160 : index
    %c0_82 = arith.constant 0 : index
    %110 = vector.load %arg10[%c160, %c0_82] : memref<360x512xf32, #tpu.memory_space<vmem>>, vector<8x512xf32>
    tpu.vector_store %arg10[%c160, %c0_82], %109 {strides = array<i32>} : memref<360x512xf32, #tpu.memory_space<vmem>>, vector<8x512xf32>,
    %c3_83 = arith.constant 3 : index
    %c0_84 = arith.constant 0 : index
    %111 = vector.load %arg1[%c3_83, %c0_84] : memref<9x512xf32, #tpu.memory_space<vmem>>, vector<1x512xf32>
    %c1_i32_85 = arith.constant 1 : i32
    %112 = tpu.dynamic_rotate %94 by %c1_i32_85 dim 1 : vector<8x512xf32>, i32 -> vector<8x512xf32>
    %113 = vector.broadcast %111 : vector<1x512xf32> to vector<8x512xf32>
    %114 = arith.mulf %112, %113 : vector<8x512xf32>
    %c168 = arith.constant 168 : index
    %c0_86 = arith.constant 0 : index
    %115 = vector.load %arg10[%c168, %c0_86] : memref<360x512xf32, #tpu.memory_space<vmem>>, vector<8x512xf32>
    tpu.vector_store %arg10[%c168, %c0_86], %114 {strides = array<i32>} : memref<360x512xf32, #tpu.memory_space<vmem>>, vector<8x512xf32>,
    %c176 = arith.constant 176 : index
    %c0_87 = arith.constant 0 : index
    %116 = vector.load %arg10[%c176, %c0_87] : memref<360x512xf32, #tpu.memory_space<vmem>>, vector<8x512xf32>
    tpu.vector_store %arg10[%c176, %c0_87], %94 {strides = array<i32>} : memref<360x512xf32, #tpu.memory_space<vmem>>, vector<8x512xf32>,
    %c5_88 = arith.constant 5 : index
    %c0_89 = arith.constant 0 : index
    %117 = vector.load %arg1[%c5_88, %c0_89] : memref<9x512xf32, #tpu.memory_space<vmem>>, vector<1x512xf32>
    %c511_i32_90 = arith.constant 511 : i32
    %118 = tpu.dynamic_rotate %94 by %c511_i32_90 dim 1 : vector<8x512xf32>, i32 -> vector<8x512xf32>
    %119 = vector.broadcast %117 : vector<1x512xf32> to vector<8x512xf32>
    %120 = arith.mulf %118, %119 : vector<8x512xf32>
    %c184 = arith.constant 184 : index
    %c0_91 = arith.constant 0 : index
    %121 = vector.load %arg10[%c184, %c0_91] : memref<360x512xf32, #tpu.memory_space<vmem>>, vector<8x512xf32>
    tpu.vector_store %arg10[%c184, %c0_91], %120 {strides = array<i32>} : memref<360x512xf32, #tpu.memory_space<vmem>>, vector<8x512xf32>,
    %c6_92 = arith.constant 6 : index
    %c0_93 = arith.constant 0 : index
    %122 = vector.load %arg1[%c6_92, %c0_93] : memref<9x512xf32, #tpu.memory_space<vmem>>, vector<1x512xf32>
    %c497_i32_94 = arith.constant 497 : i32
    %123 = tpu.dynamic_rotate %94 by %c497_i32_94 dim 1 : vector<8x512xf32>, i32 -> vector<8x512xf32>
    %124 = vector.broadcast %122 : vector<1x512xf32> to vector<8x512xf32>
    %125 = arith.mulf %123, %124 : vector<8x512xf32>
    %c192 = arith.constant 192 : index
    %c0_95 = arith.constant 0 : index
    %126 = vector.load %arg10[%c192, %c0_95] : memref<360x512xf32, #tpu.memory_space<vmem>>, vector<8x512xf32>
    tpu.vector_store %arg10[%c192, %c0_95], %125 {strides = array<i32>} : memref<360x512xf32, #tpu.memory_space<vmem>>, vector<8x512xf32>,
    %c7_96 = arith.constant 7 : index
    %c0_97 = arith.constant 0 : index
    %127 = vector.load %arg1[%c7_96, %c0_97] : memref<9x512xf32, #tpu.memory_space<vmem>>, vector<1x512xf32>
    %c496_i32_98 = arith.constant 496 : i32
    %128 = tpu.dynamic_rotate %94 by %c496_i32_98 dim 1 : vector<8x512xf32>, i32 -> vector<8x512xf32>
    %129 = vector.broadcast %127 : vector<1x512xf32> to vector<8x512xf32>
    %130 = arith.mulf %128, %129 : vector<8x512xf32>
    %c200 = arith.constant 200 : index
    %c0_99 = arith.constant 0 : index
    %131 = vector.load %arg10[%c200, %c0_99] : memref<360x512xf32, #tpu.memory_space<vmem>>, vector<8x512xf32>
    tpu.vector_store %arg10[%c200, %c0_99], %130 {strides = array<i32>} : memref<360x512xf32, #tpu.memory_space<vmem>>, vector<8x512xf32>,
    %c8_100 = arith.constant 8 : index
    %c0_101 = arith.constant 0 : index
    %132 = vector.load %arg1[%c8_100, %c0_101] : memref<9x512xf32, #tpu.memory_space<vmem>>, vector<1x512xf32>
    %c495_i32_102 = arith.constant 495 : i32
    %133 = tpu.dynamic_rotate %94 by %c495_i32_102 dim 1 : vector<8x512xf32>, i32 -> vector<8x512xf32>
    %134 = vector.broadcast %132 : vector<1x512xf32> to vector<8x512xf32>
    %135 = arith.mulf %133, %134 : vector<8x512xf32>
    %c208 = arith.constant 208 : index
    %c0_103 = arith.constant 0 : index
    %136 = vector.load %arg10[%c208, %c0_103] : memref<360x512xf32, #tpu.memory_space<vmem>>, vector<8x512xf32>
    tpu.vector_store %arg10[%c208, %c0_103], %135 {strides = array<i32>} : memref<360x512xf32, #tpu.memory_space<vmem>>, vector<8x512xf32>,
    %c0_104 = arith.constant 0 : index
    %c0_105 = arith.constant 0 : index
    %137 = vector.load %arg5[%c0_104, %c0_105] : memref<8x216xf32, #tpu.memory_space<vmem>>, vector<8x216xf32>
    %c0_106 = arith.constant 0 : index
    %c0_107 = arith.constant 0 : index
    %138 = vector.load %arg10[%c0_106, %c0_107] : memref<360x512xf32, #tpu.memory_space<vmem>>, vector<216x512xf32>
    %cst_108 = arith.constant dense<0.000000e+00> : vector<8x512xf32>
    %139 = tpu.matmul %137, %138, %cst_108 {dimension_numbers = #tpu.dot_dimension_numbers<[1], [0], [0], [1], [0, 0, 1, 1], [], []>} : vector<8x216xf32>, vector<216x512xf32>, vector<8x512xf32> -> vector<8x512xf32>
    %cst_109 = arith.constant 0.000000e+00 : f32
    %140 = vector.broadcast %cst_109 : f32 to vector<8x512xf32>
    %141 = arith.maximumf %139, %140 : vector<8x512xf32>
    %c24_110 = arith.constant 24 : index
    %c0_111 = arith.constant 0 : index
    %142 = vector.load %arg9[%c24_110, %c0_111] : memref<40x512xf32, #tpu.memory_space<vmem>>, vector<8x512xf32>
    tpu.vector_store %arg9[%c24_110, %c0_111], %141 {strides = array<i32>} : memref<40x512xf32, #tpu.memory_space<vmem>>, vector<8x512xf32>,
    %c0_112 = arith.constant 0 : index
    %c0_113 = arith.constant 0 : index
    %143 = vector.load %arg1[%c0_112, %c0_113] : memref<9x512xf32, #tpu.memory_space<vmem>>, vector<1x512xf32>
    %c17_i32_114 = arith.constant 17 : i32
    %144 = tpu.dynamic_rotate %141 by %c17_i32_114 dim 1 : vector<8x512xf32>, i32 -> vector<8x512xf32>
    %145 = vector.broadcast %143 : vector<1x512xf32> to vector<8x512xf32>
    %146 = arith.mulf %144, %145 : vector<8x512xf32>
    %c216 = arith.constant 216 : index
    %c0_115 = arith.constant 0 : index
    %147 = vector.load %arg10[%c216, %c0_115] : memref<360x512xf32, #tpu.memory_space<vmem>>, vector<8x512xf32>
    tpu.vector_store %arg10[%c216, %c0_115], %146 {strides = array<i32>} : memref<360x512xf32, #tpu.memory_space<vmem>>, vector<8x512xf32>,
    %c1_116 = arith.constant 1 : index
    %c0_117 = arith.constant 0 : index
    %148 = vector.load %arg1[%c1_116, %c0_117] : memref<9x512xf32, #tpu.memory_space<vmem>>, vector<1x512xf32>
    %c16_i32_118 = arith.constant 16 : i32
    %149 = tpu.dynamic_rotate %141 by %c16_i32_118 dim 1 : vector<8x512xf32>, i32 -> vector<8x512xf32>
    %150 = vector.broadcast %148 : vector<1x512xf32> to vector<8x512xf32>
    %151 = arith.mulf %149, %150 : vector<8x512xf32>
    %c224 = arith.constant 224 : index
    %c0_119 = arith.constant 0 : index
    %152 = vector.load %arg10[%c224, %c0_119] : memref<360x512xf32, #tpu.memory_space<vmem>>, vector<8x512xf32>
    tpu.vector_store %arg10[%c224, %c0_119], %151 {strides = array<i32>} : memref<360x512xf32, #tpu.memory_space<vmem>>, vector<8x512xf32>,
    %c2_120 = arith.constant 2 : index
    %c0_121 = arith.constant 0 : index
    %153 = vector.load %arg1[%c2_120, %c0_121] : memref<9x512xf32, #tpu.memory_space<vmem>>, vector<1x512xf32>
    %c15_i32_122 = arith.constant 15 : i32
    %154 = tpu.dynamic_rotate %141 by %c15_i32_122 dim 1 : vector<8x512xf32>, i32 -> vector<8x512xf32>
    %155 = vector.broadcast %153 : vector<1x512xf32> to vector<8x512xf32>
    %156 = arith.mulf %154, %155 : vector<8x512xf32>
    %c232 = arith.constant 232 : index
    %c0_123 = arith.constant 0 : index
    %157 = vector.load %arg10[%c232, %c0_123] : memref<360x512xf32, #tpu.memory_space<vmem>>, vector<8x512xf32>
    tpu.vector_store %arg10[%c232, %c0_123], %156 {strides = array<i32>} : memref<360x512xf32, #tpu.memory_space<vmem>>, vector<8x512xf32>,
    %c3_124 = arith.constant 3 : index
    %c0_125 = arith.constant 0 : index
    %158 = vector.load %arg1[%c3_124, %c0_125] : memref<9x512xf32, #tpu.memory_space<vmem>>, vector<1x512xf32>
    %c1_i32_126 = arith.constant 1 : i32
    %159 = tpu.dynamic_rotate %141 by %c1_i32_126 dim 1 : vector<8x512xf32>, i32 -> vector<8x512xf32>
    %160 = vector.broadcast %158 : vector<1x512xf32> to vector<8x512xf32>
    %161 = arith.mulf %159, %160 : vector<8x512xf32>
    %c240 = arith.constant 240 : index
    %c0_127 = arith.constant 0 : index
    %162 = vector.load %arg10[%c240, %c0_127] : memref<360x512xf32, #tpu.memory_space<vmem>>, vector<8x512xf32>
    tpu.vector_store %arg10[%c240, %c0_127], %161 {strides = array<i32>} : memref<360x512xf32, #tpu.memory_space<vmem>>, vector<8x512xf32>,
    %c248 = arith.constant 248 : index
    %c0_128 = arith.constant 0 : index
    %163 = vector.load %arg10[%c248, %c0_128] : memref<360x512xf32, #tpu.memory_space<vmem>>, vector<8x512xf32>
    tpu.vector_store %arg10[%c248, %c0_128], %141 {strides = array<i32>} : memref<360x512xf32, #tpu.memory_space<vmem>>, vector<8x512xf32>,
    %c5_129 = arith.constant 5 : index
    %c0_130 = arith.constant 0 : index
    %164 = vector.load %arg1[%c5_129, %c0_130] : memref<9x512xf32, #tpu.memory_space<vmem>>, vector<1x512xf32>
    %c511_i32_131 = arith.constant 511 : i32
    %165 = tpu.dynamic_rotate %141 by %c511_i32_131 dim 1 : vector<8x512xf32>, i32 -> vector<8x512xf32>
    %166 = vector.broadcast %164 : vector<1x512xf32> to vector<8x512xf32>
    %167 = arith.mulf %165, %166 : vector<8x512xf32>
    %c256 = arith.constant 256 : index
    %c0_132 = arith.constant 0 : index
    %168 = vector.load %arg10[%c256, %c0_132] : memref<360x512xf32, #tpu.memory_space<vmem>>, vector<8x512xf32>
    tpu.vector_store %arg10[%c256, %c0_132], %167 {strides = array<i32>} : memref<360x512xf32, #tpu.memory_space<vmem>>, vector<8x512xf32>,
    %c6_133 = arith.constant 6 : index
    %c0_134 = arith.constant 0 : index
    %169 = vector.load %arg1[%c6_133, %c0_134] : memref<9x512xf32, #tpu.memory_space<vmem>>, vector<1x512xf32>
    %c497_i32_135 = arith.constant 497 : i32
    %170 = tpu.dynamic_rotate %141 by %c497_i32_135 dim 1 : vector<8x512xf32>, i32 -> vector<8x512xf32>
    %171 = vector.broadcast %169 : vector<1x512xf32> to vector<8x512xf32>
    %172 = arith.mulf %170, %171 : vector<8x512xf32>
    %c264 = arith.constant 264 : index
    %c0_136 = arith.constant 0 : index
    %173 = vector.load %arg10[%c264, %c0_136] : memref<360x512xf32, #tpu.memory_space<vmem>>, vector<8x512xf32>
    tpu.vector_store %arg10[%c264, %c0_136], %172 {strides = array<i32>} : memref<360x512xf32, #tpu.memory_space<vmem>>, vector<8x512xf32>,
    %c7_137 = arith.constant 7 : index
    %c0_138 = arith.constant 0 : index
    %174 = vector.load %arg1[%c7_137, %c0_138] : memref<9x512xf32, #tpu.memory_space<vmem>>, vector<1x512xf32>
    %c496_i32_139 = arith.constant 496 : i32
    %175 = tpu.dynamic_rotate %141 by %c496_i32_139 dim 1 : vector<8x512xf32>, i32 -> vector<8x512xf32>
    %176 = vector.broadcast %174 : vector<1x512xf32> to vector<8x512xf32>
    %177 = arith.mulf %175, %176 : vector<8x512xf32>
    %c272 = arith.constant 272 : index
    %c0_140 = arith.constant 0 : index
    %178 = vector.load %arg10[%c272, %c0_140] : memref<360x512xf32, #tpu.memory_space<vmem>>, vector<8x512xf32>
    tpu.vector_store %arg10[%c272, %c0_140], %177 {strides = array<i32>} : memref<360x512xf32, #tpu.memory_space<vmem>>, vector<8x512xf32>,
    %c8_141 = arith.constant 8 : index
    %c0_142 = arith.constant 0 : index
    %179 = vector.load %arg1[%c8_141, %c0_142] : memref<9x512xf32, #tpu.memory_space<vmem>>, vector<1x512xf32>
    %c495_i32_143 = arith.constant 495 : i32
    %180 = tpu.dynamic_rotate %141 by %c495_i32_143 dim 1 : vector<8x512xf32>, i32 -> vector<8x512xf32>
    %181 = vector.broadcast %179 : vector<1x512xf32> to vector<8x512xf32>
    %182 = arith.mulf %180, %181 : vector<8x512xf32>
    %c280 = arith.constant 280 : index
    %c0_144 = arith.constant 0 : index
    %183 = vector.load %arg10[%c280, %c0_144] : memref<360x512xf32, #tpu.memory_space<vmem>>, vector<8x512xf32>
    tpu.vector_store %arg10[%c280, %c0_144], %182 {strides = array<i32>} : memref<360x512xf32, #tpu.memory_space<vmem>>, vector<8x512xf32>,
    %c0_145 = arith.constant 0 : index
    %c0_146 = arith.constant 0 : index
    %184 = vector.load %arg6[%c0_145, %c0_146] : memref<8x288xf32, #tpu.memory_space<vmem>>, vector<8x288xf32>
    %c0_147 = arith.constant 0 : index
    %c0_148 = arith.constant 0 : index
    %185 = vector.load %arg10[%c0_147, %c0_148] : memref<360x512xf32, #tpu.memory_space<vmem>>, vector<288x512xf32>
    %cst_149 = arith.constant dense<0.000000e+00> : vector<8x512xf32>
    %186 = tpu.matmul %184, %185, %cst_149 {dimension_numbers = #tpu.dot_dimension_numbers<[1], [0], [0], [1], [0, 0, 1, 1], [], []>} : vector<8x288xf32>, vector<288x512xf32>, vector<8x512xf32> -> vector<8x512xf32>
    %cst_150 = arith.constant 0.000000e+00 : f32
    %187 = vector.broadcast %cst_150 : f32 to vector<8x512xf32>
    %188 = arith.maximumf %186, %187 : vector<8x512xf32>
    %c32_151 = arith.constant 32 : index
    %c0_152 = arith.constant 0 : index
    %189 = vector.load %arg9[%c32_151, %c0_152] : memref<40x512xf32, #tpu.memory_space<vmem>>, vector<8x512xf32>
    tpu.vector_store %arg9[%c32_151, %c0_152], %188 {strides = array<i32>} : memref<40x512xf32, #tpu.memory_space<vmem>>, vector<8x512xf32>,
    %c0_153 = arith.constant 0 : index
    %c0_154 = arith.constant 0 : index
    %190 = vector.load %arg1[%c0_153, %c0_154] : memref<9x512xf32, #tpu.memory_space<vmem>>, vector<1x512xf32>
    %c17_i32_155 = arith.constant 17 : i32
    %191 = tpu.dynamic_rotate %188 by %c17_i32_155 dim 1 : vector<8x512xf32>, i32 -> vector<8x512xf32>
    %192 = vector.broadcast %190 : vector<1x512xf32> to vector<8x512xf32>
    %193 = arith.mulf %191, %192 : vector<8x512xf32>
    %c288 = arith.constant 288 : index
    %c0_156 = arith.constant 0 : index
    %194 = vector.load %arg10[%c288, %c0_156] : memref<360x512xf32, #tpu.memory_space<vmem>>, vector<8x512xf32>
    tpu.vector_store %arg10[%c288, %c0_156], %193 {strides = array<i32>} : memref<360x512xf32, #tpu.memory_space<vmem>>, vector<8x512xf32>,
    %c1_157 = arith.constant 1 : index
    %c0_158 = arith.constant 0 : index
    %195 = vector.load %arg1[%c1_157, %c0_158] : memref<9x512xf32, #tpu.memory_space<vmem>>, vector<1x512xf32>
    %c16_i32_159 = arith.constant 16 : i32
    %196 = tpu.dynamic_rotate %188 by %c16_i32_159 dim 1 : vector<8x512xf32>, i32 -> vector<8x512xf32>
    %197 = vector.broadcast %195 : vector<1x512xf32> to vector<8x512xf32>
    %198 = arith.mulf %196, %197 : vector<8x512xf32>
    %c296 = arith.constant 296 : index
    %c0_160 = arith.constant 0 : index
    %199 = vector.load %arg10[%c296, %c0_160] : memref<360x512xf32, #tpu.memory_space<vmem>>, vector<8x512xf32>
    tpu.vector_store %arg10[%c296, %c0_160], %198 {strides = array<i32>} : memref<360x512xf32, #tpu.memory_space<vmem>>, vector<8x512xf32>,
    %c2_161 = arith.constant 2 : index
    %c0_162 = arith.constant 0 : index
    %200 = vector.load %arg1[%c2_161, %c0_162] : memref<9x512xf32, #tpu.memory_space<vmem>>, vector<1x512xf32>
    %c15_i32_163 = arith.constant 15 : i32
    %201 = tpu.dynamic_rotate %188 by %c15_i32_163 dim 1 : vector<8x512xf32>, i32 -> vector<8x512xf32>
    %202 = vector.broadcast %200 : vector<1x512xf32> to vector<8x512xf32>
    %203 = arith.mulf %201, %202 : vector<8x512xf32>
    %c304 = arith.constant 304 : index
    %c0_164 = arith.constant 0 : index
    %204 = vector.load %arg10[%c304, %c0_164] : memref<360x512xf32, #tpu.memory_space<vmem>>, vector<8x512xf32>
    tpu.vector_store %arg10[%c304, %c0_164], %203 {strides = array<i32>} : memref<360x512xf32, #tpu.memory_space<vmem>>, vector<8x512xf32>,
    %c3_165 = arith.constant 3 : index
    %c0_166 = arith.constant 0 : index
    %205 = vector.load %arg1[%c3_165, %c0_166] : memref<9x512xf32, #tpu.memory_space<vmem>>, vector<1x512xf32>
    %c1_i32_167 = arith.constant 1 : i32
    %206 = tpu.dynamic_rotate %188 by %c1_i32_167 dim 1 : vector<8x512xf32>, i32 -> vector<8x512xf32>
    %207 = vector.broadcast %205 : vector<1x512xf32> to vector<8x512xf32>
    %208 = arith.mulf %206, %207 : vector<8x512xf32>
    %c312 = arith.constant 312 : index
    %c0_168 = arith.constant 0 : index
    %209 = vector.load %arg10[%c312, %c0_168] : memref<360x512xf32, #tpu.memory_space<vmem>>, vector<8x512xf32>
    tpu.vector_store %arg10[%c312, %c0_168], %208 {strides = array<i32>} : memref<360x512xf32, #tpu.memory_space<vmem>>, vector<8x512xf32>,
    %c320 = arith.constant 320 : index
    %c0_169 = arith.constant 0 : index
    %210 = vector.load %arg10[%c320, %c0_169] : memref<360x512xf32, #tpu.memory_space<vmem>>, vector<8x512xf32>
    tpu.vector_store %arg10[%c320, %c0_169], %188 {strides = array<i32>} : memref<360x512xf32, #tpu.memory_space<vmem>>, vector<8x512xf32>,
    %c5_170 = arith.constant 5 : index
    %c0_171 = arith.constant 0 : index
    %211 = vector.load %arg1[%c5_170, %c0_171] : memref<9x512xf32, #tpu.memory_space<vmem>>, vector<1x512xf32>
    %c511_i32_172 = arith.constant 511 : i32
    %212 = tpu.dynamic_rotate %188 by %c511_i32_172 dim 1 : vector<8x512xf32>, i32 -> vector<8x512xf32>
    %213 = vector.broadcast %211 : vector<1x512xf32> to vector<8x512xf32>
    %214 = arith.mulf %212, %213 : vector<8x512xf32>
    %c328 = arith.constant 328 : index
    %c0_173 = arith.constant 0 : index
    %215 = vector.load %arg10[%c328, %c0_173] : memref<360x512xf32, #tpu.memory_space<vmem>>, vector<8x512xf32>
    tpu.vector_store %arg10[%c328, %c0_173], %214 {strides = array<i32>} : memref<360x512xf32, #tpu.memory_space<vmem>>, vector<8x512xf32>,
    %c6_174 = arith.constant 6 : index
    %c0_175 = arith.constant 0 : index
    %216 = vector.load %arg1[%c6_174, %c0_175] : memref<9x512xf32, #tpu.memory_space<vmem>>, vector<1x512xf32>
    %c497_i32_176 = arith.constant 497 : i32
    %217 = tpu.dynamic_rotate %188 by %c497_i32_176 dim 1 : vector<8x512xf32>, i32 -> vector<8x512xf32>
    %218 = vector.broadcast %216 : vector<1x512xf32> to vector<8x512xf32>
    %219 = arith.mulf %217, %218 : vector<8x512xf32>
    %c336 = arith.constant 336 : index
    %c0_177 = arith.constant 0 : index
    %220 = vector.load %arg10[%c336, %c0_177] : memref<360x512xf32, #tpu.memory_space<vmem>>, vector<8x512xf32>
    tpu.vector_store %arg10[%c336, %c0_177], %219 {strides = array<i32>} : memref<360x512xf32, #tpu.memory_space<vmem>>, vector<8x512xf32>,
    %c7_178 = arith.constant 7 : index
    %c0_179 = arith.constant 0 : index
    %221 = vector.load %arg1[%c7_178, %c0_179] : memref<9x512xf32, #tpu.memory_space<vmem>>, vector<1x512xf32>
    %c496_i32_180 = arith.constant 496 : i32
    %222 = tpu.dynamic_rotate %188 by %c496_i32_180 dim 1 : vector<8x512xf32>, i32 -> vector<8x512xf32>
    %223 = vector.broadcast %221 : vector<1x512xf32> to vector<8x512xf32>
    %224 = arith.mulf %222, %223 : vector<8x512xf32>
    %c344 = arith.constant 344 : index
    %c0_181 = arith.constant 0 : index
    %225 = vector.load %arg10[%c344, %c0_181] : memref<360x512xf32, #tpu.memory_space<vmem>>, vector<8x512xf32>
    tpu.vector_store %arg10[%c344, %c0_181], %224 {strides = array<i32>} : memref<360x512xf32, #tpu.memory_space<vmem>>, vector<8x512xf32>,
    %c8_182 = arith.constant 8 : index
    %c0_183 = arith.constant 0 : index
    %226 = vector.load %arg1[%c8_182, %c0_183] : memref<9x512xf32, #tpu.memory_space<vmem>>, vector<1x512xf32>
    %c495_i32_184 = arith.constant 495 : i32
    %227 = tpu.dynamic_rotate %188 by %c495_i32_184 dim 1 : vector<8x512xf32>, i32 -> vector<8x512xf32>
    %228 = vector.broadcast %226 : vector<1x512xf32> to vector<8x512xf32>
    %229 = arith.mulf %227, %228 : vector<8x512xf32>
    %c352 = arith.constant 352 : index
    %c0_185 = arith.constant 0 : index
    %230 = vector.load %arg10[%c352, %c0_185] : memref<360x512xf32, #tpu.memory_space<vmem>>, vector<8x512xf32>
    tpu.vector_store %arg10[%c352, %c0_185], %229 {strides = array<i32>} : memref<360x512xf32, #tpu.memory_space<vmem>>, vector<8x512xf32>,
    %c0_186 = arith.constant 0 : index
    %c0_187 = arith.constant 0 : index
    %231 = vector.load %arg7[%c0_186, %c0_187] : memref<8x40xf32, #tpu.memory_space<vmem>>, vector<8x40xf32>
    %c0_188 = arith.constant 0 : index
    %c0_189 = arith.constant 0 : index
    %232 = vector.load %arg9[%c0_188, %c0_189] : memref<40x512xf32, #tpu.memory_space<vmem>>, vector<40x512xf32>
    %cst_190 = arith.constant dense<0.000000e+00> : vector<8x512xf32>
    %233 = tpu.matmul %231, %232, %cst_190 {dimension_numbers = #tpu.dot_dimension_numbers<[1], [0], [0], [1], [0, 0, 1, 1], [], []>} : vector<8x40xf32>, vector<40x512xf32>, vector<8x512xf32> -> vector<8x512xf32>
    %c0_191 = arith.constant 0 : index
    %c0_192 = arith.constant 0 : index
    %234 = vector.load %arg8[%c0_191, %c0_192] : memref<8x512xf32, #tpu.memory_space<vmem>>, vector<8x512xf32>
    tpu.vector_store %arg8[%c0_191, %c0_192], %233 {strides = array<i32>} : memref<8x512xf32, #tpu.memory_space<vmem>>, vector<8x512xf32>,
    return
  }
  func.func @transform_0(%arg0: i32) -> (i32, i32) {
    %c0_i32 = arith.constant 0 : i32
    %c0_i32_0 = arith.constant 0 : i32
    %c0_i32_1 = arith.constant 0 : i32
    return %c0_i32, %c0_i32_0 : i32, i32
  }
  func.func @transform_1(%arg0: i32) -> (i32, i32) {
    %c0_i32 = arith.constant 0 : i32
    %c0_i32_0 = arith.constant 0 : i32
    return %c0_i32, %arg0 : i32, i32
  }
  func.func @transform_2(%arg0: i32) -> (i32, i32) {
    %c0_i32 = arith.constant 0 : i32
    %c0_i32_0 = arith.constant 0 : i32
    %c0_i32_1 = arith.constant 0 : i32
    return %c0_i32, %c0_i32_0 : i32, i32
  }
  func.func @transform_3(%arg0: i32) -> (i32, i32) {
    %c0_i32 = arith.constant 0 : i32
    %c0_i32_0 = arith.constant 0 : i32
    %c0_i32_1 = arith.constant 0 : i32
    return %c0_i32, %c0_i32_0 : i32, i32
  }
  func.func @transform_4(%arg0: i32) -> (i32, i32) {
    %c0_i32 = arith.constant 0 : i32
    %c0_i32_0 = arith.constant 0 : i32
    %c0_i32_1 = arith.constant 0 : i32
    return %c0_i32, %c0_i32_0 : i32, i32
  }
  func.func @transform_5(%arg0: i32) -> (i32, i32) {
    %c0_i32 = arith.constant 0 : i32
    %c0_i32_0 = arith.constant 0 : i32
    %c0_i32_1 = arith.constant 0 : i32
    return %c0_i32, %c0_i32_0 : i32, i32
  }
  func.func @transform_6(%arg0: i32) -> (i32, i32) {
    %c0_i32 = arith.constant 0 : i32
    %c0_i32_0 = arith.constant 0 : i32
    %c0_i32_1 = arith.constant 0 : i32
    return %c0_i32, %c0_i32_0 : i32, i32
  }
  func.func @transform_7(%arg0: i32) -> (i32, i32) {
    %c0_i32 = arith.constant 0 : i32
    %c0_i32_0 = arith.constant 0 : i32
    return %c0_i32, %arg0 : i32, i32
  }
}

</mosaic_0001>

<llo_original>
// kernel: dense_block_forward.1
$region0: #{dense_block_forward.1}
  #allocation0 [shape = 'u32[]', space=smem, size = 0x4, offset = 0x4, fixed_abs, tag = 'smem constant byte address 0x4 - core index']
  #allocation1 [shape = 'u32[72,128]{1,0:T(1,128)}', space=vmem, size = 0x9000, scoped, tag = 'internal scratch']
  #allocation2 [shape = 'f32[40,512]{1,0:T(8,128)}', space=vmem, size = 0x14000, scoped, tag = 'scratch operand']
  #allocation3 [shape = 'f32[360,512]{1,0:T(8,128)}', space=vmem, size = 0xb4000, scoped, tag = 'scratch operand']
  %s0 = inlined_call_operand.vmem [shape: f32[9,512], index: 0, kind: input, shape index: {}]
  %s1 = inlined_call_operand.vmem [shape: f32[8,512], index: 1, kind: input, shape index: {}]
  %s2 = inlined_call_operand.vmem [shape: f32[8,72], index: 2, kind: input, shape index: {}]
  %s3 = inlined_call_operand.vmem [shape: f32[8,144], index: 3, kind: input, shape index: {}]
  %s4 = inlined_call_operand.vmem [shape: f32[8,216], index: 4, kind: input, shape index: {}]
  %s5 = inlined_call_operand.vmem [shape: f32[8,288], index: 5, kind: input, shape index: {}]
  %s6 = inlined_call_operand.vmem [shape: f32[8,40], index: 6, kind: input, shape index: {}]
  %s7 = inlined_call_operand.vmem [shape: f32[8,512], index: 7, kind: output, shape index: {}]
  %s8 = sld [smem:[#allocation0]]
  $region38: #{dense_block_forward.1} parent=0
    _
  %s10 = ssub.s32 1, %s8
  %s11 = scalar_select 0, %s10, %s8
  // Predicated region
  $region2: #{dense_block_forward.1} parent=0 // pred_check
    _
  $region3: #{dense_block_forward.1} parent=0 // pred_check_branch
    %13 = sbr.rel (0) target = $region5
  $region4: #{dense_block_forward.1} parent=0 // pred_region
    _
  $region5: #{dense_block_forward.1} parent=0 // pred_fallthru
    _
  // Predicated region
  $region6: #{dense_block_forward.1} parent=0 // pred_check
    _
  $region7: #{dense_block_forward.1} parent=0 // pred_check_branch
    %15 = sbr.rel (0) target = $region9
  $region8: #{dense_block_forward.1} parent=0 // pred_region
    _
  $region9: #{dense_block_forward.1} parent=0 // pred_fallthru
    _
  // Predicated region
  $region10: #{dense_block_forward.1} parent=0 // pred_check
    _
  $region11: #{dense_block_forward.1} parent=0 // pred_check_branch
    %17 = sbr.rel (0) target = $region13
  $region12: #{dense_block_forward.1} parent=0 // pred_region
    _
  $region13: #{dense_block_forward.1} parent=0 // pred_fallthru
    _
  // Predicated region
  $region14: #{dense_block_forward.1} parent=0 // pred_check
    _
  $region15: #{dense_block_forward.1} parent=0 // pred_check_branch
    %19 = sbr.rel (0) target = $region17
  $region16: #{dense_block_forward.1} parent=0 // pred_region
    _
  $region17: #{dense_block_forward.1} parent=0 // pred_fallthru
    _
  // Predicated region
  $region18: #{dense_block_forward.1} parent=0 // pred_check
    _
  $region19: #{dense_block_forward.1} parent=0 // pred_check_branch
    %21 = sbr.rel (0) target = $region21
  $region20: #{dense_block_forward.1} parent=0 // pred_region
    _
  $region21: #{dense_block_forward.1} parent=0 // pred_fallthru
    _
  // Predicated region
  $region22: #{dense_block_forward.1} parent=0 // pred_check
    _
  $region23: #{dense_block_forward.1} parent=0 // pred_check_branch
    %23 = sbr.rel (0) target = $region25
  $region24: #{dense_block_forward.1} parent=0 // pred_region
    _
  $region25: #{dense_block_forward.1} parent=0 // pred_fallthru
    _
  // Predicated region
  $region26: #{dense_block_forward.1} parent=0 // pred_check
    _
  $region27: #{dense_block_forward.1} parent=0 // pred_check_branch
    %25 = sbr.rel (0) target = $region29
  $region28: #{dense_block_forward.1} parent=0 // pred_region
    _
  $region29: #{dense_block_forward.1} parent=0 // pred_fallthru
    _
  %v26 = vld [vmem:[%s1] sm:$0xff]
  %v27 = vld [vmem:[%s1 + $0x8] sm:$0xff]
  %v28 = vld [vmem:[%s1 + $0x10] sm:$0xff]
  %v29 = vld [vmem:[%s1 + $0x18] sm:$0xff]
  %30 = vst [vmem:[#allocation2] sm:$0xff] %v26
  %31 = vst [vmem:[#allocation2 + $0x8] sm:$0xff] %v27
  %32 = vst [vmem:[#allocation2 + $0x10] sm:$0xff] %v28
  %33 = vst [vmem:[#allocation2 + $0x18] sm:$0xff] %v29
  %v34 = vld [vmem:[%s0] ss:$8 sm:$0xf]
  %35 = vrot.lane.b32.xlu0 %v26, 17
  %v36 = vpop.permute.xlu0 %35
  %37 = vrot.lane.b32.xlu0 %v27, 17
  %v38 = vpop.permute.xlu0 %37
  %39 = vrot.lane.b32.xlu0 %v28, 17
  %v40 = vpop.permute.xlu0 %39
  %41 = vrot.lane.b32.xlu0 %v29, 17
  %v42 = vpop.permute.xlu0 %41
  %v43 = vlaneseq
  %v44 = vand.u32 %v43, 127
  %vm45 = vcmp.lt.s32.totalorder %v44, 17
  %v46 = vsel %vm45, %v40, %v42
  %v47 = vsel %vm45, %v38, %v40
  %v48 = vsel %vm45, %v36, %v38
  %v49 = vsel %vm45, %v42, %v36
  %v51 = vperm.slane %v34, 0
  %v52 = vperm.slane %v34, 1
  %v53 = vperm.slane %v34, 2
  %v54 = vperm.slane %v34, 3
  %v59 = vmul.f32 %v49, %v51
  %v60 = vmul.f32 %v48, %v52
  %v61 = vmul.f32 %v47, %v53
  %v62 = vmul.f32 %v46, %v54
  %63 = vst [vmem:[#allocation3] sm:$0xff] %v59
  %64 = vst [vmem:[#allocation3 + $0x8] sm:$0xff] %v60
  %65 = vst [vmem:[#allocation3 + $0x10] sm:$0xff] %v61
  %66 = vst [vmem:[#allocation3 + $0x18] sm:$0xff] %v62
  %s67 = scalar_lea.vmem %s0, 1
  %v68 = vld [vmem:[%s67] ss:$8 sm:$0xf]
  %69 = vrot.lane.b32.xlu0 %v26, 16
  %v70 = vpop.permute.xlu0 %69
  %71 = vrot.lane.b32.xlu0 %v27, 16
  %v72 = vpop.permute.xlu0 %71
  %73 = vrot.lane.b32.xlu0 %v28, 16
  %v74 = vpop.permute.xlu0 %73
  %75 = vrot.lane.b32.xlu0 %v29, 16
  %v76 = vpop.permute.xlu0 %75
  %vm77 = vcmp.lt.s32.totalorder %v44, 16
  %v78 = vsel %vm77, %v74, %v76
  %v79 = vsel %vm77, %v72, %v74
  %v80 = vsel %vm77, %v70, %v72
  %v81 = vsel %vm77, %v76, %v70
  %v83 = vperm.slane %v68, 0
  %v84 = vperm.slane %v68, 1
  %v85 = vperm.slane %v68, 2
  %v86 = vperm.slane %v68, 3
  %v91 = vmul.f32 %v81, %v83
  %v92 = vmul.f32 %v80, %v84
  %v93 = vmul.f32 %v79, %v85
  %v94 = vmul.f32 %v78, %v86
  %95 = vst [vmem:[#allocation3 + $0x20] sm:$0xff] %v91
  %96 = vst [vmem:[#allocation3 + $0x28] sm:$0xff] %v92
  %97 = vst [vmem:[#allocation3 + $0x30] sm:$0xff] %v93
  %98 = vst [vmem:[#allocation3 + $0x38] sm:$0xff] %v94
  %s99 = scalar_lea.vmem %s0, 2
  %v100 = vld [vmem:[%s99] ss:$8 sm:$0xf]
  %101 = vrot.lane.b32.xlu0 %v26, 15
  %v102 = vpop.permute.xlu0 %101
  %103 = vrot.lane.b32.xlu0 %v27, 15
  %v104 = vpop.permute.xlu0 %103
  %105 = vrot.lane.b32.xlu0 %v28, 15
  %v106 = vpop.permute.xlu0 %105
  %107 = vrot.lane.b32.xlu0 %v29, 15
  %v108 = vpop.permute.xlu0 %107
  %vm109 = vcmp.lt.s32.totalorder %v44, 15
  %v110 = vsel %vm109, %v106, %v108
  %v111 = vsel %vm109, %v104, %v106
  %v112 = vsel %vm109, %v102, %v104
  %v113 = vsel %vm109, %v108, %v102
  %v115 = vperm.slane %v100, 0
  %v116 = vperm.slane %v100, 1
  %v117 = vperm.slane %v100, 2
  %v118 = vperm.slane %v100, 3
  %v123 = vmul.f32 %v113, %v115
  %v124 = vmul.f32 %v112, %v116
  %v125 = vmul.f32 %v111, %v117
  %v126 = vmul.f32 %v110, %v118
  %127 = vst [vmem:[#allocation3 + $0x40] sm:$0xff] %v123
  %128 = vst [vmem:[#allocation3 + $0x48] sm:$0xff] %v124
  %129 = vst [vmem:[#allocation3 + $0x50] sm:$0xff] %v125
  %130 = vst [vmem:[#allocation3 + $0x58] sm:$0xff] %v126
  %s131 = scalar_lea.vmem %s0, 3
  %v132 = vld [vmem:[%s131] ss:$8 sm:$0xf]
  %133 = vrot.lane.b32.xlu0 %v26, 1
  %v134 = vpop.permute.xlu0 %133
  %135 = vrot.lane.b32.xlu0 %v27, 1
  %v136 = vpop.permute.xlu0 %135
  %137 = vrot.lane.b32.xlu0 %v28, 1
  %v138 = vpop.permute.xlu0 %137
  %139 = vrot.lane.b32.xlu0 %v29, 1
  %v140 = vpop.permute.xlu0 %139
  %vm141 = vcmp.lt.s32.totalorder %v44, 1
  %v142 = vsel %vm141, %v138, %v140
  %v143 = vsel %vm141, %v136, %v138
  %v144 = vsel %vm141, %v134, %v136
  %v145 = vsel %vm141, %v140, %v134
  %v147 = vperm.slane %v132, 0
  %v148 = vperm.slane %v132, 1
  %v149 = vperm.slane %v132, 2
  %v150 = vperm.slane %v132, 3
  %v155 = vmul.f32 %v145, %v147
  %v156 = vmul.f32 %v144, %v148
  %v157 = vmul.f32 %v143, %v149
  %v158 = vmul.f32 %v142, %v150
  %159 = vst [vmem:[#allocation3 + $0x60] sm:$0xff] %v155
  %160 = vst [vmem:[#allocation3 + $0x68] sm:$0xff] %v156
  %161 = vst [vmem:[#allocation3 + $0x70] sm:$0xff] %v157
  %162 = vst [vmem:[#allocation3 + $0x78] sm:$0xff] %v158
  %163 = vst [vmem:[#allocation3 + $0x80] sm:$0xff] %v26
  %164 = vst [vmem:[#allocation3 + $0x88] sm:$0xff] %v27
  %165 = vst [vmem:[#allocation3 + $0x90] sm:$0xff] %v28
  %166 = vst [vmem:[#allocation3 + $0x98] sm:$0xff] %v29
  %s167 = scalar_lea.vmem %s0, 5
  %v168 = vld [vmem:[%s167] ss:$8 sm:$0xf]
  %169 = vrot.lane.b32.xlu0 %v26, 127
  %v170 = vpop.permute.xlu0 %169
  %171 = vrot.lane.b32.xlu0 %v27, 127
  %v172 = vpop.permute.xlu0 %171
  %173 = vrot.lane.b32.xlu0 %v28, 127
  %v174 = vpop.permute.xlu0 %173
  %175 = vrot.lane.b32.xlu0 %v29, 127
  %v176 = vpop.permute.xlu0 %175
  %vm177 = vcmp.lt.s32.totalorder %v44, 127
  %v178 = vsel %vm177, %v174, %v176
  %v179 = vsel %vm177, %v172, %v174
  %v180 = vsel %vm177, %v170, %v172
  %v181 = vsel %vm177, %v176, %v170
  %v183 = vperm.slane %v168, 0
  %v184 = vperm.slane %v168, 1
  %v185 = vperm.slane %v168, 2
  %v186 = vperm.slane %v168, 3
  %v191 = vmul.f32 %v180, %v183
  %v192 = vmul.f32 %v179, %v184
  %v193 = vmul.f32 %v178, %v185
  %v194 = vmul.f32 %v181, %v186
  %195 = vst [vmem:[#allocation3 + $0xa0] sm:$0xff] %v191
  %196 = vst [vmem:[#allocation3 + $0xa8] sm:$0xff] %v192
  %197 = vst [vmem:[#allocation3 + $0xb0] sm:$0xff] %v193
  %198 = vst [vmem:[#allocation3 + $0xb8] sm:$0xff] %v194
  %s199 = scalar_lea.vmem %s0, 6
  %v200 = vld [vmem:[%s199] ss:$8 sm:$0xf]
  %201 = vrot.lane.b32.xlu0 %v26, 113
  %v202 = vpop.permute.xlu0 %201
  %203 = vrot.lane.b32.xlu0 %v27, 113
  %v204 = vpop.permute.xlu0 %203
  %205 = vrot.lane.b32.xlu0 %v28, 113
  %v206 = vpop.permute.xlu0 %205
  %207 = vrot.lane.b32.xlu0 %v29, 113
  %v208 = vpop.permute.xlu0 %207
  %vm209 = vcmp.lt.s32.totalorder %v44, 113
  %v210 = vsel %vm209, %v206, %v208
  %v211 = vsel %vm209, %v204, %v206
  %v212 = vsel %vm209, %v202, %v204
  %v213 = vsel %vm209, %v208, %v202
  %v215 = vperm.slane %v200, 0
  %v216 = vperm.slane %v200, 1
  %v217 = vperm.slane %v200, 2
  %v218 = vperm.slane %v200, 3
  %v223 = vmul.f32 %v212, %v215
  %v224 = vmul.f32 %v211, %v216
  %v225 = vmul.f32 %v210, %v217
  %v226 = vmul.f32 %v213, %v218
  %227 = vst [vmem:[#allocation3 + $0xc0] sm:$0xff] %v223
  %228 = vst [vmem:[#allocation3 + $0xc8] sm:$0xff] %v224
  %229 = vst [vmem:[#allocation3 + $0xd0] sm:$0xff] %v225
  %230 = vst [vmem:[#allocation3 + $0xd8] sm:$0xff] %v226
  %s231 = scalar_lea.vmem %s0, 7
  %v232 = vld [vmem:[%s231] ss:$8 sm:$0xf]
  %233 = vrot.lane.b32.xlu0 %v26, 112
  %v234 = vpop.permute.xlu0 %233
  %235 = vrot.lane.b32.xlu0 %v27, 112
  %v236 = vpop.permute.xlu0 %235
  %237 = vrot.lane.b32.xlu0 %v28, 112
  %v238 = vpop.permute.xlu0 %237
  %239 = vrot.lane.b32.xlu0 %v29, 112
  %v240 = vpop.permute.xlu0 %239
  %vm241 = vcmp.lt.s32.totalorder %v44, 112
  %v242 = vsel %vm241, %v238, %v240
  %v243 = vsel %vm241, %v236, %v238
  %v244 = vsel %vm241, %v234, %v236
  %v245 = vsel %vm241, %v240, %v234
  %v247 = vperm.slane %v232, 0
  %v248 = vperm.slane %v232, 1
  %v249 = vperm.slane %v232, 2
  %v250 = vperm.slane %v232, 3
  %v255 = vmul.f32 %v244, %v247
  %v256 = vmul.f32 %v243, %v248
  %v257 = vmul.f32 %v242, %v249
  %v258 = vmul.f32 %v245, %v250
  %259 = vst [vmem:[#allocation3 + $0xe0] sm:$0xff] %v255
  %260 = vst [vmem:[#allocation3 + $0xe8] sm:$0xff] %v256
  %261 = vst [vmem:[#allocation3 + $0xf0] sm:$0xff] %v257
  %262 = vst [vmem:[#allocation3 + $0xf8] sm:$0xff] %v258
  %s263 = scalar_lea.vmem %s0, 32
  %v264 = vld [vmem:[%s263] ss:$8 sm:$0xf]
  %265 = vrot.lane.b32.xlu0 %v26, 111
  %v266 = vpop.permute.xlu0 %265
  %267 = vrot.lane.b32.xlu0 %v27, 111
  %v268 = vpop.permute.xlu0 %267
  %269 = vrot.lane.b32.xlu0 %v28, 111
  %v270 = vpop.permute.xlu0 %269
  %271 = vrot.lane.b32.xlu0 %v29, 111
  %v272 = vpop.permute.xlu0 %271
  %vm273 = vcmp.lt.s32.totalorder %v44, 111
  %v274 = vsel %vm273, %v270, %v272
  %v275 = vsel %vm273, %v268, %v270
  %v276 = vsel %vm273, %v266, %v268
  %v277 = vsel %vm273, %v272, %v266
  %v279 = vperm.slane %v264, 0
  %v280 = vperm.slane %v264, 1
  %v281 = vperm.slane %v264, 2
  %v282 = vperm.slane %v264, 3
  %v287 = vmul.f32 %v276, %v279
  %v288 = vmul.f32 %v275, %v280
  %v289 = vmul.f32 %v274, %v281
  %v290 = vmul.f32 %v277, %v282
  %291 = vst [vmem:[#allocation3 + $0x100] sm:$0xff] %v287
  %292 = vst [vmem:[#allocation3 + $0x108] sm:$0xff] %v288
  %293 = vst [vmem:[#allocation3 + $0x110] sm:$0xff] %v289
  %294 = vst [vmem:[#allocation3 + $0x118] sm:$0xff] %v290
  %v295 = vld [vmem:[%s2] sm:$0xff]
  %v296 = vld [vmem:[#allocation3] sm:$0xff]
  %v297 = vld [vmem:[#allocation3 + $0x8] sm:$0xff]
  %v298 = vld [vmem:[#allocation3 + $0x10] sm:$0xff]
  %v299 = vld [vmem:[#allocation3 + $0x18] sm:$0xff]
  %v300 = vld [vmem:[#allocation3 + $0x20] sm:$0xff]
  %v301 = vld [vmem:[#allocation3 + $0x28] sm:$0xff]
  %v302 = vld [vmem:[#allocation3 + $0x30] sm:$0xff]
  %v303 = vld [vmem:[#allocation3 + $0x38] sm:$0xff]
  %v304 = vld [vmem:[#allocation3 + $0x40] sm:$0xff]
  %v305 = vld [vmem:[#allocation3 + $0x48] sm:$0xff]
  %v306 = vld [vmem:[#allocation3 + $0x50] sm:$0xff]
  %v307 = vld [vmem:[#allocation3 + $0x58] sm:$0xff]
  %v308 = vld [vmem:[#allocation3 + $0x60] sm:$0xff]
  %v309 = vld [vmem:[#allocation3 + $0x68] sm:$0xff]
  %v310 = vld [vmem:[#allocation3 + $0x70] sm:$0xff]
  %v311 = vld [vmem:[#allocation3 + $0x78] sm:$0xff]
  %v312 = vld [vmem:[#allocation3 + $0x80] sm:$0xff]
  %v313 = vld [vmem:[#allocation3 + $0x88] sm:$0xff]
  %v314 = vld [vmem:[#allocation3 + $0x90] sm:$0xff]
  %v315 = vld [vmem:[#allocation3 + $0x98] sm:$0xff]
  %v316 = vld [vmem:[#allocation3 + $0xa0] sm:$0xff]
  %v317 = vld [vmem:[#allocation3 + $0xa8] sm:$0xff]
  %v318 = vld [vmem:[#allocation3 + $0xb0] sm:$0xff]
  %v319 = vld [vmem:[#allocation3 + $0xb8] sm:$0xff]
  %v320 = vld [vmem:[#allocation3 + $0xc0] sm:$0xff]
  %v321 = vld [vmem:[#allocation3 + $0xc8] sm:$0xff]
  %v322 = vld [vmem:[#allocation3 + $0xd0] sm:$0xff]
  %v323 = vld [vmem:[#allocation3 + $0xd8] sm:$0xff]
  %v324 = vld [vmem:[#allocation3 + $0xe0] sm:$0xff]
  %v325 = vld [vmem:[#allocation3 + $0xe8] sm:$0xff]
  %v326 = vld [vmem:[#allocation3 + $0xf0] sm:$0xff]
  %v327 = vld [vmem:[#allocation3 + $0xf8] sm:$0xff]
  %v328 = vld [vmem:[#allocation3 + $0x100] sm:$0xff]
  %v329 = vld [vmem:[#allocation3 + $0x108] sm:$0xff]
  %v330 = vld [vmem:[#allocation3 + $0x110] sm:$0xff]
  %v331 = vld [vmem:[#allocation3 + $0x118] sm:$0xff]
  %vm332 = vcmask 588800
  %v334 = vsel %vm332, %v295, 0
  %336 = vmatpush.msra.mxu0 0.0
  %337 = vmatpush.msra.mxu0 0.0
  %338 = vmatpush.msra.mxu0 0.0
  %339 = vmatpush.msra.mxu0 0.0
  %340 = vmatpush.msra.mxu0 0.0
  %341 = vmatpush.msra.mxu0 0.0
  %342 = vmatpush.msra.mxu0 0.0
  %343 = vmatpush.msra.mxu0 %v328
  %344 = vmatpush.msra.mxu0 %v324
  %345 = vmatpush.msra.mxu0 %v320
  %346 = vmatpush.msra.mxu0 %v316
  %347 = vmatpush.msra.mxu0 %v312
  %348 = vmatpush.msra.mxu0 %v308
  %349 = vmatpush.msra.mxu0 %v304
  %350 = vmatpush.msra.mxu0 %v300
  %351 = vmatpush.msra.mxu0 %v296
  %352 = vmatmul.f32.gmra.mxu0 %v334
  %v353 = vpop.f32.mrf.mxu0
  %v354 = vadd.f32 0.0, %v353
  %355 = vdwg.mxu0
  %356 = vmatpush.msra.mxu0 0.0
  %357 = vmatpush.msra.mxu0 0.0
  %358 = vmatpush.msra.mxu0 0.0
  %359 = vmatpush.msra.mxu0 0.0
  %360 = vmatpush.msra.mxu0 0.0
  %361 = vmatpush.msra.mxu0 0.0
  %362 = vmatpush.msra.mxu0 0.0
  %363 = vmatpush.msra.mxu0 %v329
  %364 = vmatpush.msra.mxu0 %v325
  %365 = vmatpush.msra.mxu0 %v321
  %366 = vmatpush.msra.mxu0 %v317
  %367 = vmatpush.msra.mxu0 %v313
  %368 = vmatpush.msra.mxu0 %v309
  %369 = vmatpush.msra.mxu0 %v305
  %370 = vmatpush.msra.mxu0 %v301
  %371 = vmatpush.msra.mxu0 %v297
  %372 = vmatmul.f32.gmra.mxu0 %v334
  %v373 = vpop.f32.mrf.mxu0
  %v374 = vadd.f32 0.0, %v373
  %375 = vdwg.mxu0
  %376 = vmatpush.msra.mxu0 0.0
  %377 = vmatpush.msra.mxu0 0.0
  %378 = vmatpush.msra.mxu0 0.0
  %379 = vmatpush.msra.mxu0 0.0
  %380 = vmatpush.msra.mxu0 0.0
  %381 = vmatpush.msra.mxu0 0.0
  %382 = vmatpush.msra.mxu0 0.0
  %383 = vmatpush.msra.mxu0 %v330
  %384 = vmatpush.msra.mxu0 %v326
  %385 = vmatpush.msra.mxu0 %v322
  %386 = vmatpush.msra.mxu0 %v318
  %387 = vmatpush.msra.mxu0 %v314
  %388 = vmatpush.msra.mxu0 %v310
  %389 = vmatpush.msra.mxu0 %v306
  %390 = vmatpush.msra.mxu0 %v302
  %391 = vmatpush.msra.mxu0 %v298
  %392 = vmatmul.f32.gmra.mxu0 %v334
  %v393 = vpop.f32.mrf.mxu0
  %v394 = vadd.f32 0.0, %v393
  %395 = vdwg.mxu0
  %396 = vmatpush.msra.mxu0 0.0
  %397 = vmatpush.msra.mxu0 0.0
  %398 = vmatpush.msra.mxu0 0.0
  %399 = vmatpush.msra.mxu0 0.0
  %400 = vmatpush.msra.mxu0 0.0
  %401 = vmatpush.msra.mxu0 0.0
  %402 = vmatpush.msra.mxu0 0.0
  %403 = vmatpush.msra.mxu0 %v331
  %404 = vmatpush.msra.mxu0 %v327
  %405 = vmatpush.msra.mxu0 %v323
  %406 = vmatpush.msra.mxu0 %v319
  %407 = vmatpush.msra.mxu0 %v315
  %408 = vmatpush.msra.mxu0 %v311
  %409 = vmatpush.msra.mxu0 %v307
  %410 = vmatpush.msra.mxu0 %v303
  %411 = vmatpush.msra.mxu0 %v299
  %412 = vmatmul.f32.gmra.mxu0 %v334
  %v413 = vpop.f32.mrf.mxu0
  %v414 = vadd.f32 0.0, %v413
  %415 = vdwg.mxu0
  %v416 = vmax.f32 %v354, 0.0
  %v417 = vmax.f32 %v374, 0.0
  %v418 = vmax.f32 %v394, 0.0
  %v419 = vmax.f32 %v414, 0.0
  %420 = vst [vmem:[#allocation2 + $0x20] sm:$0xff] %v416
  %421 = vst [vmem:[#allocation2 + $0x28] sm:$0xff] %v417
  %422 = vst [vmem:[#allocation2 + $0x30] sm:$0xff] %v418
  %423 = vst [vmem:[#allocation2 + $0x38] sm:$0xff] %v419
  %v424 = vld [vmem:[%s0] ss:$8 sm:$0xf]
  %425 = vrot.lane.b32.xlu0 %v416, 17
  %v426 = vpop.permute.xlu0 %425
  %427 = vrot.lane.b32.xlu0 %v417, 17
  %v428 = vpop.permute.xlu0 %427
  %429 = vrot.lane.b32.xlu0 %v418, 17
  %v430 = vpop.permute.xlu0 %429
  %431 = vrot.lane.b32.xlu0 %v419, 17
  %v432 = vpop.permute.xlu0 %431
  %v433 = vsel %vm45, %v430, %v432
  %v434 = vsel %vm45, %v428, %v430
  %v435 = vsel %vm45, %v426, %v428
  %v436 = vsel %vm45, %v432, %v426
  %v438 = vperm.slane %v424, 0
  %v439 = vperm.slane %v424, 1
  %v440 = vperm.slane %v424, 2
  %v441 = vperm.slane %v424, 3
  %v446 = vmul.f32 %v436, %v438
  %v447 = vmul.f32 %v435, %v439
  %v448 = vmul.f32 %v434, %v440
  %v449 = vmul.f32 %v433, %v441
  %450 = vst [vmem:[#allocation3 + $0x120] sm:$0xff] %v446
  %451 = vst [vmem:[#allocation3 + $0x128] sm:$0xff] %v447
  %452 = vst [vmem:[#allocation3 + $0x130] sm:$0xff] %v448
  %453 = vst [vmem:[#allocation3 + $0x138] sm:$0xff] %v449
  %v454 = vld [vmem:[%s67] ss:$8 sm:$0xf]
  %455 = vrot.lane.b32.xlu0 %v416, 16
  %v456 = vpop.permute.xlu0 %455
  %457 = vrot.lane.b32.xlu0 %v417, 16
  %v458 = vpop.permute.xlu0 %457
  %459 = vrot.lane.b32.xlu0 %v418, 16
  %v460 = vpop.permute.xlu0 %459
  %461 = vrot.lane.b32.xlu0 %v419, 16
  %v462 = vpop.permute.xlu0 %461
  %v463 = vsel %vm77, %v460, %v462
  %v464 = vsel %vm77, %v458, %v460
  %v465 = vsel %vm77, %v456, %v458
  %v466 = vsel %vm77, %v462, %v456
  %v468 = vperm.slane %v454, 0
  %v469 = vperm.slane %v454, 1
  %v470 = vperm.slane %v454, 2
  %v471 = vperm.slane %v454, 3
  %v476 = vmul.f32 %v466, %v468
  %v477 = vmul.f32 %v465, %v469
  %v478 = vmul.f32 %v464, %v470
  %v479 = vmul.f32 %v463, %v471
  %480 = vst [vmem:[#allocation3 + $0x140] sm:$0xff] %v476
  %481 = vst [vmem:[#allocation3 + $0x148] sm:$0xff] %v477
  %482 = vst [vmem:[#allocation3 + $0x150] sm:$0xff] %v478
  %483 = vst [vmem:[#allocation3 + $0x158] sm:$0xff] %v479
  %v484 = vld [vmem:[%s99] ss:$8 sm:$0xf]
  %485 = vrot.lane.b32.xlu0 %v416, 15
  %v486 = vpop.permute.xlu0 %485
  %487 = vrot.lane.b32.xlu0 %v417, 15
  %v488 = vpop.permute.xlu0 %487
  %489 = vrot.lane.b32.xlu0 %v418, 15
  %v490 = vpop.permute.xlu0 %489
  %491 = vrot.lane.b32.xlu0 %v419, 15
  %v492 = vpop.permute.xlu0 %491
  %v493 = vsel %vm109, %v490, %v492
  %v494 = vsel %vm109, %v488, %v490
  %v495 = vsel %vm109, %v486, %v488
  %v496 = vsel %vm109, %v492, %v486
  %v498 = vperm.slane %v484, 0
  %v499 = vperm.slane %v484, 1
  %v500 = vperm.slane %v484, 2
  %v501 = vperm.slane %v484, 3
  %v506 = vmul.f32 %v496, %v498
  %v507 = vmul.f32 %v495, %v499
  %v508 = vmul.f32 %v494, %v500
  %v509 = vmul.f32 %v493, %v501
  %510 = vst [vmem:[#allocation3 + $0x160] sm:$0xff] %v506
  %511 = vst [vmem:[#allocation3 + $0x168] sm:$0xff] %v507
  %512 = vst [vmem:[#allocation3 + $0x170] sm:$0xff] %v508
  %513 = vst [vmem:[#allocation3 + $0x178] sm:$0xff] %v509
  %v514 = vld [vmem:[%s131] ss:$8 sm:$0xf]
  %515 = vrot.lane.b32.xlu0 %v416, 1
  %v516 = vpop.permute.xlu0 %515
  %517 = vrot.lane.b32.xlu0 %v417, 1
  %v518 = vpop.permute.xlu0 %517
  %519 = vrot.lane.b32.xlu0 %v418, 1
  %v520 = vpop.permute.xlu0 %519
  %521 = vrot.lane.b32.xlu0 %v419, 1
  %v522 = vpop.permute.xlu0 %521
  %v523 = vsel %vm141, %v520, %v522
  %v524 = vsel %vm141, %v518, %v520
  %v525 = vsel %vm141, %v516, %v518
  %v526 = vsel %vm141, %v522, %v516
  %v528 = vperm.slane %v514, 0
  %v529 = vperm.slane %v514, 1
  %v530 = vperm.slane %v514, 2
  %v531 = vperm.slane %v514, 3
  %v536 = vmul.f32 %v526, %v528
  %v537 = vmul.f32 %v525, %v529
  %v538 = vmul.f32 %v524, %v530
  %v539 = vmul.f32 %v523, %v531
  %540 = vst [vmem:[#allocation3 + $0x180] sm:$0xff] %v536
  %541 = vst [vmem:[#allocation3 + $0x188] sm:$0xff] %v537
  %542 = vst [vmem:[#allocation3 + $0x190] sm:$0xff] %v538
  %543 = vst [vmem:[#allocation3 + $0x198] sm:$0xff] %v539
  %544 = vst [vmem:[#allocation3 + $0x1a0] sm:$0xff] %v416
  %545 = vst [vmem:[#allocation3 + $0x1a8] sm:$0xff] %v417
  %546 = vst [vmem:[#allocation3 + $0x1b0] sm:$0xff] %v418
  %547 = vst [vmem:[#allocation3 + $0x1b8] sm:$0xff] %v419
  %v548 = vld [vmem:[%s167] ss:$8 sm:$0xf]
  %549 = vrot.lane.b32.xlu0 %v416, 127
  %v550 = vpop.permute.xlu0 %549
  %551 = vrot.lane.b32.xlu0 %v417, 127
  %v552 = vpop.permute.xlu0 %551
  %553 = vrot.lane.b32.xlu0 %v418, 127
  %v554 = vpop.permute.xlu0 %553
  %555 = vrot.lane.b32.xlu0 %v419, 127
  %v556 = vpop.permute.xlu0 %555
  %v557 = vsel %vm177, %v554, %v556
  %v558 = vsel %vm177, %v552, %v554
  %v559 = vsel %vm177, %v550, %v552
  %v560 = vsel %vm177, %v556, %v550
  %v562 = vperm.slane %v548, 0
  %v563 = vperm.slane %v548, 1
  %v564 = vperm.slane %v548, 2
  %v565 = vperm.slane %v548, 3
  %v570 = vmul.f32 %v559, %v562
  %v571 = vmul.f32 %v558, %v563
  %v572 = vmul.f32 %v557, %v564
  %v573 = vmul.f32 %v560, %v565
  %574 = vst [vmem:[#allocation3 + $0x1c0] sm:$0xff] %v570
  %575 = vst [vmem:[#allocation3 + $0x1c8] sm:$0xff] %v571
  %576 = vst [vmem:[#allocation3 + $0x1d0] sm:$0xff] %v572
  %577 = vst [vmem:[#allocation3 + $0x1d8] sm:$0xff] %v573
  %v578 = vld [vmem:[%s199] ss:$8 sm:$0xf]
  %579 = vrot.lane.b32.xlu0 %v416, 113
  %v580 = vpop.permute.xlu0 %579
  %581 = vrot.lane.b32.xlu0 %v417, 113
  %v582 = vpop.permute.xlu0 %581
  %583 = vrot.lane.b32.xlu0 %v418, 113
  %v584 = vpop.permute.xlu0 %583
  %585 = vrot.lane.b32.xlu0 %v419, 113
  %v586 = vpop.permute.xlu0 %585
  %v587 = vsel %vm209, %v584, %v586
  %v588 = vsel %vm209, %v582, %v584
  %v589 = vsel %vm209, %v580, %v582
  %v590 = vsel %vm209, %v586, %v580
  %v592 = vperm.slane %v578, 0
  %v593 = vperm.slane %v578, 1
  %v594 = vperm.slane %v578, 2
  %v595 = vperm.slane %v578, 3
  %v600 = vmul.f32 %v589, %v592
  %v601 = vmul.f32 %v588, %v593
  %v602 = vmul.f32 %v587, %v594
  %v603 = vmul.f32 %v590, %v595
  %604 = vst [vmem:[#allocation3 + $0x1e0] sm:$0xff] %v600
  %605 = vst [vmem:[#allocation3 + $0x1e8] sm:$0xff] %v601
  %606 = vst [vmem:[#allocation3 + $0x1f0] sm:$0xff] %v602
  %607 = vst [vmem:[#allocation3 + $0x1f8] sm:$0xff] %v603
  %v608 = vld [vmem:[%s231] ss:$8 sm:$0xf]
  %609 = vrot.lane.b32.xlu0 %v416, 112
  %v610 = vpop.permute.xlu0 %609
  %611 = vrot.lane.b32.xlu0 %v417, 112
  %v612 = vpop.permute.xlu0 %611
  %613 = vrot.lane.b32.xlu0 %v418, 112
  %v614 = vpop.permute.xlu0 %613
  %615 = vrot.lane.b32.xlu0 %v419, 112
  %v616 = vpop.permute.xlu0 %615
  %v617 = vsel %vm241, %v614, %v616
  %v618 = vsel %vm241, %v612, %v614
  %v619 = vsel %vm241, %v610, %v612
  %v620 = vsel %vm241, %v616, %v610
  %v622 = vperm.slane %v608, 0
  %v623 = vperm.slane %v608, 1
  %v624 = vperm.slane %v608, 2
  %v625 = vperm.slane %v608, 3
  %v630 = vmul.f32 %v619, %v622
  %v631 = vmul.f32 %v618, %v623
  %v632 = vmul.f32 %v617, %v624
  %v633 = vmul.f32 %v620, %v625
  %634 = vst [vmem:[#allocation3 + $0x200] sm:$0xff] %v630
  %635 = vst [vmem:[#allocation3 + $0x208] sm:$0xff] %v631
  %636 = vst [vmem:[#allocation3 + $0x210] sm:$0xff] %v632
  %637 = vst [vmem:[#allocation3 + $0x218] sm:$0xff] %v633
  %v638 = vld [vmem:[%s263] ss:$8 sm:$0xf]
  %639 = vrot.lane.b32.xlu0 %v416, 111
  %v640 = vpop.permute.xlu0 %639
  %641 = vrot.lane.b32.xlu0 %v417, 111
  %v642 = vpop.permute.xlu0 %641
  %643 = vrot.lane.b32.xlu0 %v418, 111
  %v644 = vpop.permute.xlu0 %643
  %645 = vrot.lane.b32.xlu0 %v419, 111
  %v646 = vpop.permute.xlu0 %645
  %v647 = vsel %vm273, %v644, %v646
  %v648 = vsel %vm273, %v642, %v644
  %v649 = vsel %vm273, %v640, %v642
  %v650 = vsel %vm273, %v646, %v640
  %v652 = vperm.slane %v638, 0
  %v653 = vperm.slane %v638, 1
  %v654 = vperm.slane %v638, 2
  %v655 = vperm.slane %v638, 3
  %v660 = vmul.f32 %v649, %v652
  %v661 = vmul.f32 %v648, %v653
  %v662 = vmul.f32 %v647, %v654
  %v663 = vmul.f32 %v650, %v655
  %664 = vst [vmem:[#allocation3 + $0x220] sm:$0xff] %v660
  %665 = vst [vmem:[#allocation3 + $0x228] sm:$0xff] %v661
  %666 = vst [vmem:[#allocation3 + $0x230] sm:$0xff] %v662
  %667 = vst [vmem:[#allocation3 + $0x238] sm:$0xff] %v663
  %v668 = vld [vmem:[%s3] sm:$0xff]
  %v669 = vld [vmem:[%s3 + $0x8] sm:$0xff]
  %v670 = vld [vmem:[#allocation3] sm:$0xff]
  %v671 = vld [vmem:[#allocation3 + $0x8] sm:$0xff]
  %v672 = vld [vmem:[#allocation3 + $0x10] sm:$0xff]
  %v673 = vld [vmem:[#allocation3 + $0x18] sm:$0xff]
  %v674 = vld [vmem:[#allocation3 + $0x20] sm:$0xff]
  %v675 = vld [vmem:[#allocation3 + $0x28] sm:$0xff]
  %v676 = vld [vmem:[#allocation3 + $0x30] sm:$0xff]
  %v677 = vld [vmem:[#allocation3 + $0x38] sm:$0xff]
  %v678 = vld [vmem:[#allocation3 + $0x40] sm:$0xff]
  %v679 = vld [vmem:[#allocation3 + $0x48] sm:$0xff]
  %v680 = vld [vmem:[#allocation3 + $0x50] sm:$0xff]
  %v681 = vld [vmem:[#allocation3 + $0x58] sm:$0xff]
  %v682 = vld [vmem:[#allocation3 + $0x60] sm:$0xff]
  %v683 = vld [vmem:[#allocation3 + $0x68] sm:$0xff]
  %v684 = vld [vmem:[#allocation3 + $0x70] sm:$0xff]
  %v685 = vld [vmem:[#allocation3 + $0x78] sm:$0xff]
  %v686 = vld [vmem:[#allocation3 + $0x80] sm:$0xff]
  %v687 = vld [vmem:[#allocation3 + $0x88] sm:$0xff]
  %v688 = vld [vmem:[#allocation3 + $0x90] sm:$0xff]
  %v689 = vld [vmem:[#allocation3 + $0x98] sm:$0xff]
  %v690 = vld [vmem:[#allocation3 + $0xa0] sm:$0xff]
  %v691 = vld [vmem:[#allocation3 + $0xa8] sm:$0xff]
  %v692 = vld [vmem:[#allocation3 + $0xb0] sm:$0xff]
  %v693 = vld [vmem:[#allocation3 + $0xb8] sm:$0xff]
  %v694 = vld [vmem:[#allocation3 + $0xc0] sm:$0xff]
  %v695 = vld [vmem:[#allocation3 + $0xc8] sm:$0xff]
  %v696 = vld [vmem:[#allocation3 + $0xd0] sm:$0xff]
  %v697 = vld [vmem:[#allocation3 + $0xd8] sm:$0xff]
  %v698 = vld [vmem:[#allocation3 + $0xe0] sm:$0xff]
  %v699 = vld [vmem:[#allocation3 + $0xe8] sm:$0xff]
  %v700 = vld [vmem:[#allocation3 + $0xf0] sm:$0xff]
  %v701 = vld [vmem:[#allocation3 + $0xf8] sm:$0xff]
  %v702 = vld [vmem:[#allocation3 + $0x100] sm:$0xff]
  %v703 = vld [vmem:[#allocation3 + $0x108] sm:$0xff]
  %v704 = vld [vmem:[#allocation3 + $0x110] sm:$0xff]
  %v705 = vld [vmem:[#allocation3 + $0x118] sm:$0xff]
  %v706 = vld [vmem:[#allocation3 + $0x120] sm:$0xff]
  %v707 = vld [vmem:[#allocation3 + $0x128] sm:$0xff]
  %v708 = vld [vmem:[#allocation3 + $0x130] sm:$0xff]
  %v709 = vld [vmem:[#allocation3 + $0x138] sm:$0xff]
  %v710 = vld [vmem:[#allocation3 + $0x140] sm:$0xff]
  %v711 = vld [vmem:[#allocation3 + $0x148] sm:$0xff]
  %v712 = vld [vmem:[#allocation3 + $0x150] sm:$0xff]
  %v713 = vld [vmem:[#allocation3 + $0x158] sm:$0xff]
  %v714 = vld [vmem:[#allocation3 + $0x160] sm:$0xff]
  %v715 = vld [vmem:[#allocation3 + $0x168] sm:$0xff]
  %v716 = vld [vmem:[#allocation3 + $0x170] sm:$0xff]
  %v717 = vld [vmem:[#allocation3 + $0x178] sm:$0xff]
  %v718 = vld [vmem:[#allocation3 + $0x180] sm:$0xff]
  %v719 = vld [vmem:[#allocation3 + $0x188] sm:$0xff]
  %v720 = vld [vmem:[#allocation3 + $0x190] sm:$0xff]
  %v721 = vld [vmem:[#allocation3 + $0x198] sm:$0xff]
  %v722 = vld [vmem:[#allocation3 + $0x1a0] sm:$0xff]
  %v723 = vld [vmem:[#allocation3 + $0x1a8] sm:$0xff]
  %v724 = vld [vmem:[#allocation3 + $0x1b0] sm:$0xff]
  %v725 = vld [vmem:[#allocation3 + $0x1b8] sm:$0xff]
  %v726 = vld [vmem:[#allocation3 + $0x1c0] sm:$0xff]
  %v727 = vld [vmem:[#allocation3 + $0x1c8] sm:$0xff]
  %v728 = vld [vmem:[#allocation3 + $0x1d0] sm:$0xff]
  %v729 = vld [vmem:[#allocation3 + $0x1d8] sm:$0xff]
  %v730 = vld [vmem:[#allocation3 + $0x1e0] sm:$0xff]
  %v731 = vld [vmem:[#allocation3 + $0x1e8] sm:$0xff]
  %v732 = vld [vmem:[#allocation3 + $0x1f0] sm:$0xff]
  %v733 = vld [vmem:[#allocation3 + $0x1f8] sm:$0xff]
  %v734 = vld [vmem:[#allocation3 + $0x200] sm:$0xff]
  %v735 = vld [vmem:[#allocation3 + $0x208] sm:$0xff]
  %v736 = vld [vmem:[#allocation3 + $0x210] sm:$0xff]
  %v737 = vld [vmem:[#allocation3 + $0x218] sm:$0xff]
  %v738 = vld [vmem:[#allocation3 + $0x220] sm:$0xff]
  %v739 = vld [vmem:[#allocation3 + $0x228] sm:$0xff]
  %v740 = vld [vmem:[#allocation3 + $0x230] sm:$0xff]
  %v741 = vld [vmem:[#allocation3 + $0x238] sm:$0xff]
  %vm742 = vcmask 130048
  %v744 = vsel %vm742, %v669, 0
  %746 = vmatpush.msra.mxu0 %v730
  %747 = vmatpush.msra.mxu0 %v726
  %748 = vmatpush.msra.mxu0 %v722
  %749 = vmatpush.msra.mxu0 %v718
  %750 = vmatpush.msra.mxu0 %v714
  %751 = vmatpush.msra.mxu0 %v710
  %752 = vmatpush.msra.mxu0 %v706
  %753 = vmatpush.msra.mxu0 %v702
  %754 = vmatpush.msra.mxu0 %v698
  %755 = vmatpush.msra.mxu0 %v694
  %756 = vmatpush.msra.mxu0 %v690
  %757 = vmatpush.msra.mxu0 %v686
  %758 = vmatpush.msra.mxu0 %v682
  %759 = vmatpush.msra.mxu0 %v678
  %760 = vmatpush.msra.mxu0 %v674
  %761 = vmatpush.msra.mxu0 %v670
  %762 = vmatmul.f32.gmra.mxu0 %v668
  %v763 = vpop.f32.mrf.mxu0
  %v764 = vadd.f32 0.0, %v763
  %765 = vdwg.mxu0
  %766 = vmatpush.msra.mxu0 0.0
  %767 = vmatpush.msra.mxu0 0.0
  %768 = vmatpush.msra.mxu0 0.0
  %769 = vmatpush.msra.mxu0 0.0
  %770 = vmatpush.msra.mxu0 0.0
  %771 = vmatpush.msra.mxu0 0.0
  %772 = vmatpush.msra.mxu0 0.0
  %773 = vmatpush.msra.mxu0 0.0
  %774 = vmatpush.msra.mxu0 0.0
  %775 = vmatpush.msra.mxu0 0.0
  %776 = vmatpush.msra.mxu0 0.0
  %777 = vmatpush.msra.mxu0 0.0
  %778 = vmatpush.msra.mxu0 0.0
  %779 = vmatpush.msra.mxu0 0.0
  %780 = vmatpush.msra.mxu0 %v738
  %781 = vmatpush.msra.mxu0 %v734
  %782 = vmatmul.f32.gmra.mxu0 %v744
  %v783 = vpop.f32.mrf.mxu0
  %v784 = vadd.f32 %v764, %v783
  %785 = vdwg.mxu0
  %786 = vmatpush.msra.mxu0 %v731
  %787 = vmatpush.msra.mxu0 %v727
  %788 = vmatpush.msra.mxu0 %v723
  %789 = vmatpush.msra.mxu0 %v719
  %790 = vmatpush.msra.mxu0 %v715
  %791 = vmatpush.msra.mxu0 %v711
  %792 = vmatpush.msra.mxu0 %v707
  %793 = vmatpush.msra.mxu0 %v703
  %794 = vmatpush.msra.mxu0 %v699
  %795 = vmatpush.msra.mxu0 %v695
  %796 = vmatpush.msra.mxu0 %v691
  %797 = vmatpush.msra.mxu0 %v687
  %798 = vmatpush.msra.mxu0 %v683
  %799 = vmatpush.msra.mxu0 %v679
  %800 = vmatpush.msra.mxu0 %v675
  %801 = vmatpush.msra.mxu0 %v671
  %802 = vmatmul.f32.gmra.mxu0 %v668
  %v803 = vpop.f32.mrf.mxu0
  %v804 = vadd.f32 0.0, %v803
  %805 = vdwg.mxu0
  %806 = vmatpush.msra.mxu0 0.0
  %807 = vmatpush.msra.mxu0 0.0
  %808 = vmatpush.msra.mxu0 0.0
  %809 = vmatpush.msra.mxu0 0.0
  %810 = vmatpush.msra.mxu0 0.0
  %811 = vmatpush.msra.mxu0 0.0
  %812 = vmatpush.msra.mxu0 0.0
  %813 = vmatpush.msra.mxu0 0.0
  %814 = vmatpush.msra.mxu0 0.0
  %815 = vmatpush.msra.mxu0 0.0
  %816 = vmatpush.msra.mxu0 0.0
  %817 = vmatpush.msra.mxu0 0.0
  %818 = vmatpush.msra.mxu0 0.0
  %819 = vmatpush.msra.mxu0 0.0
  %820 = vmatpush.msra.mxu0 %v739
  %821 = vmatpush.msra.mxu0 %v735
  %822 = vmatmul.f32.gmra.mxu0 %v744
  %v823 = vpop.f32.mrf.mxu0
  %v824 = vadd.f32 %v804, %v823
  %825 = vdwg.mxu0
  %826 = vmatpush.msra.mxu0 %v732
  %827 = vmatpush.msra.mxu0 %v728
  %828 = vmatpush.msra.mxu0 %v724
  %829 = vmatpush.msra.mxu0 %v720
  %830 = vmatpush.msra.mxu0 %v716
  %831 = vmatpush.msra.mxu0 %v712
  %832 = vmatpush.msra.mxu0 %v708
  %833 = vmatpush.msra.mxu0 %v704
  %834 = vmatpush.msra.mxu0 %v700
  %835 = vmatpush.msra.mxu0 %v696
  %836 = vmatpush.msra.mxu0 %v692
  %837 = vmatpush.msra.mxu0 %v688
  %838 = vmatpush.msra.mxu0 %v684
  %839 = vmatpush.msra.mxu0 %v680
  %840 = vmatpush.msra.mxu0 %v676
  %841 = vmatpush.msra.mxu0 %v672
  %842 = vmatmul.f32.gmra.mxu0 %v668
  %v843 = vpop.f32.mrf.mxu0
  %v844 = vadd.f32 0.0, %v843
  %845 = vdwg.mxu0
  %846 = vmatpush.msra.mxu0 0.0
  %847 = vmatpush.msra.mxu0 0.0
  %848 = vmatpush.msra.mxu0 0.0
  %849 = vmatpush.msra.mxu0 0.0
  %850 = vmatpush.msra.mxu0 0.0
  %851 = vmatpush.msra.mxu0 0.0
  %852 = vmatpush.msra.mxu0 0.0
  %853 = vmatpush.msra.mxu0 0.0
  %854 = vmatpush.msra.mxu0 0.0
  %855 = vmatpush.msra.mxu0 0.0
  %856 = vmatpush.msra.mxu0 0.0
  %857 = vmatpush.msra.mxu0 0.0
  %858 = vmatpush.msra.mxu0 0.0
  %859 = vmatpush.msra.mxu0 0.0
  %860 = vmatpush.msra.mxu0 %v740
  %861 = vmatpush.msra.mxu0 %v736
  %862 = vmatmul.f32.gmra.mxu0 %v744
  %v863 = vpop.f32.mrf.mxu0
  %v864 = vadd.f32 %v844, %v863
  %865 = vdwg.mxu0
  %866 = vmatpush.msra.mxu0 %v733
  %867 = vmatpush.msra.mxu0 %v729
  %868 = vmatpush.msra.mxu0 %v725
  %869 = vmatpush.msra.mxu0 %v721
  %870 = vmatpush.msra.mxu0 %v717
  %871 = vmatpush.msra.mxu0 %v713
  %872 = vmatpush.msra.mxu0 %v709
  %873 = vmatpush.msra.mxu0 %v705
  %874 = vmatpush.msra.mxu0 %v701
  %875 = vmatpush.msra.mxu0 %v697
  %876 = vmatpush.msra.mxu0 %v693
  %877 = vmatpush.msra.mxu0 %v689
  %878 = vmatpush.msra.mxu0 %v685
  %879 = vmatpush.msra.mxu0 %v681
  %880 = vmatpush.msra.mxu0 %v677
  %881 = vmatpush.msra.mxu0 %v673
  %882 = vmatmul.f32.gmra.mxu0 %v668
  %v883 = vpop.f32.mrf.mxu0
  %v884 = vadd.f32 0.0, %v883
  %885 = vdwg.mxu0
  %886 = vmatpush.msra.mxu0 0.0
  %887 = vmatpush.msra.mxu0 0.0
  %888 = vmatpush.msra.mxu0 0.0
  %889 = vmatpush.msra.mxu0 0.0
  %890 = vmatpush.msra.mxu0 0.0
  %891 = vmatpush.msra.mxu0 0.0
  %892 = vmatpush.msra.mxu0 0.0
  %893 = vmatpush.msra.mxu0 0.0
  %894 = vmatpush.msra.mxu0 0.0
  %895 = vmatpush.msra.mxu0 0.0
  %896 = vmatpush.msra.mxu0 0.0
  %897 = vmatpush.msra.mxu0 0.0
  %898 = vmatpush.msra.mxu0 0.0
  %899 = vmatpush.msra.mxu0 0.0
  %900 = vmatpush.msra.mxu0 %v741
  %901 = vmatpush.msra.mxu0 %v737
  %902 = vmatmul.f32.gmra.mxu0 %v744
  %v903 = vpop.f32.mrf.mxu0
  %v904 = vadd.f32 %v884, %v903
  %905 = vdwg.mxu0
  %v906 = vmax.f32 %v784, 0.0
  %v907 = vmax.f32 %v824, 0.0
  %v908 = vmax.f32 %v864, 0.0
  %v909 = vmax.f32 %v904, 0.0
  %910 = vst [vmem:[#allocation2 + $0x40] sm:$0xff] %v906
  %911 = vst [vmem:[#allocation2 + $0x48] sm:$0xff] %v907
  %912 = vst [vmem:[#allocation2 + $0x50] sm:$0xff] %v908
  %913 = vst [vmem:[#allocation2 + $0x58] sm:$0xff] %v909
  %v914 = vld [vmem:[%s0] ss:$8 sm:$0xf]
  %915 = vrot.lane.b32.xlu0 %v906, 17
  %v916 = vpop.permute.xlu0 %915
  %917 = vrot.lane.b32.xlu0 %v907, 17
  %v918 = vpop.permute.xlu0 %917
  %919 = vrot.lane.b32.xlu0 %v908, 17
  %v920 = vpop.permute.xlu0 %919
  %921 = vrot.lane.b32.xlu0 %v909, 17
  %v922 = vpop.permute.xlu0 %921
  %v923 = vsel %vm45, %v920, %v922
  %v924 = vsel %vm45, %v918, %v920
  %v925 = vsel %vm45, %v916, %v918
  %v926 = vsel %vm45, %v922, %v916
  %v928 = vperm.slane %v914, 0
  %v929 = vperm.slane %v914, 1
  %v930 = vperm.slane %v914, 2
  %v931 = vperm.slane %v914, 3
  %v936 = vmul.f32 %v926, %v928
  %v937 = vmul.f32 %v925, %v929
  %v938 = vmul.f32 %v924, %v930
  %v939 = vmul.f32 %v923, %v931
  %940 = vst [vmem:[#allocation3 + $0x240] sm:$0xff] %v936
  %941 = vst [vmem:[#allocation3 + $0x248] sm:$0xff] %v937
  %942 = vst [vmem:[#allocation3 + $0x250] sm:$0xff] %v938
  %943 = vst [vmem:[#allocation3 + $0x258] sm:$0xff] %v939
  %v944 = vld [vmem:[%s67] ss:$8 sm:$0xf]
  %945 = vrot.lane.b32.xlu0 %v906, 16
  %v946 = vpop.permute.xlu0 %945
  %947 = vrot.lane.b32.xlu0 %v907, 16
  %v948 = vpop.permute.xlu0 %947
  %949 = vrot.lane.b32.xlu0 %v908, 16
  %v950 = vpop.permute.xlu0 %949
  %951 = vrot.lane.b32.xlu0 %v909, 16
  %v952 = vpop.permute.xlu0 %951
  %v953 = vsel %vm77, %v950, %v952
  %v954 = vsel %vm77, %v948, %v950
  %v955 = vsel %vm77, %v946, %v948
  %v956 = vsel %vm77, %v952, %v946
  %v958 = vperm.slane %v944, 0
  %v959 = vperm.slane %v944, 1
  %v960 = vperm.slane %v944, 2
  %v961 = vperm.slane %v944, 3
  %v966 = vmul.f32 %v956, %v958
  %v967 = vmul.f32 %v955, %v959
  %v968 = vmul.f32 %v954, %v960
  %v969 = vmul.f32 %v953, %v961
  %970 = vst [vmem:[#allocation3 + $0x260] sm:$0xff] %v966
  %971 = vst [vmem:[#allocation3 + $0x268] sm:$0xff] %v967
  %972 = vst [vmem:[#allocation3 + $0x270] sm:$0xff] %v968
  %973 = vst [vmem:[#allocation3 + $0x278] sm:$0xff] %v969
  %v974 = vld [vmem:[%s99] ss:$8 sm:$0xf]
  %975 = vrot.lane.b32.xlu0 %v906, 15
  %v976 = vpop.permute.xlu0 %975
  %977 = vrot.lane.b32.xlu0 %v907, 15
  %v978 = vpop.permute.xlu0 %977
  %979 = vrot.lane.b32.xlu0 %v908, 15
  %v980 = vpop.permute.xlu0 %979
  %981 = vrot.lane.b32.xlu0 %v909, 15
  %v982 = vpop.permute.xlu0 %981
  %v983 = vsel %vm109, %v980, %v982
  %v984 = vsel %vm109, %v978, %v980
  %v985 = vsel %vm109, %v976, %v978
  %v986 = vsel %vm109, %v982, %v976
  %v988 = vperm.slane %v974, 0
  %v989 = vperm.slane %v974, 1
  %v990 = vperm.slane %v974, 2
  %v991 = vperm.slane %v974, 3
  %v996 = vmul.f32 %v986, %v988
  %v997 = vmul.f32 %v985, %v989
  %v998 = vmul.f32 %v984, %v990
  %v999 = vmul.f32 %v983, %v991
  %1000 = vst [vmem:[#allocation3 + $0x280] sm:$0xff] %v996
  %1001 = vst [vmem:[#allocation3 + $0x288] sm:$0xff] %v997
  %1002 = vst [vmem:[#allocation3 + $0x290] sm:$0xff] %v998
  %1003 = vst [vmem:[#allocation3 + $0x298] sm:$0xff] %v999
  %v1004 = vld [vmem:[%s131] ss:$8 sm:$0xf]
  %1005 = vrot.lane.b32.xlu0 %v906, 1
  %v1006 = vpop.permute.xlu0 %1005
  %1007 = vrot.lane.b32.xlu0 %v907, 1
  %v1008 = vpop.permute.xlu0 %1007
  %1009 = vrot.lane.b32.xlu0 %v908, 1
  %v1010 = vpop.permute.xlu0 %1009
  %1011 = vrot.lane.b32.xlu0 %v909, 1
  %v1012 = vpop.permute.xlu0 %1011
  %v1013 = vsel %vm141, %v1010, %v1012
  %v1014 = vsel %vm141, %v1008, %v1010
  %v1015 = vsel %vm141, %v1006, %v1008
  %v1016 = vsel %vm141, %v1012, %v1006
  %v1018 = vperm.slane %v1004, 0
  %v1019 = vperm.slane %v1004, 1
  %v1020 = vperm.slane %v1004, 2
  %v1021 = vperm.slane %v1004, 3
  %v1026 = vmul.f32 %v1016, %v1018
  %v1027 = vmul.f32 %v1015, %v1019
  %v1028 = vmul.f32 %v1014, %v1020
  %v1029 = vmul.f32 %v1013, %v1021
  %1030 = vst [vmem:[#allocation3 + $0x2a0] sm:$0xff] %v1026
  %1031 = vst [vmem:[#allocation3 + $0x2a8] sm:$0xff] %v1027
  %1032 = vst [vmem:[#allocation3 + $0x2b0] sm:$0xff] %v1028
  %1033 = vst [vmem:[#allocation3 + $0x2b8] sm:$0xff] %v1029
  %1034 = vst [vmem:[#allocation3 + $0x2c0] sm:$0xff] %v906
  %1035 = vst [vmem:[#allocation3 + $0x2c8] sm:$0xff] %v907
  %1036 = vst [vmem:[#allocation3 + $0x2d0] sm:$0xff] %v908
  %1037 = vst [vmem:[#allocation3 + $0x2d8] sm:$0xff] %v909
  %v1038 = vld [vmem:[%s167] ss:$8 sm:$0xf]
  %1039 = vrot.lane.b32.xlu0 %v906, 127
  %v1040 = vpop.permute.xlu0 %1039
  %1041 = vrot.lane.b32.xlu0 %v907, 127
  %v1042 = vpop.permute.xlu0 %1041
  %1043 = vrot.lane.b32.xlu0 %v908, 127
  %v1044 = vpop.permute.xlu0 %1043
  %1045 = vrot.lane.b32.xlu0 %v909, 127
  %v1046 = vpop.permute.xlu0 %1045
  %v1047 = vsel %vm177, %v1044, %v1046
  %v1048 = vsel %vm177, %v1042, %v1044
  %v1049 = vsel %vm177, %v1040, %v1042
  %v1050 = vsel %vm177, %v1046, %v1040
  %v1052 = vperm.slane %v1038, 0
  %v1053 = vperm.slane %v1038, 1
  %v1054 = vperm.slane %v1038, 2
  %v1055 = vperm.slane %v1038, 3
  %v1060 = vmul.f32 %v1049, %v1052
  %v1061 = vmul.f32 %v1048, %v1053
  %v1062 = vmul.f32 %v1047, %v1054
  %v1063 = vmul.f32 %v1050, %v1055
  %1064 = vst [vmem:[#allocation3 + $0x2e0] sm:$0xff] %v1060
  %1065 = vst [vmem:[#allocation3 + $0x2e8] sm:$0xff] %v1061
  %1066 = vst [vmem:[#allocation3 + $0x2f0] sm:$0xff] %v1062
  %1067 = vst [vmem:[#allocation3 + $0x2f8] sm:$0xff] %v1063
  %v1068 = vld [vmem:[%s199] ss:$8 sm:$0xf]
  %1069 = vrot.lane.b32.xlu0 %v906, 113
  %v1070 = vpop.permute.xlu0 %1069
  %1071 = vrot.lane.b32.xlu0 %v907, 113
  %v1072 = vpop.permute.xlu0 %1071
  %1073 = vrot.lane.b32.xlu0 %v908, 113
  %v1074 = vpop.permute.xlu0 %1073
  %1075 = vrot.lane.b32.xlu0 %v909, 113
  %v1076 = vpop.permute.xlu0 %1075
  %v1077 = vsel %vm209, %v1074, %v1076
  %v1078 = vsel %vm209, %v1072, %v1074
  %v1079 = vsel %vm209, %v1070, %v1072
  %v1080 = vsel %vm209, %v1076, %v1070
  %v1082 = vperm.slane %v1068, 0
  %v1083 = vperm.slane %v1068, 1
  %v1084 = vperm.slane %v1068, 2
  %v1085 = vperm.slane %v1068, 3
  %v1090 = vmul.f32 %v1079, %v1082
  %v1091 = vmul.f32 %v1078, %v1083
  %v1092 = vmul.f32 %v1077, %v1084
  %v1093 = vmul.f32 %v1080, %v1085
  %1094 = vst [vmem:[#allocation3 + $0x300] sm:$0xff] %v1090
  %1095 = vst [vmem:[#allocation3 + $0x308] sm:$0xff] %v1091
  %1096 = vst [vmem:[#allocation3 + $0x310] sm:$0xff] %v1092
  %1097 = vst [vmem:[#allocation3 + $0x318] sm:$0xff] %v1093
  %v1098 = vld [vmem:[%s231] ss:$8 sm:$0xf]
  %1099 = vrot.lane.b32.xlu0 %v906, 112
  %v1100 = vpop.permute.xlu0 %1099
  %1101 = vrot.lane.b32.xlu0 %v907, 112
  %v1102 = vpop.permute.xlu0 %1101
  %1103 = vrot.lane.b32.xlu0 %v908, 112
  %v1104 = vpop.permute.xlu0 %1103
  %1105 = vrot.lane.b32.xlu0 %v909, 112
  %v1106 = vpop.permute.xlu0 %1105
  %v1107 = vsel %vm241, %v1104, %v1106
  %v1108 = vsel %vm241, %v1102, %v1104
  %v1109 = vsel %vm241, %v1100, %v1102
  %v1110 = vsel %vm241, %v1106, %v1100
  %v1112 = vperm.slane %v1098, 0
  %v1113 = vperm.slane %v1098, 1
  %v1114 = vperm.slane %v1098, 2
  %v1115 = vperm.slane %v1098, 3
  %v1120 = vmul.f32 %v1109, %v1112
  %v1121 = vmul.f32 %v1108, %v1113
  %v1122 = vmul.f32 %v1107, %v1114
  %v1123 = vmul.f32 %v1110, %v1115
  %1124 = vst [vmem:[#allocation3 + $0x320] sm:$0xff] %v1120
  %1125 = vst [vmem:[#allocation3 + $0x328] sm:$0xff] %v1121
  %1126 = vst [vmem:[#allocation3 + $0x330] sm:$0xff] %v1122
  %1127 = vst [vmem:[#allocation3 + $0x338] sm:$0xff] %v1123
  %v1128 = vld [vmem:[%s263] ss:$8 sm:$0xf]
  %1129 = vrot.lane.b32.xlu0 %v906, 111
  %v1130 = vpop.permute.xlu0 %1129
  %1131 = vrot.lane.b32.xlu0 %v907, 111
  %v1132 = vpop.permute.xlu0 %1131
  %1133 = vrot.lane.b32.xlu0 %v908, 111
  %v1134 = vpop.permute.xlu0 %1133
  %1135 = vrot.lane.b32.xlu0 %v909, 111
  %v1136 = vpop.permute.xlu0 %1135
  %v1137 = vsel %vm273, %v1134, %v1136
  %v1138 = vsel %vm273, %v1132, %v1134
  %v1139 = vsel %vm273, %v1130, %v1132
  %v1140 = vsel %vm273, %v1136, %v1130
  %v1142 = vperm.slane %v1128, 0
  %v1143 = vperm.slane %v1128, 1
  %v1144 = vperm.slane %v1128, 2
  %v1145 = vperm.slane %v1128, 3
  %v1150 = vmul.f32 %v1139, %v1142
  %v1151 = vmul.f32 %v1138, %v1143
  %v1152 = vmul.f32 %v1137, %v1144
  %v1153 = vmul.f32 %v1140, %v1145
  %1154 = vst [vmem:[#allocation3 + $0x340] sm:$0xff] %v1150
  %1155 = vst [vmem:[#allocation3 + $0x348] sm:$0xff] %v1151
  %1156 = vst [vmem:[#allocation3 + $0x350] sm:$0xff] %v1152
  %1157 = vst [vmem:[#allocation3 + $0x358] sm:$0xff] %v1153
  %v1158 = vld [vmem:[%s4] sm:$0xff]
  %v1159 = vld [vmem:[%s4 + $0x8] sm:$0xff]
  %v1160 = vld [vmem:[#allocation3] sm:$0xff]
  %v1161 = vld [vmem:[#allocation3 + $0x8] sm:$0xff]
  %v1162 = vld [vmem:[#allocation3 + $0x10] sm:$0xff]
  %v1163 = vld [vmem:[#allocation3 + $0x18] sm:$0xff]
  %v1164 = vld [vmem:[#allocation3 + $0x20] sm:$0xff]
  %v1165 = vld [vmem:[#allocation3 + $0x28] sm:$0xff]
  %v1166 = vld [vmem:[#allocation3 + $0x30] sm:$0xff]
  %v1167 = vld [vmem:[#allocation3 + $0x38] sm:$0xff]
  %v1168 = vld [vmem:[#allocation3 + $0x40] sm:$0xff]
  %v1169 = vld [vmem:[#allocation3 + $0x48] sm:$0xff]
  %v1170 = vld [vmem:[#allocation3 + $0x50] sm:$0xff]
  %v1171 = vld [vmem:[#allocation3 + $0x58] sm:$0xff]
  %v1172 = vld [vmem:[#allocation3 + $0x60] sm:$0xff]
  %v1173 = vld [vmem:[#allocation3 + $0x68] sm:$0xff]
  %v1174 = vld [vmem:[#allocation3 + $0x70] sm:$0xff]
  %v1175 = vld [vmem:[#allocation3 + $0x78] sm:$0xff]
  %v1176 = vld [vmem:[#allocation3 + $0x80] sm:$0xff]
  %v1177 = vld [vmem:[#allocation3 + $0x88] sm:$0xff]
  %v1178 = vld [vmem:[#allocation3 + $0x90] sm:$0xff]
  %v1179 = vld [vmem:[#allocation3 + $0x98] sm:$0xff]
  %v1180 = vld [vmem:[#allocation3 + $0xa0] sm:$0xff]
  %v1181 = vld [vmem:[#allocation3 + $0xa8] sm:$0xff]
  %v1182 = vld [vmem:[#allocation3 + $0xb0] sm:$0xff]
  %v1183 = vld [vmem:[#allocation3 + $0xb8] sm:$0xff]
  %v1184 = vld [vmem:[#allocation3 + $0xc0] sm:$0xff]
  %v1185 = vld [vmem:[#allocation3 + $0xc8] sm:$0xff]
  %v1186 = vld [vmem:[#allocation3 + $0xd0] sm:$0xff]
  %v1187 = vld [vmem:[#allocation3 + $0xd8] sm:$0xff]
  %v1188 = vld [vmem:[#allocation3 + $0xe0] sm:$0xff]
  %v1189 = vld [vmem:[#allocation3 + $0xe8] sm:$0xff]
  %v1190 = vld [vmem:[#allocation3 + $0xf0] sm:$0xff]
  %v1191 = vld [vmem:[#allocation3 + $0xf8] sm:$0xff]
  %v1192 = vld [vmem:[#allocation3 + $0x100] sm:$0xff]
  %v1193 = vld [vmem:[#allocation3 + $0x108] sm:$0xff]
  %v1194 = vld [vmem:[#allocation3 + $0x110] sm:$0xff]
  %v1195 = vld [vmem:[#allocation3 + $0x118] sm:$0xff]
  %v1196 = vld [vmem:[#allocation3 + $0x120] sm:$0xff]
  %v1197 = vld [vmem:[#allocation3 + $0x128] sm:$0xff]
  %v1198 = vld [vmem:[#allocation3 + $0x130] sm:$0xff]
  %v1199 = vld [vmem:[#allocation3 + $0x138] sm:$0xff]
  %v1200 = vld [vmem:[#allocation3 + $0x140] sm:$0xff]
  %v1201 = vld [vmem:[#allocation3 + $0x148] sm:$0xff]
  %v1202 = vld [vmem:[#allocation3 + $0x150] sm:$0xff]
  %v1203 = vld [vmem:[#allocation3 + $0x158] sm:$0xff]
  %v1204 = vld [vmem:[#allocation3 + $0x160] sm:$0xff]
  %v1205 = vld [vmem:[#allocation3 + $0x168] sm:$0xff]
  %v1206 = vld [vmem:[#allocation3 + $0x170] sm:$0xff]
  %v1207 = vld [vmem:[#allocation3 + $0x178] sm:$0xff]
  %v1208 = vld [vmem:[#allocation3 + $0x180] sm:$0xff]
  %v1209 = vld [vmem:[#allocation3 + $0x188] sm:$0xff]
  %v1210 = vld [vmem:[#allocation3 + $0x190] sm:$0xff]
  %v1211 = vld [vmem:[#allocation3 + $0x198] sm:$0xff]
  %v1212 = vld [vmem:[#allocation3 + $0x1a0] sm:$0xff]
  %v1213 = vld [vmem:[#allocation3 + $0x1a8] sm:$0xff]
  %v1214 = vld [vmem:[#allocation3 + $0x1b0] sm:$0xff]
  %v1215 = vld [vmem:[#allocation3 + $0x1b8] sm:$0xff]
  %v1216 = vld [vmem:[#allocation3 + $0x1c0] sm:$0xff]
  %v1217 = vld [vmem:[#allocation3 + $0x1c8] sm:$0xff]
  %v1218 = vld [vmem:[#allocation3 + $0x1d0] sm:$0xff]
  %v1219 = vld [vmem:[#allocation3 + $0x1d8] sm:$0xff]
  %v1220 = vld [vmem:[#allocation3 + $0x1e0] sm:$0xff]
  %v1221 = vld [vmem:[#allocation3 + $0x1e8] sm:$0xff]
  %v1222 = vld [vmem:[#allocation3 + $0x1f0] sm:$0xff]
  %v1223 = vld [vmem:[#allocation3 + $0x1f8] sm:$0xff]
  %v1224 = vld [vmem:[#allocation3 + $0x200] sm:$0xff]
  %v1225 = vld [vmem:[#allocation3 + $0x208] sm:$0xff]
  %v1226 = vld [vmem:[#allocation3 + $0x210] sm:$0xff]
  %v1227 = vld [vmem:[#allocation3 + $0x218] sm:$0xff]
  %v1228 = vld [vmem:[#allocation3 + $0x220] sm:$0xff]
  %v1229 = vld [vmem:[#allocation3 + $0x228] sm:$0xff]
  %v1230 = vld [vmem:[#allocation3 + $0x230] sm:$0xff]
  %v1231 = vld [vmem:[#allocation3 + $0x238] sm:$0xff]
  %v1232 = vld [vmem:[#allocation3 + $0x240] sm:$0xff]
  %v1233 = vld [vmem:[#allocation3 + $0x248] sm:$0xff]
  %v1234 = vld [vmem:[#allocation3 + $0x250] sm:$0xff]
  %v1235 = vld [vmem:[#allocation3 + $0x258] sm:$0xff]
  %v1236 = vld [vmem:[#allocation3 + $0x260] sm:$0xff]
  %v1237 = vld [vmem:[#allocation3 + $0x268] sm:$0xff]
  %v1238 = vld [vmem:[#allocation3 + $0x270] sm:$0xff]
  %v1239 = vld [vmem:[#allocation3 + $0x278] sm:$0xff]
  %v1240 = vld [vmem:[#allocation3 + $0x280] sm:$0xff]
  %v1241 = vld [vmem:[#allocation3 + $0x288] sm:$0xff]
  %v1242 = vld [vmem:[#allocation3 + $0x290] sm:$0xff]
  %v1243 = vld [vmem:[#allocation3 + $0x298] sm:$0xff]
  %v1244 = vld [vmem:[#allocation3 + $0x2a0] sm:$0xff]
  %v1245 = vld [vmem:[#allocation3 + $0x2a8] sm:$0xff]
  %v1246 = vld [vmem:[#allocation3 + $0x2b0] sm:$0xff]
  %v1247 = vld [vmem:[#allocation3 + $0x2b8] sm:$0xff]
  %v1248 = vld [vmem:[#allocation3 + $0x2c0] sm:$0xff]
  %v1249 = vld [vmem:[#allocation3 + $0x2c8] sm:$0xff]
  %v1250 = vld [vmem:[#allocation3 + $0x2d0] sm:$0xff]
  %v1251 = vld [vmem:[#allocation3 + $0x2d8] sm:$0xff]
  %v1252 = vld [vmem:[#allocation3 + $0x2e0] sm:$0xff]
  %v1253 = vld [vmem:[#allocation3 + $0x2e8] sm:$0xff]
  %v1254 = vld [vmem:[#allocation3 + $0x2f0] sm:$0xff]
  %v1255 = vld [vmem:[#allocation3 + $0x2f8] sm:$0xff]
  %v1256 = vld [vmem:[#allocation3 + $0x300] sm:$0xff]
  %v1257 = vld [vmem:[#allocation3 + $0x308] sm:$0xff]
  %v1258 = vld [vmem:[#allocation3 + $0x310] sm:$0xff]
  %v1259 = vld [vmem:[#allocation3 + $0x318] sm:$0xff]
  %v1260 = vld [vmem:[#allocation3 + $0x320] sm:$0xff]
  %v1261 = vld [vmem:[#allocation3 + $0x328] sm:$0xff]
  %v1262 = vld [vmem:[#allocation3 + $0x330] sm:$0xff]
  %v1263 = vld [vmem:[#allocation3 + $0x338] sm:$0xff]
  %v1264 = vld [vmem:[#allocation3 + $0x340] sm:$0xff]
  %v1265 = vld [vmem:[#allocation3 + $0x348] sm:$0xff]
  %v1266 = vld [vmem:[#allocation3 + $0x350] sm:$0xff]
  %v1267 = vld [vmem:[#allocation3 + $0x358] sm:$0xff]
  %vm1268 = vcmask 719872
  %v1270 = vsel %vm1268, %v1159, 0
  %1272 = vmatpush.msra.mxu0 %v1220
  %1273 = vmatpush.msra.mxu0 %v1216
  %1274 = vmatpush.msra.mxu0 %v1212
  %1275 = vmatpush.msra.mxu0 %v1208
  %1276 = vmatpush.msra.mxu0 %v1204
  %1277 = vmatpush.msra.mxu0 %v1200
  %1278 = vmatpush.msra.mxu0 %v1196
  %1279 = vmatpush.msra.mxu0 %v1192
  %1280 = vmatpush.msra.mxu0 %v1188
  %1281 = vmatpush.msra.mxu0 %v1184
  %1282 = vmatpush.msra.mxu0 %v1180
  %1283 = vmatpush.msra.mxu0 %v1176
  %1284 = vmatpush.msra.mxu0 %v1172
  %1285 = vmatpush.msra.mxu0 %v1168
  %1286 = vmatpush.msra.mxu0 %v1164
  %1287 = vmatpush.msra.mxu0 %v1160
  %1288 = vmatmul.f32.gmra.mxu0 %v1158
  %v1289 = vpop.f32.mrf.mxu0
  %v1290 = vadd.f32 0.0, %v1289
  %1291 = vdwg.mxu0
  %1292 = vmatpush.msra.mxu0 0.0
  %1293 = vmatpush.msra.mxu0 0.0
  %1294 = vmatpush.msra.mxu0 0.0
  %1295 = vmatpush.msra.mxu0 0.0
  %1296 = vmatpush.msra.mxu0 0.0
  %1297 = vmatpush.msra.mxu0 %v1264
  %1298 = vmatpush.msra.mxu0 %v1260
  %1299 = vmatpush.msra.mxu0 %v1256
  %1300 = vmatpush.msra.mxu0 %v1252
  %1301 = vmatpush.msra.mxu0 %v1248
  %1302 = vmatpush.msra.mxu0 %v1244
  %1303 = vmatpush.msra.mxu0 %v1240
  %1304 = vmatpush.msra.mxu0 %v1236
  %1305 = vmatpush.msra.mxu0 %v1232
  %1306 = vmatpush.msra.mxu0 %v1228
  %1307 = vmatpush.msra.mxu0 %v1224
  %1308 = vmatmul.f32.gmra.mxu0 %v1270
  %v1309 = vpop.f32.mrf.mxu0
  %v1310 = vadd.f32 %v1290, %v1309
  %1311 = vdwg.mxu0
  %1312 = vmatpush.msra.mxu0 %v1221
  %1313 = vmatpush.msra.mxu0 %v1217
  %1314 = vmatpush.msra.mxu0 %v1213
  %1315 = vmatpush.msra.mxu0 %v1209
  %1316 = vmatpush.msra.mxu0 %v1205
  %1317 = vmatpush.msra.mxu0 %v1201
  %1318 = vmatpush.msra.mxu0 %v1197
  %1319 = vmatpush.msra.mxu0 %v1193
  %1320 = vmatpush.msra.mxu0 %v1189
  %1321 = vmatpush.msra.mxu0 %v1185
  %1322 = vmatpush.msra.mxu0 %v1181
  %1323 = vmatpush.msra.mxu0 %v1177
  %1324 = vmatpush.msra.mxu0 %v1173
  %1325 = vmatpush.msra.mxu0 %v1169
  %1326 = vmatpush.msra.mxu0 %v1165
  %1327 = vmatpush.msra.mxu0 %v1161
  %1328 = vmatmul.f32.gmra.mxu0 %v1158
  %v1329 = vpop.f32.mrf.mxu0
  %v1330 = vadd.f32 0.0, %v1329
  %1331 = vdwg.mxu0
  %1332 = vmatpush.msra.mxu0 0.0
  %1333 = vmatpush.msra.mxu0 0.0
  %1334 = vmatpush.msra.mxu0 0.0
  %1335 = vmatpush.msra.mxu0 0.0
  %1336 = vmatpush.msra.mxu0 0.0
  %1337 = vmatpush.msra.mxu0 %v1265
  %1338 = vmatpush.msra.mxu0 %v1261
  %1339 = vmatpush.msra.mxu0 %v1257
  %1340 = vmatpush.msra.mxu0 %v1253
  %1341 = vmatpush.msra.mxu0 %v1249
  %1342 = vmatpush.msra.mxu0 %v1245
  %1343 = vmatpush.msra.mxu0 %v1241
  %1344 = vmatpush.msra.mxu0 %v1237
  %1345 = vmatpush.msra.mxu0 %v1233
  %1346 = vmatpush.msra.mxu0 %v1229
  %1347 = vmatpush.msra.mxu0 %v1225
  %1348 = vmatmul.f32.gmra.mxu0 %v1270
  %v1349 = vpop.f32.mrf.mxu0
  %v1350 = vadd.f32 %v1330, %v1349
  %1351 = vdwg.mxu0
  %1352 = vmatpush.msra.mxu0 %v1222
  %1353 = vmatpush.msra.mxu0 %v1218
  %1354 = vmatpush.msra.mxu0 %v1214
  %1355 = vmatpush.msra.mxu0 %v1210
  %1356 = vmatpush.msra.mxu0 %v1206
  %1357 = vmatpush.msra.mxu0 %v1202
  %1358 = vmatpush.msra.mxu0 %v1198
  %1359 = vmatpush.msra.mxu0 %v1194
  %1360 = vmatpush.msra.mxu0 %v1190
  %1361 = vmatpush.msra.mxu0 %v1186
  %1362 = vmatpush.msra.mxu0 %v1182
  %1363 = vmatpush.msra.mxu0 %v1178
  %1364 = vmatpush.msra.mxu0 %v1174
  %1365 = vmatpush.msra.mxu0 %v1170
  %1366 = vmatpush.msra.mxu0 %v1166
  %1367 = vmatpush.msra.mxu0 %v1162
  %1368 = vmatmul.f32.gmra.mxu0 %v1158
  %v1369 = vpop.f32.mrf.mxu0
  %v1370 = vadd.f32 0.0, %v1369
  %1371 = vdwg.mxu0
  %1372 = vmatpush.msra.mxu0 0.0
  %1373 = vmatpush.msra.mxu0 0.0
  %1374 = vmatpush.msra.mxu0 0.0
  %1375 = vmatpush.msra.mxu0 0.0
  %1376 = vmatpush.msra.mxu0 0.0
  %1377 = vmatpush.msra.mxu0 %v1266
  %1378 = vmatpush.msra.mxu0 %v1262
  %1379 = vmatpush.msra.mxu0 %v1258
  %1380 = vmatpush.msra.mxu0 %v1254
  %1381 = vmatpush.msra.mxu0 %v1250
  %1382 = vmatpush.msra.mxu0 %v1246
  %1383 = vmatpush.msra.mxu0 %v1242
  %1384 = vmatpush.msra.mxu0 %v1238
  %1385 = vmatpush.msra.mxu0 %v1234
  %1386 = vmatpush.msra.mxu0 %v1230
  %1387 = vmatpush.msra.mxu0 %v1226
  %1388 = vmatmul.f32.gmra.mxu0 %v1270
  %v1389 = vpop.f32.mrf.mxu0
  %v1390 = vadd.f32 %v1370, %v1389
  %1391 = vdwg.mxu0
  %1392 = vmatpush.msra.mxu0 %v1223
  %1393 = vmatpush.msra.mxu0 %v1219
  %1394 = vmatpush.msra.mxu0 %v1215
  %1395 = vmatpush.msra.mxu0 %v1211
  %1396 = vmatpush.msra.mxu0 %v1207
  %1397 = vmatpush.msra.mxu0 %v1203
  %1398 = vmatpush.msra.mxu0 %v1199
  %1399 = vmatpush.msra.mxu0 %v1195
  %1400 = vmatpush.msra.mxu0 %v1191
  %1401 = vmatpush.msra.mxu0 %v1187
  %1402 = vmatpush.msra.mxu0 %v1183
  %1403 = vmatpush.msra.mxu0 %v1179
  %1404 = vmatpush.msra.mxu0 %v1175
  %1405 = vmatpush.msra.mxu0 %v1171
  %1406 = vmatpush.msra.mxu0 %v1167
  %1407 = vmatpush.msra.mxu0 %v1163
  %1408 = vmatmul.f32.gmra.mxu0 %v1158
  %v1409 = vpop.f32.mrf.mxu0
  %v1410 = vadd.f32 0.0, %v1409
  %1411 = vdwg.mxu0
  %1412 = vmatpush.msra.mxu0 0.0
  %1413 = vmatpush.msra.mxu0 0.0
  %1414 = vmatpush.msra.mxu0 0.0
  %1415 = vmatpush.msra.mxu0 0.0
  %1416 = vmatpush.msra.mxu0 0.0
  %1417 = vmatpush.msra.mxu0 %v1267
  %1418 = vmatpush.msra.mxu0 %v1263
  %1419 = vmatpush.msra.mxu0 %v1259
  %1420 = vmatpush.msra.mxu0 %v1255
  %1421 = vmatpush.msra.mxu0 %v1251
  %1422 = vmatpush.msra.mxu0 %v1247
  %1423 = vmatpush.msra.mxu0 %v1243
  %1424 = vmatpush.msra.mxu0 %v1239
  %1425 = vmatpush.msra.mxu0 %v1235
  %1426 = vmatpush.msra.mxu0 %v1231
  %1427 = vmatpush.msra.mxu0 %v1227
  %1428 = vmatmul.f32.gmra.mxu0 %v1270
  %v1429 = vpop.f32.mrf.mxu0
  %v1430 = vadd.f32 %v1410, %v1429
  %1431 = vdwg.mxu0
  %v1432 = vmax.f32 %v1310, 0.0
  %v1433 = vmax.f32 %v1350, 0.0
  %v1434 = vmax.f32 %v1390, 0.0
  %v1435 = vmax.f32 %v1430, 0.0
  %1436 = vst [vmem:[#allocation2 + $0x60] sm:$0xff] %v1432
  %1437 = vst [vmem:[#allocation2 + $0x68] sm:$0xff] %v1433
  %1438 = vst [vmem:[#allocation2 + $0x70] sm:$0xff] %v1434
  %1439 = vst [vmem:[#allocation2 + $0x78] sm:$0xff] %v1435
  %v1440 = vld [vmem:[%s0] ss:$8 sm:$0xf]
  %1441 = vrot.lane.b32.xlu0 %v1432, 17
  %v1442 = vpop.permute.xlu0 %1441
  %1443 = vrot.lane.b32.xlu0 %v1433, 17
  %v1444 = vpop.permute.xlu0 %1443
  %1445 = vrot.lane.b32.xlu0 %v1434, 17
  %v1446 = vpop.permute.xlu0 %1445
  %1447 = vrot.lane.b32.xlu0 %v1435, 17
  %v1448 = vpop.permute.xlu0 %1447
  %v1449 = vsel %vm45, %v1446, %v1448
  %v1450 = vsel %vm45, %v1444, %v1446
  %v1451 = vsel %vm45, %v1442, %v1444
  %v1452 = vsel %vm45, %v1448, %v1442
  %v1454 = vperm.slane %v1440, 0
  %v1455 = vperm.slane %v1440, 1
  %v1456 = vperm.slane %v1440, 2
  %v1457 = vperm.slane %v1440, 3
  %v1462 = vmul.f32 %v1452, %v1454
  %v1463 = vmul.f32 %v1451, %v1455
  %v1464 = vmul.f32 %v1450, %v1456
  %v1465 = vmul.f32 %v1449, %v1457
  %1466 = vst [vmem:[#allocation3 + $0x360] sm:$0xff] %v1462
  %1467 = vst [vmem:[#allocation3 + $0x368] sm:$0xff] %v1463
  %1468 = vst [vmem:[#allocation3 + $0x370] sm:$0xff] %v1464
  %1469 = vst [vmem:[#allocation3 + $0x378] sm:$0xff] %v1465
  %v1470 = vld [vmem:[%s67] ss:$8 sm:$0xf]
  %1471 = vrot.lane.b32.xlu0 %v1432, 16
  %v1472 = vpop.permute.xlu0 %1471
  %1473 = vrot.lane.b32.xlu0 %v1433, 16
  %v1474 = vpop.permute.xlu0 %1473
  %1475 = vrot.lane.b32.xlu0 %v1434, 16
  %v1476 = vpop.permute.xlu0 %1475
  %1477 = vrot.lane.b32.xlu0 %v1435, 16
  %v1478 = vpop.permute.xlu0 %1477
  %v1479 = vsel %vm77, %v1476, %v1478
  %v1480 = vsel %vm77, %v1474, %v1476
  %v1481 = vsel %vm77, %v1472, %v1474
  %v1482 = vsel %vm77, %v1478, %v1472
  %v1484 = vperm.slane %v1470, 0
  %v1485 = vperm.slane %v1470, 1
  %v1486 = vperm.slane %v1470, 2
  %v1487 = vperm.slane %v1470, 3
  %v1492 = vmul.f32 %v1482, %v1484
  %v1493 = vmul.f32 %v1481, %v1485
  %v1494 = vmul.f32 %v1480, %v1486
  %v1495 = vmul.f32 %v1479, %v1487
  %1496 = vst [vmem:[#allocation3 + $0x380] sm:$0xff] %v1492
  %1497 = vst [vmem:[#allocation3 + $0x388] sm:$0xff] %v1493
  %1498 = vst [vmem:[#allocation3 + $0x390] sm:$0xff] %v1494
  %1499 = vst [vmem:[#allocation3 + $0x398] sm:$0xff] %v1495
  %v1500 = vld [vmem:[%s99] ss:$8 sm:$0xf]
  %1501 = vrot.lane.b32.xlu0 %v1432, 15
  %v1502 = vpop.permute.xlu0 %1501
  %1503 = vrot.lane.b32.xlu0 %v1433, 15
  %v1504 = vpop.permute.xlu0 %1503
  %1505 = vrot.lane.b32.xlu0 %v1434, 15
  %v1506 = vpop.permute.xlu0 %1505
  %1507 = vrot.lane.b32.xlu0 %v1435, 15
  %v1508 = vpop.permute.xlu0 %1507
  %v1509 = vsel %vm109, %v1506, %v1508
  %v1510 = vsel %vm109, %v1504, %v1506
  %v1511 = vsel %vm109, %v1502, %v1504
  %v1512 = vsel %vm109, %v1508, %v1502
  %v1514 = vperm.slane %v1500, 0
  %v1515 = vperm.slane %v1500, 1
  %v1516 = vperm.slane %v1500, 2
  %v1517 = vperm.slane %v1500, 3
  %v1522 = vmul.f32 %v1512, %v1514
  %v1523 = vmul.f32 %v1511, %v1515
  %v1524 = vmul.f32 %v1510, %v1516
  %v1525 = vmul.f32 %v1509, %v1517
  %1526 = vst [vmem:[#allocation3 + $0x3a0] sm:$0xff] %v1522
  %1527 = vst [vmem:[#allocation3 + $0x3a8] sm:$0xff] %v1523
  %1528 = vst [vmem:[#allocation3 + $0x3b0] sm:$0xff] %v1524
  %1529 = vst [vmem:[#allocation3 + $0x3b8] sm:$0xff] %v1525
  %v1530 = vld [vmem:[%s131] ss:$8 sm:$0xf]
  %1531 = vrot.lane.b32.xlu0 %v1432, 1
  %v1532 = vpop.permute.xlu0 %1531
  %1533 = vrot.lane.b32.xlu0 %v1433, 1
  %v1534 = vpop.permute.xlu0 %1533
  %1535 = vrot.lane.b32.xlu0 %v1434, 1
  %v1536 = vpop.permute.xlu0 %1535
  %1537 = vrot.lane.b32.xlu0 %v1435, 1
  %v1538 = vpop.permute.xlu0 %1537
  %v1539 = vsel %vm141, %v1536, %v1538
  %v1540 = vsel %vm141, %v1534, %v1536
  %v1541 = vsel %vm141, %v1532, %v1534
  %v1542 = vsel %vm141, %v1538, %v1532
  %v1544 = vperm.slane %v1530, 0
  %v1545 = vperm.slane %v1530, 1
  %v1546 = vperm.slane %v1530, 2
  %v1547 = vperm.slane %v1530, 3
  %v1552 = vmul.f32 %v1542, %v1544
  %v1553 = vmul.f32 %v1541, %v1545
  %v1554 = vmul.f32 %v1540, %v1546
  %v1555 = vmul.f32 %v1539, %v1547
  %1556 = vst [vmem:[#allocation3 + $0x3c0] sm:$0xff] %v1552
  %1557 = vst [vmem:[#allocation3 + $0x3c8] sm:$0xff] %v1553
  %1558 = vst [vmem:[#allocation3 + $0x3d0] sm:$0xff] %v1554
  %1559 = vst [vmem:[#allocation3 + $0x3d8] sm:$0xff] %v1555
  %1560 = vst [vmem:[#allocation3 + $0x3e0] sm:$0xff] %v1432
  %1561 = vst [vmem:[#allocation3 + $0x3e8] sm:$0xff] %v1433
  %1562 = vst [vmem:[#allocation3 + $0x3f0] sm:$0xff] %v1434
  %1563 = vst [vmem:[#allocation3 + $0x3f8] sm:$0xff] %v1435
  %v1564 = vld [vmem:[%s167] ss:$8 sm:$0xf]
  %1565 = vrot.lane.b32.xlu0 %v1432, 127
  %v1566 = vpop.permute.xlu0 %1565
  %1567 = vrot.lane.b32.xlu0 %v1433, 127
  %v1568 = vpop.permute.xlu0 %1567
  %1569 = vrot.lane.b32.xlu0 %v1434, 127
  %v1570 = vpop.permute.xlu0 %1569
  %1571 = vrot.lane.b32.xlu0 %v1435, 127
  %v1572 = vpop.permute.xlu0 %1571
  %v1573 = vsel %vm177, %v1570, %v1572
  %v1574 = vsel %vm177, %v1568, %v1570
  %v1575 = vsel %vm177, %v1566, %v1568
  %v1576 = vsel %vm177, %v1572, %v1566
  %v1578 = vperm.slane %v1564, 0
  %v1579 = vperm.slane %v1564, 1
  %v1580 = vperm.slane %v1564, 2
  %v1581 = vperm.slane %v1564, 3
  %v1586 = vmul.f32 %v1575, %v1578
  %v1587 = vmul.f32 %v1574, %v1579
  %v1588 = vmul.f32 %v1573, %v1580
  %v1589 = vmul.f32 %v1576, %v1581
  %1590 = vst [vmem:[#allocation3 + $0x400] sm:$0xff] %v1586
  %1591 = vst [vmem:[#allocation3 + $0x408] sm:$0xff] %v1587
  %1592 = vst [vmem:[#allocation3 + $0x410] sm:$0xff] %v1588
  %1593 = vst [vmem:[#allocation3 + $0x418] sm:$0xff] %v1589
  %v1594 = vld [vmem:[%s199] ss:$8 sm:$0xf]
  %1595 = vrot.lane.b32.xlu0 %v1432, 113
  %v1596 = vpop.permute.xlu0 %1595
  %1597 = vrot.lane.b32.xlu0 %v1433, 113
  %v1598 = vpop.permute.xlu0 %1597
  %1599 = vrot.lane.b32.xlu0 %v1434, 113
  %v1600 = vpop.permute.xlu0 %1599
  %1601 = vrot.lane.b32.xlu0 %v1435, 113
  %v1602 = vpop.permute.xlu0 %1601
  %v1603 = vsel %vm209, %v1600, %v1602
  %v1604 = vsel %vm209, %v1598, %v1600
  %v1605 = vsel %vm209, %v1596, %v1598
  %v1606 = vsel %vm209, %v1602, %v1596
  %v1608 = vperm.slane %v1594, 0
  %v1609 = vperm.slane %v1594, 1
  %v1610 = vperm.slane %v1594, 2
  %v1611 = vperm.slane %v1594, 3
  %v1616 = vmul.f32 %v1605, %v1608
  %v1617 = vmul.f32 %v1604, %v1609
  %v1618 = vmul.f32 %v1603, %v1610
  %v1619 = vmul.f32 %v1606, %v1611
  %1620 = vst [vmem:[#allocation3 + $0x420] sm:$0xff] %v1616
  %1621 = vst [vmem:[#allocation3 + $0x428] sm:$0xff] %v1617
  %1622 = vst [vmem:[#allocation3 + $0x430] sm:$0xff] %v1618
  %1623 = vst [vmem:[#allocation3 + $0x438] sm:$0xff] %v1619
  %v1624 = vld [vmem:[%s231] ss:$8 sm:$0xf]
  %1625 = vrot.lane.b32.xlu0 %v1432, 112
  %v1626 = vpop.permute.xlu0 %1625
  %1627 = vrot.lane.b32.xlu0 %v1433, 112
  %v1628 = vpop.permute.xlu0 %1627
  %1629 = vrot.lane.b32.xlu0 %v1434, 112
  %v1630 = vpop.permute.xlu0 %1629
  %1631 = vrot.lane.b32.xlu0 %v1435, 112
  %v1632 = vpop.permute.xlu0 %1631
  %v1633 = vsel %vm241, %v1630, %v1632
  %v1634 = vsel %vm241, %v1628, %v1630
  %v1635 = vsel %vm241, %v1626, %v1628
  %v1636 = vsel %vm241, %v1632, %v1626
  %v1638 = vperm.slane %v1624, 0
  %v1639 = vperm.slane %v1624, 1
  %v1640 = vperm.slane %v1624, 2
  %v1641 = vperm.slane %v1624, 3
  %v1646 = vmul.f32 %v1635, %v1638
  %v1647 = vmul.f32 %v1634, %v1639
  %v1648 = vmul.f32 %v1633, %v1640
  %v1649 = vmul.f32 %v1636, %v1641
  %1650 = vst [vmem:[#allocation3 + $0x440] sm:$0xff] %v1646
  %1651 = vst [vmem:[#allocation3 + $0x448] sm:$0xff] %v1647
  %1652 = vst [vmem:[#allocation3 + $0x450] sm:$0xff] %v1648
  %1653 = vst [vmem:[#allocation3 + $0x458] sm:$0xff] %v1649
  %v1654 = vld [vmem:[%s263] ss:$8 sm:$0xf]
  %1655 = vrot.lane.b32.xlu0 %v1432, 111
  %v1656 = vpop.permute.xlu0 %1655
  %1657 = vrot.lane.b32.xlu0 %v1433, 111
  %v1658 = vpop.permute.xlu0 %1657
  %1659 = vrot.lane.b32.xlu0 %v1434, 111
  %v1660 = vpop.permute.xlu0 %1659
  %1661 = vrot.lane.b32.xlu0 %v1435, 111
  %v1662 = vpop.permute.xlu0 %1661
  %v1663 = vsel %vm273, %v1660, %v1662
  %v1664 = vsel %vm273, %v1658, %v1660
  %v1665 = vsel %vm273, %v1656, %v1658
  %v1666 = vsel %vm273, %v1662, %v1656
  %v1668 = vperm.slane %v1654, 0
  %v1669 = vperm.slane %v1654, 1
  %v1670 = vperm.slane %v1654, 2
  %v1671 = vperm.slane %v1654, 3
  %v1676 = vmul.f32 %v1665, %v1668
  %v1677 = vmul.f32 %v1664, %v1669
  %v1678 = vmul.f32 %v1663, %v1670
  %v1679 = vmul.f32 %v1666, %v1671
  %1680 = vst [vmem:[#allocation3 + $0x460] sm:$0xff] %v1676
  %1681 = vst [vmem:[#allocation3 + $0x468] sm:$0xff] %v1677
  %1682 = vst [vmem:[#allocation3 + $0x470] sm:$0xff] %v1678
  %1683 = vst [vmem:[#allocation3 + $0x478] sm:$0xff] %v1679
  %v1684 = vld [vmem:[%s5] sm:$0xff]
  %v1685 = vld [vmem:[%s5 + $0x8] sm:$0xff]
  %v1686 = vld [vmem:[%s5 + $0x10] sm:$0xff]
  %v1687 = vld [vmem:[#allocation3] sm:$0xff]
  %v1688 = vld [vmem:[#allocation3 + $0x8] sm:$0xff]
  %v1689 = vld [vmem:[#allocation3 + $0x10] sm:$0xff]
  %v1690 = vld [vmem:[#allocation3 + $0x18] sm:$0xff]
  %v1691 = vld [vmem:[#allocation3 + $0x20] sm:$0xff]
  %v1692 = vld [vmem:[#allocation3 + $0x28] sm:$0xff]
  %v1693 = vld [vmem:[#allocation3 + $0x30] sm:$0xff]
  %v1694 = vld [vmem:[#allocation3 + $0x38] sm:$0xff]
  %v1695 = vld [vmem:[#allocation3 + $0x40] sm:$0xff]
  %v1696 = vld [vmem:[#allocation3 + $0x48] sm:$0xff]
  %v1697 = vld [vmem:[#allocation3 + $0x50] sm:$0xff]
  %v1698 = vld [vmem:[#allocation3 + $0x58] sm:$0xff]
  %v1699 = vld [vmem:[#allocation3 + $0x60] sm:$0xff]
  %v1700 = vld [vmem:[#allocation3 + $0x68] sm:$0xff]
  %v1701 = vld [vmem:[#allocation3 + $0x70] sm:$0xff]
  %v1702 = vld [vmem:[#allocation3 + $0x78] sm:$0xff]
  %v1703 = vld [vmem:[#allocation3 + $0x80] sm:$0xff]
  %v1704 = vld [vmem:[#allocation3 + $0x88] sm:$0xff]
  %v1705 = vld [vmem:[#allocation3 + $0x90] sm:$0xff]
  %v1706 = vld [vmem:[#allocation3 + $0x98] sm:$0xff]
  %v1707 = vld [vmem:[#allocation3 + $0xa0] sm:$0xff]
  %v1708 = vld [vmem:[#allocation3 + $0xa8] sm:$0xff]
  %v1709 = vld [vmem:[#allocation3 + $0xb0] sm:$0xff]
  %v1710 = vld [vmem:[#allocation3 + $0xb8] sm:$0xff]
  %v1711 = vld [vmem:[#allocation3 + $0xc0] sm:$0xff]
  %v1712 = vld [vmem:[#allocation3 + $0xc8] sm:$0xff]
  %v1713 = vld [vmem:[#allocation3 + $0xd0] sm:$0xff]
  %v1714 = vld [vmem:[#allocation3 + $0xd8] sm:$0xff]
  %v1715 = vld [vmem:[#allocation3 + $0xe0] sm:$0xff]
  %v1716 = vld [vmem:[#allocation3 + $0xe8] sm:$0xff]
  %v1717 = vld [vmem:[#allocation3 + $0xf0] sm:$0xff]
  %v1718 = vld [vmem:[#allocation3 + $0xf8] sm:$0xff]
  %v1719 = vld [vmem:[#allocation3 + $0x100] sm:$0xff]
  %v1720 = vld [vmem:[#allocation3 + $0x108] sm:$0xff]
  %v1721 = vld [vmem:[#allocation3 + $0x110] sm:$0xff]
  %v1722 = vld [vmem:[#allocation3 + $0x118] sm:$0xff]
  %v1723 = vld [vmem:[#allocation3 + $0x120] sm:$0xff]
  %v1724 = vld [vmem:[#allocation3 + $0x128] sm:$0xff]
  %v1725 = vld [vmem:[#allocation3 + $0x130] sm:$0xff]
  %v1726 = vld [vmem:[#allocation3 + $0x138] sm:$0xff]
  %v1727 = vld [vmem:[#allocation3 + $0x140] sm:$0xff]
  %v1728 = vld [vmem:[#allocation3 + $0x148] sm:$0xff]
  %v1729 = vld [vmem:[#allocation3 + $0x150] sm:$0xff]
  %v1730 = vld [vmem:[#allocation3 + $0x158] sm:$0xff]
  %v1731 = vld [vmem:[#allocation3 + $0x160] sm:$0xff]
  %v1732 = vld [vmem:[#allocation3 + $0x168] sm:$0xff]
  %v1733 = vld [vmem:[#allocation3 + $0x170] sm:$0xff]
  %v1734 = vld [vmem:[#allocation3 + $0x178] sm:$0xff]
  %v1735 = vld [vmem:[#allocation3 + $0x180] sm:$0xff]
  %v1736 = vld [vmem:[#allocation3 + $0x188] sm:$0xff]
  %v1737 = vld [vmem:[#allocation3 + $0x190] sm:$0xff]
  %v1738 = vld [vmem:[#allocation3 + $0x198] sm:$0xff]
  %v1739 = vld [vmem:[#allocation3 + $0x1a0] sm:$0xff]
  %v1740 = vld [vmem:[#allocation3 + $0x1a8] sm:$0xff]
  %v1741 = vld [vmem:[#allocation3 + $0x1b0] sm:$0xff]
  %v1742 = vld [vmem:[#allocation3 + $0x1b8] sm:$0xff]
  %v1743 = vld [vmem:[#allocation3 + $0x1c0] sm:$0xff]
  %v1744 = vld [vmem:[#allocation3 + $0x1c8] sm:$0xff]
  %v1745 = vld [vmem:[#allocation3 + $0x1d0] sm:$0xff]
  %v1746 = vld [vmem:[#allocation3 + $0x1d8] sm:$0xff]
  %v1747 = vld [vmem:[#allocation3 + $0x1e0] sm:$0xff]
  %v1748 = vld [vmem:[#allocation3 + $0x1e8] sm:$0xff]
  %v1749 = vld [vmem:[#allocation3 + $0x1f0] sm:$0xff]
  %v1750 = vld [vmem:[#allocation3 + $0x1f8] sm:$0xff]
  %v1751 = vld [vmem:[#allocation3 + $0x200] sm:$0xff]
  %v1752 = vld [vmem:[#allocation3 + $0x208] sm:$0xff]
  %v1753 = vld [vmem:[#allocation3 + $0x210] sm:$0xff]
  %v1754 = vld [vmem:[#allocation3 + $0x218] sm:$0xff]
  %v1755 = vld [vmem:[#allocation3 + $0x220] sm:$0xff]
  %v1756 = vld [vmem:[#allocation3 + $0x228] sm:$0xff]
  %v1757 = vld [vmem:[#allocation3 + $0x230] sm:$0xff]
  %v1758 = vld [vmem:[#allocation3 + $0x238] sm:$0xff]
  %v1759 = vld [vmem:[#allocation3 + $0x240] sm:$0xff]
  %v1760 = vld [vmem:[#allocation3 + $0x248] sm:$0xff]
  %v1761 = vld [vmem:[#allocation3 + $0x250] sm:$0xff]
  %v1762 = vld [vmem:[#allocation3 + $0x258] sm:$0xff]
  %v1763 = vld [vmem:[#allocation3 + $0x260] sm:$0xff]
  %v1764 = vld [vmem:[#allocation3 + $0x268] sm:$0xff]
  %v1765 = vld [vmem:[#allocation3 + $0x270] sm:$0xff]
  %v1766 = vld [vmem:[#allocation3 + $0x278] sm:$0xff]
  %v1767 = vld [vmem:[#allocation3 + $0x280] sm:$0xff]
  %v1768 = vld [vmem:[#allocation3 + $0x288] sm:$0xff]
  %v1769 = vld [vmem:[#allocation3 + $0x290] sm:$0xff]
  %v1770 = vld [vmem:[#allocation3 + $0x298] sm:$0xff]
  %v1771 = vld [vmem:[#allocation3 + $0x2a0] sm:$0xff]
  %v1772 = vld [vmem:[#allocation3 + $0x2a8] sm:$0xff]
  %v1773 = vld [vmem:[#allocation3 + $0x2b0] sm:$0xff]
  %v1774 = vld [vmem:[#allocation3 + $0x2b8] sm:$0xff]
  %v1775 = vld [vmem:[#allocation3 + $0x2c0] sm:$0xff]
  %v1776 = vld [vmem:[#allocation3 + $0x2c8] sm:$0xff]
  %v1777 = vld [vmem:[#allocation3 + $0x2d0] sm:$0xff]
  %v1778 = vld [vmem:[#allocation3 + $0x2d8] sm:$0xff]
  %v1779 = vld [vmem:[#allocation3 + $0x2e0] sm:$0xff]
  %v1780 = vld [vmem:[#allocation3 + $0x2e8] sm:$0xff]
  %v1781 = vld [vmem:[#allocation3 + $0x2f0] sm:$0xff]
  %v1782 = vld [vmem:[#allocation3 + $0x2f8] sm:$0xff]
  %v1783 = vld [vmem:[#allocation3 + $0x300] sm:$0xff]
  %v1784 = vld [vmem:[#allocation3 + $0x308] sm:$0xff]
  %v1785 = vld [vmem:[#allocation3 + $0x310] sm:$0xff]
  %v1786 = vld [vmem:[#allocation3 + $0x318] sm:$0xff]
  %v1787 = vld [vmem:[#allocation3 + $0x320] sm:$0xff]
  %v1788 = vld [vmem:[#allocation3 + $0x328] sm:$0xff]
  %v1789 = vld [vmem:[#allocation3 + $0x330] sm:$0xff]
  %v1790 = vld [vmem:[#allocation3 + $0x338] sm:$0xff]
  %v1791 = vld [vmem:[#allocation3 + $0x340] sm:$0xff]
  %v1792 = vld [vmem:[#allocation3 + $0x348] sm:$0xff]
  %v1793 = vld [vmem:[#allocation3 + $0x350] sm:$0xff]
  %v1794 = vld [vmem:[#allocation3 + $0x358] sm:$0xff]
  %v1795 = vld [vmem:[#allocation3 + $0x360] sm:$0xff]
  %v1796 = vld [vmem:[#allocation3 + $0x368] sm:$0xff]
  %v1797 = vld [vmem:[#allocation3 + $0x370] sm:$0xff]
  %v1798 = vld [vmem:[#allocation3 + $0x378] sm:$0xff]
  %v1799 = vld [vmem:[#allocation3 + $0x380] sm:$0xff]
  %v1800 = vld [vmem:[#allocation3 + $0x388] sm:$0xff]
  %v1801 = vld [vmem:[#allocation3 + $0x390] sm:$0xff]
  %v1802 = vld [vmem:[#allocation3 + $0x398] sm:$0xff]
  %v1803 = vld [vmem:[#allocation3 + $0x3a0] sm:$0xff]
  %v1804 = vld [vmem:[#allocation3 + $0x3a8] sm:$0xff]
  %v1805 = vld [vmem:[#allocation3 + $0x3b0] sm:$0xff]
  %v1806 = vld [vmem:[#allocation3 + $0x3b8] sm:$0xff]
  %v1807 = vld [vmem:[#allocation3 + $0x3c0] sm:$0xff]
  %v1808 = vld [vmem:[#allocation3 + $0x3c8] sm:$0xff]
  %v1809 = vld [vmem:[#allocation3 + $0x3d0] sm:$0xff]
  %v1810 = vld [vmem:[#allocation3 + $0x3d8] sm:$0xff]
  %v1811 = vld [vmem:[#allocation3 + $0x3e0] sm:$0xff]
  %v1812 = vld [vmem:[#allocation3 + $0x3e8] sm:$0xff]
  %v1813 = vld [vmem:[#allocation3 + $0x3f0] sm:$0xff]
  %v1814 = vld [vmem:[#allocation3 + $0x3f8] sm:$0xff]
  %v1815 = vld [vmem:[#allocation3 + $0x400] sm:$0xff]
  %v1816 = vld [vmem:[#allocation3 + $0x408] sm:$0xff]
  %v1817 = vld [vmem:[#allocation3 + $0x410] sm:$0xff]
  %v1818 = vld [vmem:[#allocation3 + $0x418] sm:$0xff]
  %v1819 = vld [vmem:[#allocation3 + $0x420] sm:$0xff]
  %v1820 = vld [vmem:[#allocation3 + $0x428] sm:$0xff]
  %v1821 = vld [vmem:[#allocation3 + $0x430] sm:$0xff]
  %v1822 = vld [vmem:[#allocation3 + $0x438] sm:$0xff]
  %v1823 = vld [vmem:[#allocation3 + $0x440] sm:$0xff]
  %v1824 = vld [vmem:[#allocation3 + $0x448] sm:$0xff]
  %v1825 = vld [vmem:[#allocation3 + $0x450] sm:$0xff]
  %v1826 = vld [vmem:[#allocation3 + $0x458] sm:$0xff]
  %v1827 = vld [vmem:[#allocation3 + $0x460] sm:$0xff]
  %v1828 = vld [vmem:[#allocation3 + $0x468] sm:$0xff]
  %v1829 = vld [vmem:[#allocation3 + $0x470] sm:$0xff]
  %v1830 = vld [vmem:[#allocation3 + $0x478] sm:$0xff]
  %vm1831 = vcmask 261120
  %v1833 = vsel %vm1831, %v1686, 0
  %1835 = vmatpush.msra.mxu0 %v1747
  %1836 = vmatpush.msra.mxu0 %v1743
  %1837 = vmatpush.msra.mxu0 %v1739
  %1838 = vmatpush.msra.mxu0 %v1735
  %1839 = vmatpush.msra.mxu0 %v1731
  %1840 = vmatpush.msra.mxu0 %v1727
  %1841 = vmatpush.msra.mxu0 %v1723
  %1842 = vmatpush.msra.mxu0 %v1719
  %1843 = vmatpush.msra.mxu0 %v1715
  %1844 = vmatpush.msra.mxu0 %v1711
  %1845 = vmatpush.msra.mxu0 %v1707
  %1846 = vmatpush.msra.mxu0 %v1703
  %1847 = vmatpush.msra.mxu0 %v1699
  %1848 = vmatpush.msra.mxu0 %v1695
  %1849 = vmatpush.msra.mxu0 %v1691
  %1850 = vmatpush.msra.mxu0 %v1687
  %1851 = vmatmul.f32.gmra.mxu0 %v1684
  %v1852 = vpop.f32.mrf.mxu0
  %v1853 = vadd.f32 0.0, %v1852
  %1854 = vdwg.mxu0
  %1855 = vmatpush.msra.mxu0 %v1811
  %1856 = vmatpush.msra.mxu0 %v1807
  %1857 = vmatpush.msra.mxu0 %v1803
  %1858 = vmatpush.msra.mxu0 %v1799
  %1859 = vmatpush.msra.mxu0 %v1795
  %1860 = vmatpush.msra.mxu0 %v1791
  %1861 = vmatpush.msra.mxu0 %v1787
  %1862 = vmatpush.msra.mxu0 %v1783
  %1863 = vmatpush.msra.mxu0 %v1779
  %1864 = vmatpush.msra.mxu0 %v1775
  %1865 = vmatpush.msra.mxu0 %v1771
  %1866 = vmatpush.msra.mxu0 %v1767
  %1867 = vmatpush.msra.mxu0 %v1763
  %1868 = vmatpush.msra.mxu0 %v1759
  %1869 = vmatpush.msra.mxu0 %v1755
  %1870 = vmatpush.msra.mxu0 %v1751
  %1871 = vmatmul.f32.gmra.mxu0 %v1685
  %v1872 = vpop.f32.mrf.mxu0
  %v1873 = vadd.f32 %v1853, %v1872
  %1874 = vdwg.mxu0
  %1875 = vmatpush.msra.mxu0 0.0
  %1876 = vmatpush.msra.mxu0 0.0
  %1877 = vmatpush.msra.mxu0 0.0
  %1878 = vmatpush.msra.mxu0 0.0
  %1879 = vmatpush.msra.mxu0 0.0
  %1880 = vmatpush.msra.mxu0 0.0
  %1881 = vmatpush.msra.mxu0 0.0
  %1882 = vmatpush.msra.mxu0 0.0
  %1883 = vmatpush.msra.mxu0 0.0
  %1884 = vmatpush.msra.mxu0 0.0
  %1885 = vmatpush.msra.mxu0 0.0
  %1886 = vmatpush.msra.mxu0 0.0
  %1887 = vmatpush.msra.mxu0 %v1827
  %1888 = vmatpush.msra.mxu0 %v1823
  %1889 = vmatpush.msra.mxu0 %v1819
  %1890 = vmatpush.msra.mxu0 %v1815
  %1891 = vmatmul.f32.gmra.mxu0 %v1833
  %v1892 = vpop.f32.mrf.mxu0
  %v1893 = vadd.f32 %v1873, %v1892
  %1894 = vdwg.mxu0
  %1895 = vmatpush.msra.mxu0 %v1748
  %1896 = vmatpush.msra.mxu0 %v1744
  %1897 = vmatpush.msra.mxu0 %v1740
  %1898 = vmatpush.msra.mxu0 %v1736
  %1899 = vmatpush.msra.mxu0 %v1732
  %1900 = vmatpush.msra.mxu0 %v1728
  %1901 = vmatpush.msra.mxu0 %v1724
  %1902 = vmatpush.msra.mxu0 %v1720
  %1903 = vmatpush.msra.mxu0 %v1716
  %1904 = vmatpush.msra.mxu0 %v1712
  %1905 = vmatpush.msra.mxu0 %v1708
  %1906 = vmatpush.msra.mxu0 %v1704
  %1907 = vmatpush.msra.mxu0 %v1700
  %1908 = vmatpush.msra.mxu0 %v1696
  %1909 = vmatpush.msra.mxu0 %v1692
  %1910 = vmatpush.msra.mxu0 %v1688
  %1911 = vmatmul.f32.gmra.mxu0 %v1684
  %v1912 = vpop.f32.mrf.mxu0
  %v1913 = vadd.f32 0.0, %v1912
  %1914 = vdwg.mxu0
  %1915 = vmatpush.msra.mxu0 %v1812
  %1916 = vmatpush.msra.mxu0 %v1808
  %1917 = vmatpush.msra.mxu0 %v1804
  %1918 = vmatpush.msra.mxu0 %v1800
  %1919 = vmatpush.msra.mxu0 %v1796
  %1920 = vmatpush.msra.mxu0 %v1792
  %1921 = vmatpush.msra.mxu0 %v1788
  %1922 = vmatpush.msra.mxu0 %v1784
  %1923 = vmatpush.msra.mxu0 %v1780
  %1924 = vmatpush.msra.mxu0 %v1776
  %1925 = vmatpush.msra.mxu0 %v1772
  %1926 = vmatpush.msra.mxu0 %v1768
  %1927 = vmatpush.msra.mxu0 %v1764
  %1928 = vmatpush.msra.mxu0 %v1760
  %1929 = vmatpush.msra.mxu0 %v1756
  %1930 = vmatpush.msra.mxu0 %v1752
  %1931 = vmatmul.f32.gmra.mxu0 %v1685
  %v1932 = vpop.f32.mrf.mxu0
  %v1933 = vadd.f32 %v1913, %v1932
  %1934 = vdwg.mxu0
  %1935 = vmatpush.msra.mxu0 0.0
  %1936 = vmatpush.msra.mxu0 0.0
  %1937 = vmatpush.msra.mxu0 0.0
  %1938 = vmatpush.msra.mxu0 0.0
  %1939 = vmatpush.msra.mxu0 0.0
  %1940 = vmatpush.msra.mxu0 0.0
  %1941 = vmatpush.msra.mxu0 0.0
  %1942 = vmatpush.msra.mxu0 0.0
  %1943 = vmatpush.msra.mxu0 0.0
  %1944 = vmatpush.msra.mxu0 0.0
  %1945 = vmatpush.msra.mxu0 0.0
  %1946 = vmatpush.msra.mxu0 0.0
  %1947 = vmatpush.msra.mxu0 %v1828
  %1948 = vmatpush.msra.mxu0 %v1824
  %1949 = vmatpush.msra.mxu0 %v1820
  %1950 = vmatpush.msra.mxu0 %v1816
  %1951 = vmatmul.f32.gmra.mxu0 %v1833
  %v1952 = vpop.f32.mrf.mxu0
  %v1953 = vadd.f32 %v1933, %v1952
  %1954 = vdwg.mxu0
  %1955 = vmatpush.msra.mxu0 %v1749
  %1956 = vmatpush.msra.mxu0 %v1745
  %1957 = vmatpush.msra.mxu0 %v1741
  %1958 = vmatpush.msra.mxu0 %v1737
  %1959 = vmatpush.msra.mxu0 %v1733
  %1960 = vmatpush.msra.mxu0 %v1729
  %1961 = vmatpush.msra.mxu0 %v1725
  %1962 = vmatpush.msra.mxu0 %v1721
  %1963 = vmatpush.msra.mxu0 %v1717
  %1964 = vmatpush.msra.mxu0 %v1713
  %1965 = vmatpush.msra.mxu0 %v1709
  %1966 = vmatpush.msra.mxu0 %v1705
  %1967 = vmatpush.msra.mxu0 %v1701
  %1968 = vmatpush.msra.mxu0 %v1697
  %1969 = vmatpush.msra.mxu0 %v1693
  %1970 = vmatpush.msra.mxu0 %v1689
  %1971 = vmatmul.f32.gmra.mxu0 %v1684
  %v1972 = vpop.f32.mrf.mxu0
  %v1973 = vadd.f32 0.0, %v1972
  %1974 = vdwg.mxu0
  %1975 = vmatpush.msra.mxu0 %v1813
  %1976 = vmatpush.msra.mxu0 %v1809
  %1977 = vmatpush.msra.mxu0 %v1805
  %1978 = vmatpush.msra.mxu0 %v1801
  %1979 = vmatpush.msra.mxu0 %v1797
  %1980 = vmatpush.msra.mxu0 %v1793
  %1981 = vmatpush.msra.mxu0 %v1789
  %1982 = vmatpush.msra.mxu0 %v1785
  %1983 = vmatpush.msra.mxu0 %v1781
  %1984 = vmatpush.msra.mxu0 %v1777
  %1985 = vmatpush.msra.mxu0 %v1773
  %1986 = vmatpush.msra.mxu0 %v1769
  %1987 = vmatpush.msra.mxu0 %v1765
  %1988 = vmatpush.msra.mxu0 %v1761
  %1989 = vmatpush.msra.mxu0 %v1757
  %1990 = vmatpush.msra.mxu0 %v1753
  %1991 = vmatmul.f32.gmra.mxu0 %v1685
  %v1992 = vpop.f32.mrf.mxu0
  %v1993 = vadd.f32 %v1973, %v1992
  %1994 = vdwg.mxu0
  %1995 = vmatpush.msra.mxu0 0.0
  %1996 = vmatpush.msra.mxu0 0.0
  %1997 = vmatpush.msra.mxu0 0.0
  %1998 = vmatpush.msra.mxu0 0.0
  %1999 = vmatpush.msra.mxu0 0.0
  %2000 = vmatpush.msra.mxu0 0.0
  %2001 = vmatpush.msra.mxu0 0.0
  %2002 = vmatpush.msra.mxu0 0.0
  %2003 = vmatpush.msra.mxu0 0.0
  %2004 = vmatpush.msra.mxu0 0.0
  %2005 = vmatpush.msra.mxu0 0.0
  %2006 = vmatpush.msra.mxu0 0.0
  %2007 = vmatpush.msra.mxu0 %v1829
  %2008 = vmatpush.msra.mxu0 %v1825
  %2009 = vmatpush.msra.mxu0 %v1821
  %2010 = vmatpush.msra.mxu0 %v1817
  %2011 = vmatmul.f32.gmra.mxu0 %v1833
  %v2012 = vpop.f32.mrf.mxu0
  %v2013 = vadd.f32 %v1993, %v2012
  %2014 = vdwg.mxu0
  %2015 = vmatpush.msra.mxu0 %v1750
  %2016 = vmatpush.msra.mxu0 %v1746
  %2017 = vmatpush.msra.mxu0 %v1742
  %2018 = vmatpush.msra.mxu0 %v1738
  %2019 = vmatpush.msra.mxu0 %v1734
  %2020 = vmatpush.msra.mxu0 %v1730
  %2021 = vmatpush.msra.mxu0 %v1726
  %2022 = vmatpush.msra.mxu0 %v1722
  %2023 = vmatpush.msra.mxu0 %v1718
  %2024 = vmatpush.msra.mxu0 %v1714
  %2025 = vmatpush.msra.mxu0 %v1710
  %2026 = vmatpush.msra.mxu0 %v1706
  %2027 = vmatpush.msra.mxu0 %v1702
  %2028 = vmatpush.msra.mxu0 %v1698
  %2029 = vmatpush.msra.mxu0 %v1694
  %2030 = vmatpush.msra.mxu0 %v1690
  %2031 = vmatmul.f32.gmra.mxu0 %v1684
  %v2032 = vpop.f32.mrf.mxu0
  %v2033 = vadd.f32 0.0, %v2032
  %2034 = vdwg.mxu0
  %2035 = vmatpush.msra.mxu0 %v1814
  %2036 = vmatpush.msra.mxu0 %v1810
  %2037 = vmatpush.msra.mxu0 %v1806
  %2038 = vmatpush.msra.mxu0 %v1802
  %2039 = vmatpush.msra.mxu0 %v1798
  %2040 = vmatpush.msra.mxu0 %v1794
  %2041 = vmatpush.msra.mxu0 %v1790
  %2042 = vmatpush.msra.mxu0 %v1786
  %2043 = vmatpush.msra.mxu0 %v1782
  %2044 = vmatpush.msra.mxu0 %v1778
  %2045 = vmatpush.msra.mxu0 %v1774
  %2046 = vmatpush.msra.mxu0 %v1770
  %2047 = vmatpush.msra.mxu0 %v1766
  %2048 = vmatpush.msra.mxu0 %v1762
  %2049 = vmatpush.msra.mxu0 %v1758
  %2050 = vmatpush.msra.mxu0 %v1754
  %2051 = vmatmul.f32.gmra.mxu0 %v1685
  %v2052 = vpop.f32.mrf.mxu0
  %v2053 = vadd.f32 %v2033, %v2052
  %2054 = vdwg.mxu0
  %2055 = vmatpush.msra.mxu0 0.0
  %2056 = vmatpush.msra.mxu0 0.0
  %2057 = vmatpush.msra.mxu0 0.0
  %2058 = vmatpush.msra.mxu0 0.0
  %2059 = vmatpush.msra.mxu0 0.0
  %2060 = vmatpush.msra.mxu0 0.0
  %2061 = vmatpush.msra.mxu0 0.0
  %2062 = vmatpush.msra.mxu0 0.0
  %2063 = vmatpush.msra.mxu0 0.0
  %2064 = vmatpush.msra.mxu0 0.0
  %2065 = vmatpush.msra.mxu0 0.0
  %2066 = vmatpush.msra.mxu0 0.0
  %2067 = vmatpush.msra.mxu0 %v1830
  %2068 = vmatpush.msra.mxu0 %v1826
  %2069 = vmatpush.msra.mxu0 %v1822
  %2070 = vmatpush.msra.mxu0 %v1818
  %2071 = vmatmul.f32.gmra.mxu0 %v1833
  %v2072 = vpop.f32.mrf.mxu0
  %v2073 = vadd.f32 %v2053, %v2072
  %2074 = vdwg.mxu0
  %v2075 = vmax.f32 %v1893, 0.0
  %v2076 = vmax.f32 %v1953, 0.0
  %v2077 = vmax.f32 %v2013, 0.0
  %v2078 = vmax.f32 %v2073, 0.0
  %2079 = vst [vmem:[#allocation2 + $0x80] sm:$0xff] %v2075
  %2080 = vst [vmem:[#allocation2 + $0x88] sm:$0xff] %v2076
  %2081 = vst [vmem:[#allocation2 + $0x90] sm:$0xff] %v2077
  %2082 = vst [vmem:[#allocation2 + $0x98] sm:$0xff] %v2078
  %v2083 = vld [vmem:[%s0] ss:$8 sm:$0xf]
  %2084 = vrot.lane.b32.xlu0 %v2075, 17
  %v2085 = vpop.permute.xlu0 %2084
  %2086 = vrot.lane.b32.xlu0 %v2076, 17
  %v2087 = vpop.permute.xlu0 %2086
  %2088 = vrot.lane.b32.xlu0 %v2077, 17
  %v2089 = vpop.permute.xlu0 %2088
  %2090 = vrot.lane.b32.xlu0 %v2078, 17
  %v2091 = vpop.permute.xlu0 %2090
  %v2092 = vsel %vm45, %v2089, %v2091
  %v2093 = vsel %vm45, %v2087, %v2089
  %v2094 = vsel %vm45, %v2085, %v2087
  %v2095 = vsel %vm45, %v2091, %v2085
  %v2097 = vperm.slane %v2083, 0
  %v2098 = vperm.slane %v2083, 1
  %v2099 = vperm.slane %v2083, 2
  %v2100 = vperm.slane %v2083, 3
  %v2105 = vmul.f32 %v2095, %v2097
  %v2106 = vmul.f32 %v2094, %v2098
  %v2107 = vmul.f32 %v2093, %v2099
  %v2108 = vmul.f32 %v2092, %v2100
  %2109 = vst [vmem:[#allocation3 + $0x480] sm:$0xff] %v2105
  %2110 = vst [vmem:[#allocation3 + $0x488] sm:$0xff] %v2106
  %2111 = vst [vmem:[#allocation3 + $0x490] sm:$0xff] %v2107
  %2112 = vst [vmem:[#allocation3 + $0x498] sm:$0xff] %v2108
  %v2113 = vld [vmem:[%s67] ss:$8 sm:$0xf]
  %2114 = vrot.lane.b32.xlu0 %v2075, 16
  %v2115 = vpop.permute.xlu0 %2114
  %2116 = vrot.lane.b32.xlu0 %v2076, 16
  %v2117 = vpop.permute.xlu0 %2116
  %2118 = vrot.lane.b32.xlu0 %v2077, 16
  %v2119 = vpop.permute.xlu0 %2118
  %2120 = vrot.lane.b32.xlu0 %v2078, 16
  %v2121 = vpop.permute.xlu0 %2120
  %v2122 = vsel %vm77, %v2119, %v2121
  %v2123 = vsel %vm77, %v2117, %v2119
  %v2124 = vsel %vm77, %v2115, %v2117
  %v2125 = vsel %vm77, %v2121, %v2115
  %v2127 = vperm.slane %v2113, 0
  %v2128 = vperm.slane %v2113, 1
  %v2129 = vperm.slane %v2113, 2
  %v2130 = vperm.slane %v2113, 3
  %v2135 = vmul.f32 %v2125, %v2127
  %v2136 = vmul.f32 %v2124, %v2128
  %v2137 = vmul.f32 %v2123, %v2129
  %v2138 = vmul.f32 %v2122, %v2130
  %2139 = vst [vmem:[#allocation3 + $0x4a0] sm:$0xff] %v2135
  %2140 = vst [vmem:[#allocation3 + $0x4a8] sm:$0xff] %v2136
  %2141 = vst [vmem:[#allocation3 + $0x4b0] sm:$0xff] %v2137
  %2142 = vst [vmem:[#allocation3 + $0x4b8] sm:$0xff] %v2138
  %v2143 = vld [vmem:[%s99] ss:$8 sm:$0xf]
  %2144 = vrot.lane.b32.xlu0 %v2075, 15
  %v2145 = vpop.permute.xlu0 %2144
  %2146 = vrot.lane.b32.xlu0 %v2076, 15
  %v2147 = vpop.permute.xlu0 %2146
  %2148 = vrot.lane.b32.xlu0 %v2077, 15
  %v2149 = vpop.permute.xlu0 %2148
  %2150 = vrot.lane.b32.xlu0 %v2078, 15
  %v2151 = vpop.permute.xlu0 %2150
  %v2152 = vsel %vm109, %v2149, %v2151
  %v2153 = vsel %vm109, %v2147, %v2149
  %v2154 = vsel %vm109, %v2145, %v2147
  %v2155 = vsel %vm109, %v2151, %v2145
  %v2157 = vperm.slane %v2143, 0
  %v2158 = vperm.slane %v2143, 1
  %v2159 = vperm.slane %v2143, 2
  %v2160 = vperm.slane %v2143, 3
  %v2165 = vmul.f32 %v2155, %v2157
  %v2166 = vmul.f32 %v2154, %v2158
  %v2167 = vmul.f32 %v2153, %v2159
  %v2168 = vmul.f32 %v2152, %v2160
  %2169 = vst [vmem:[#allocation3 + $0x4c0] sm:$0xff] %v2165
  %2170 = vst [vmem:[#allocation3 + $0x4c8] sm:$0xff] %v2166
  %2171 = vst [vmem:[#allocation3 + $0x4d0] sm:$0xff] %v2167
  %2172 = vst [vmem:[#allocation3 + $0x4d8] sm:$0xff] %v2168
  %v2173 = vld [vmem:[%s131] ss:$8 sm:$0xf]
  %2174 = vrot.lane.b32.xlu0 %v2075, 1
  %v2175 = vpop.permute.xlu0 %2174
  %2176 = vrot.lane.b32.xlu0 %v2076, 1
  %v2177 = vpop.permute.xlu0 %2176
  %2178 = vrot.lane.b32.xlu0 %v2077, 1
  %v2179 = vpop.permute.xlu0 %2178
  %2180 = vrot.lane.b32.xlu0 %v2078, 1
  %v2181 = vpop.permute.xlu0 %2180
  %v2182 = vsel %vm141, %v2179, %v2181
  %v2183 = vsel %vm141, %v2177, %v2179
  %v2184 = vsel %vm141, %v2175, %v2177
  %v2185 = vsel %vm141, %v2181, %v2175
  %v2187 = vperm.slane %v2173, 0
  %v2188 = vperm.slane %v2173, 1
  %v2189 = vperm.slane %v2173, 2
  %v2190 = vperm.slane %v2173, 3
  %v2195 = vmul.f32 %v2185, %v2187
  %v2196 = vmul.f32 %v2184, %v2188
  %v2197 = vmul.f32 %v2183, %v2189
  %v2198 = vmul.f32 %v2182, %v2190
  %2199 = vst [vmem:[#allocation3 + $0x4e0] sm:$0xff] %v2195
  %2200 = vst [vmem:[#allocation3 + $0x4e8] sm:$0xff] %v2196
  %2201 = vst [vmem:[#allocation3 + $0x4f0] sm:$0xff] %v2197
  %2202 = vst [vmem:[#allocation3 + $0x4f8] sm:$0xff] %v2198
  %2203 = vst [vmem:[#allocation3 + $0x500] sm:$0xff] %v2075
  %2204 = vst [vmem:[#allocation3 + $0x508] sm:$0xff] %v2076
  %2205 = vst [vmem:[#allocation3 + $0x510] sm:$0xff] %v2077
  %2206 = vst [vmem:[#allocation3 + $0x518] sm:$0xff] %v2078
  %v2207 = vld [vmem:[%s167] ss:$8 sm:$0xf]
  %2208 = vrot.lane.b32.xlu0 %v2075, 127
  %v2209 = vpop.permute.xlu0 %2208
  %2210 = vrot.lane.b32.xlu0 %v2076, 127
  %v2211 = vpop.permute.xlu0 %2210
  %2212 = vrot.lane.b32.xlu0 %v2077, 127
  %v2213 = vpop.permute.xlu0 %2212
  %2214 = vrot.lane.b32.xlu0 %v2078, 127
  %v2215 = vpop.permute.xlu0 %2214
  %v2216 = vsel %vm177, %v2213, %v2215
  %v2217 = vsel %vm177, %v2211, %v2213
  %v2218 = vsel %vm177, %v2209, %v2211
  %v2219 = vsel %vm177, %v2215, %v2209
  %v2221 = vperm.slane %v2207, 0
  %v2222 = vperm.slane %v2207, 1
  %v2223 = vperm.slane %v2207, 2
  %v2224 = vperm.slane %v2207, 3
  %v2229 = vmul.f32 %v2218, %v2221
  %v2230 = vmul.f32 %v2217, %v2222
  %v2231 = vmul.f32 %v2216, %v2223
  %v2232 = vmul.f32 %v2219, %v2224
  %2233 = vst [vmem:[#allocation3 + $0x520] sm:$0xff] %v2229
  %2234 = vst [vmem:[#allocation3 + $0x528] sm:$0xff] %v2230
  %2235 = vst [vmem:[#allocation3 + $0x530] sm:$0xff] %v2231
  %2236 = vst [vmem:[#allocation3 + $0x538] sm:$0xff] %v2232
  %v2237 = vld [vmem:[%s199] ss:$8 sm:$0xf]
  %2238 = vrot.lane.b32.xlu0 %v2075, 113
  %v2239 = vpop.permute.xlu0 %2238
  %2240 = vrot.lane.b32.xlu0 %v2076, 113
  %v2241 = vpop.permute.xlu0 %2240
  %2242 = vrot.lane.b32.xlu0 %v2077, 113
  %v2243 = vpop.permute.xlu0 %2242
  %2244 = vrot.lane.b32.xlu0 %v2078, 113
  %v2245 = vpop.permute.xlu0 %2244
  %v2246 = vsel %vm209, %v2243, %v2245
  %v2247 = vsel %vm209, %v2241, %v2243
  %v2248 = vsel %vm209, %v2239, %v2241
  %v2249 = vsel %vm209, %v2245, %v2239
  %v2251 = vperm.slane %v2237, 0
  %v2252 = vperm.slane %v2237, 1
  %v2253 = vperm.slane %v2237, 2
  %v2254 = vperm.slane %v2237, 3
  %v2259 = vmul.f32 %v2248, %v2251
  %v2260 = vmul.f32 %v2247, %v2252
  %v2261 = vmul.f32 %v2246, %v2253
  %v2262 = vmul.f32 %v2249, %v2254
  %2263 = vst [vmem:[#allocation3 + $0x540] sm:$0xff] %v2259
  %2264 = vst [vmem:[#allocation3 + $0x548] sm:$0xff] %v2260
  %2265 = vst [vmem:[#allocation3 + $0x550] sm:$0xff] %v2261
  %2266 = vst [vmem:[#allocation3 + $0x558] sm:$0xff] %v2262
  %v2267 = vld [vmem:[%s231] ss:$8 sm:$0xf]
  %2268 = vrot.lane.b32.xlu0 %v2075, 112
  %v2269 = vpop.permute.xlu0 %2268
  %2270 = vrot.lane.b32.xlu0 %v2076, 112
  %v2271 = vpop.permute.xlu0 %2270
  %2272 = vrot.lane.b32.xlu0 %v2077, 112
  %v2273 = vpop.permute.xlu0 %2272
  %2274 = vrot.lane.b32.xlu0 %v2078, 112
  %v2275 = vpop.permute.xlu0 %2274
  %v2276 = vsel %vm241, %v2273, %v2275
  %v2277 = vsel %vm241, %v2271, %v2273
  %v2278 = vsel %vm241, %v2269, %v2271
  %v2279 = vsel %vm241, %v2275, %v2269
  %v2281 = vperm.slane %v2267, 0
  %v2282 = vperm.slane %v2267, 1
  %v2283 = vperm.slane %v2267, 2
  %v2284 = vperm.slane %v2267, 3
  %v2289 = vmul.f32 %v2278, %v2281
  %v2290 = vmul.f32 %v2277, %v2282
  %v2291 = vmul.f32 %v2276, %v2283
  %v2292 = vmul.f32 %v2279, %v2284
  %2293 = vst [vmem:[#allocation3 + $0x560] sm:$0xff] %v2289
  %2294 = vst [vmem:[#allocation3 + $0x568] sm:$0xff] %v2290
  %2295 = vst [vmem:[#allocation3 + $0x570] sm:$0xff] %v2291
  %2296 = vst [vmem:[#allocation3 + $0x578] sm:$0xff] %v2292
  %v2297 = vld [vmem:[%s263] ss:$8 sm:$0xf]
  %2298 = vrot.lane.b32.xlu0 %v2075, 111
  %v2299 = vpop.permute.xlu0 %2298
  %2300 = vrot.lane.b32.xlu0 %v2076, 111
  %v2301 = vpop.permute.xlu0 %2300
  %2302 = vrot.lane.b32.xlu0 %v2077, 111
  %v2303 = vpop.permute.xlu0 %2302
  %2304 = vrot.lane.b32.xlu0 %v2078, 111
  %v2305 = vpop.permute.xlu0 %2304
  %v2306 = vsel %vm273, %v2303, %v2305
  %v2307 = vsel %vm273, %v2301, %v2303
  %v2308 = vsel %vm273, %v2299, %v2301
  %v2309 = vsel %vm273, %v2305, %v2299
  %v2311 = vperm.slane %v2297, 0
  %v2312 = vperm.slane %v2297, 1
  %v2313 = vperm.slane %v2297, 2
  %v2314 = vperm.slane %v2297, 3
  %v2319 = vmul.f32 %v2308, %v2311
  %v2320 = vmul.f32 %v2307, %v2312
  %v2321 = vmul.f32 %v2306, %v2313
  %v2322 = vmul.f32 %v2309, %v2314
  %2323 = vst [vmem:[#allocation3 + $0x580] sm:$0xff] %v2319
  %2324 = vst [vmem:[#allocation3 + $0x588] sm:$0xff] %v2320
  %2325 = vst [vmem:[#allocation3 + $0x590] sm:$0xff] %v2321
  %2326 = vst [vmem:[#allocation3 + $0x598] sm:$0xff] %v2322
  %v2327 = vld [vmem:[%s6] sm:$0xff]
  %v2328 = vld [vmem:[#allocation2] sm:$0xff]
  %v2329 = vld [vmem:[#allocation2 + $0x8] sm:$0xff]
  %v2330 = vld [vmem:[#allocation2 + $0x10] sm:$0xff]
  %v2331 = vld [vmem:[#allocation2 + $0x18] sm:$0xff]
  %v2332 = vld [vmem:[#allocation2 + $0x20] sm:$0xff]
  %v2333 = vld [vmem:[#allocation2 + $0x28] sm:$0xff]
  %v2334 = vld [vmem:[#allocation2 + $0x30] sm:$0xff]
  %v2335 = vld [vmem:[#allocation2 + $0x38] sm:$0xff]
  %v2336 = vld [vmem:[#allocation2 + $0x40] sm:$0xff]
  %v2337 = vld [vmem:[#allocation2 + $0x48] sm:$0xff]
  %v2338 = vld [vmem:[#allocation2 + $0x50] sm:$0xff]
  %v2339 = vld [vmem:[#allocation2 + $0x58] sm:$0xff]
  %v2340 = vld [vmem:[#allocation2 + $0x60] sm:$0xff]
  %v2341 = vld [vmem:[#allocation2 + $0x68] sm:$0xff]
  %v2342 = vld [vmem:[#allocation2 + $0x70] sm:$0xff]
  %v2343 = vld [vmem:[#allocation2 + $0x78] sm:$0xff]
  %v2344 = vld [vmem:[#allocation2 + $0x80] sm:$0xff]
  %v2345 = vld [vmem:[#allocation2 + $0x88] sm:$0xff]
  %v2346 = vld [vmem:[#allocation2 + $0x90] sm:$0xff]
  %v2347 = vld [vmem:[#allocation2 + $0x98] sm:$0xff]
  %vm2348 = vcmask 326656
  %v2350 = vsel %vm2348, %v2327, 0
  %2352 = vmatpush.msra.mxu0 0.0
  %2353 = vmatpush.msra.mxu0 0.0
  %2354 = vmatpush.msra.mxu0 0.0
  %2355 = vmatpush.msra.mxu0 0.0
  %2356 = vmatpush.msra.mxu0 0.0
  %2357 = vmatpush.msra.mxu0 0.0
  %2358 = vmatpush.msra.mxu0 0.0
  %2359 = vmatpush.msra.mxu0 0.0
  %2360 = vmatpush.msra.mxu0 0.0
  %2361 = vmatpush.msra.mxu0 0.0
  %2362 = vmatpush.msra.mxu0 0.0
  %2363 = vmatpush.msra.mxu0 %v2344
  %2364 = vmatpush.msra.mxu0 %v2340
  %2365 = vmatpush.msra.mxu0 %v2336
  %2366 = vmatpush.msra.mxu0 %v2332
  %2367 = vmatpush.msra.mxu0 %v2328
  %2368 = vmatmul.f32.gmra.mxu0 %v2350
  %v2369 = vpop.f32.mrf.mxu0
  %v2370 = vadd.f32 0.0, %v2369
  %2371 = vdwg.mxu0
  %2372 = vmatpush.msra.mxu0 0.0
  %2373 = vmatpush.msra.mxu0 0.0
  %2374 = vmatpush.msra.mxu0 0.0
  %2375 = vmatpush.msra.mxu0 0.0
  %2376 = vmatpush.msra.mxu0 0.0
  %2377 = vmatpush.msra.mxu0 0.0
  %2378 = vmatpush.msra.mxu0 0.0
  %2379 = vmatpush.msra.mxu0 0.0
  %2380 = vmatpush.msra.mxu0 0.0
  %2381 = vmatpush.msra.mxu0 0.0
  %2382 = vmatpush.msra.mxu0 0.0
  %2383 = vmatpush.msra.mxu0 %v2345
  %2384 = vmatpush.msra.mxu0 %v2341
  %2385 = vmatpush.msra.mxu0 %v2337
  %2386 = vmatpush.msra.mxu0 %v2333
  %2387 = vmatpush.msra.mxu0 %v2329
  %2388 = vmatmul.f32.gmra.mxu0 %v2350
  %v2389 = vpop.f32.mrf.mxu0
  %v2390 = vadd.f32 0.0, %v2389
  %2391 = vdwg.mxu0
  %2392 = vmatpush.msra.mxu0 0.0
  %2393 = vmatpush.msra.mxu0 0.0
  %2394 = vmatpush.msra.mxu0 0.0
  %2395 = vmatpush.msra.mxu0 0.0
  %2396 = vmatpush.msra.mxu0 0.0
  %2397 = vmatpush.msra.mxu0 0.0
  %2398 = vmatpush.msra.mxu0 0.0
  %2399 = vmatpush.msra.mxu0 0.0
  %2400 = vmatpush.msra.mxu0 0.0
  %2401 = vmatpush.msra.mxu0 0.0
  %2402 = vmatpush.msra.mxu0 0.0
  %2403 = vmatpush.msra.mxu0 %v2346
  %2404 = vmatpush.msra.mxu0 %v2342
  %2405 = vmatpush.msra.mxu0 %v2338
  %2406 = vmatpush.msra.mxu0 %v2334
  %2407 = vmatpush.msra.mxu0 %v2330
  %2408 = vmatmul.f32.gmra.mxu0 %v2350
  %v2409 = vpop.f32.mrf.mxu0
  %v2410 = vadd.f32 0.0, %v2409
  %2411 = vdwg.mxu0
  %2412 = vmatpush.msra.mxu0 0.0
  %2413 = vmatpush.msra.mxu0 0.0
  %2414 = vmatpush.msra.mxu0 0.0
  %2415 = vmatpush.msra.mxu0 0.0
  %2416 = vmatpush.msra.mxu0 0.0
  %2417 = vmatpush.msra.mxu0 0.0
  %2418 = vmatpush.msra.mxu0 0.0
  %2419 = vmatpush.msra.mxu0 0.0
  %2420 = vmatpush.msra.mxu0 0.0
  %2421 = vmatpush.msra.mxu0 0.0
  %2422 = vmatpush.msra.mxu0 0.0
  %2423 = vmatpush.msra.mxu0 %v2347
  %2424 = vmatpush.msra.mxu0 %v2343
  %2425 = vmatpush.msra.mxu0 %v2339
  %2426 = vmatpush.msra.mxu0 %v2335
  %2427 = vmatpush.msra.mxu0 %v2331
  %2428 = vmatmul.f32.gmra.mxu0 %v2350
  %v2429 = vpop.f32.mrf.mxu0
  %v2430 = vadd.f32 0.0, %v2429
  %2431 = vdwg.mxu0
  %2432 = vst [vmem:[%s7] sm:$0xff] %v2370
  %2433 = vst [vmem:[%s7 + $0x8] sm:$0xff] %v2390
  %2434 = vst [vmem:[%s7 + $0x10] sm:$0xff] %v2410
  %2435 = vst [vmem:[%s7 + $0x18] sm:$0xff] %v2430
  // Predicated region
  $region30: #{dense_block_forward.1} parent=0 // pred_check
    _
  $region31: #{dense_block_forward.1} parent=0 // pred_check_branch
    %2437 = sbr.rel (0) target = $region33
  $region32: #{dense_block_forward.1} parent=0 // pred_region
    _
  $region33: #{dense_block_forward.1} parent=0 // pred_fallthru
    _
  // Predicated region
  $region34: #{dense_block_forward.1} parent=0 // pred_check
    _
  $region35: #{dense_block_forward.1} parent=0 // pred_check_branch
    %2439 = sbr.rel (0) target = $region37
  $region36: #{dense_block_forward.1} parent=0 // pred_region
    _
  $region37: #{dense_block_forward.1} parent=0 // pred_fallthru
    _

</llo_original>
